<compile_context>
chip_gen: v6e
topology: v6e:2x2x1
jax: 0.10.0
libtpu: 0.0.40
codegen_flags: <defaults>
</compile_context>

<pallas_src>
import jax
import jax.numpy as jnp
from jax import lax
from jax.experimental import pallas as pl
from jax.experimental.pallas import tpu as pltpu


# ---------------------------------------------------------------------------
# Phase 1: fc1 (reduction over D, streamed bf16 w1 tiles) -> relu -> fc2 ->
#          relu -> fc3 -> relu.  Output is the tiny (B, H) hidden activation.
# ---------------------------------------------------------------------------
def _hidden_kernel(x_ref, w1_ref, b1_ref, w2_ref, b2_ref, w3_ref, b3_ref,
                   h_ref, acc_ref):
    k = pl.program_id(0)

    @pl.when(k == 0)
    def _():
        acc_ref[...] = jnp.zeros(acc_ref.shape, jnp.float32)

    # x tile (B, TK) cast to bf16, contracted with the bf16 w1 tile (H, TK)
    # over TK -> (B, H).  Contracting the last dim of both operands keeps both
    # streamed loads lane-dense; single native MXU pass, f32 accumulation.
    acc_ref[...] += lax.dot_general(
        x_ref[...].astype(jnp.bfloat16), w1_ref[...],
        dimension_numbers=(((1,), (1,)), ((), ())),
        preferred_element_type=jnp.float32)

    @pl.when(k == pl.num_programs(0) - 1)
    def _():
        h = jnp.maximum(acc_ref[...] + b1_ref[...], 0.0)
        h = jnp.dot(h, w2_ref[...], preferred_element_type=jnp.float32) + b2_ref[...]
        h = jnp.maximum(h, 0.0)
        h = jnp.dot(h, w3_ref[...], preferred_element_type=jnp.float32) + b3_ref[...]
        h = jnp.maximum(h, 0.0)
        h_ref[...] = h


# ---------------------------------------------------------------------------
# Phase 2 (fused): fc4 tiled over the output D + online logsumexp + normalize.
#   pass p == 0: y_j = h @ w4_j + b4_j  -> VMEM scratch; update running (m, s)
#   pass p == 1: out_j = y_j - lse      -> HBM (only written on this pass)
# ---------------------------------------------------------------------------
def _logits_kernel(h_ref, w4_ref, b4_ref, out_ref,
                   y_scr, m_ref, s_ref, lse_ref):
    p = pl.program_id(0)          # 0: compute logits + lse, 1: normalize
    j = pl.program_id(1)
    nj = pl.num_programs(1)

    @pl.when((p == 0) & (j == 0))
    def _():
        m_ref[...] = jnp.full(m_ref.shape, -jnp.inf, jnp.float32)
        s_ref[...] = jnp.zeros(s_ref.shape, jnp.float32)

    @pl.when(p == 0)
    def _():
        y = jnp.dot(h_ref[...].astype(jnp.bfloat16), w4_ref[...],
                    preferred_element_type=jnp.float32) + b4_ref[...]
        y_scr[j] = y                                 # keep raw logits in VMEM

        m_prev = m_ref[...]
        m_new = jnp.maximum(m_prev, jnp.max(y, axis=-1, keepdims=True))
        s_ref[...] = (jnp.exp(m_prev - m_new) * s_ref[...]
                      + jnp.sum(jnp.exp(y - m_new), axis=-1, keepdims=True))
        m_ref[...] = m_new

        @pl.when(j == nj - 1)
        def _():
            lse_ref[...] = m_ref[...] + jnp.log(s_ref[...])

    @pl.when(p == 1)
    def _():
        out_ref[...] = y_scr[j] - lse_ref[...]


# ---------------------------------------------------------------------------
# Wrapper: per-chip VMEM budget, tile-size selection, pallas_call plumbing.
# ---------------------------------------------------------------------------
def _vmem_budget_bytes():
    try:
        kind = jax.devices()[0].device_kind.lower()
    except Exception:
        kind = ""
    if "v7" in kind:
        return 52 * 1024 * 1024       # v7x: 64 MiB physical VMEM per TC
    if any(v in kind for v in ("v4", "v5", "v6")):
        return 100 * 1024 * 1024      # v4/v5e/v6e: 128 MiB physical VMEM
    return 48 * 1024 * 1024           # unknown chip: conservative


def _pick_tile(d, target):
    """Largest lane-friendly (multiple of 128) divisor of d that is <= target."""
    if d <= target:
        return d
    t = (min(target, d) // 128) * 128
    for c in range(t, 127, -128):
        if d % c == 0:
            return c
    return d


def network_forward(x, params, *, block_k=None, block_n=None):
    """x: (B, D) float32.  Weight layouts (see init_params): w1 (H, D) bf16;
    w2, w3 (H, H) f32 stored as (in, out); w4 (H, D) bf16 stored as (in, out);
    biases (1, out) f32."""
    B, D_in = x.shape
    H = params["w2"].shape[0]
    D_out = params["w4"].shape[1]

    # Pad batch to the f32 sublane count (8) so sublanes / MXU M-dim are used.
    Bp = max(8, ((B + 7) // 8) * 8)
    if Bp != B:
        x = jnp.pad(x, ((0, Bp - B), (0, 0)))

    budget = _vmem_budget_bytes()
    reserve = 6 * 1024 * 1024  # headroom for small resident operands / compiler scratch

    # Phase 1 per-bk-element VMEM: double-buffered x (f32) + w1 (bf16) tiles.
    if block_k is None:
        per_k = 2 * (Bp * 4 + H * 2)
        block_k = min(65536, max(512, (budget - reserve) // per_k))
    bk = _pick_tile(D_in, block_k)

    # Phase 2 keeps the full (Bp, D_out) f32 logits resident in VMEM scratch
    # (fused logsumexp + normalize -> no HBM round-trip for the raw logits).
    y_scr_bytes = Bp * D_out * 4
    if block_n is None:
        per_n = 2 * (H * 2 + 4 + Bp * 4)   # w4(bf16) + b4(f32) + out(f32), x2 buffers
        avail = budget - reserve - y_scr_bytes
        assert avail >= 128 * per_n, (
            "batch too large for the fused VMEM-resident logits; split the "
            "batch outside the kernel")
        # TODO(synk): add an unfused 3-phase fallback (logits round-trip HBM)
        # for batches whose (Bp, D_out) logits do not fit in VMEM.
        block_n = min(65536, max(512, avail // per_n))
    bn = _pick_tile(D_out, block_n)
    nj = D_out // bn
    last = nj - 1

    vmem_limit = budget
    cparams1 = pltpu.CompilerParams(
        dimension_semantics=("arbitrary",), vmem_limit_bytes=vmem_limit)
    cparams2 = pltpu.CompilerParams(
        dimension_semantics=("arbitrary", "arbitrary"), vmem_limit_bytes=vmem_limit)

    # ---- Phase 1: hidden activation (Bp, H) -------------------------------
    h = pl.pallas_call(
        _hidden_kernel,
        out_shape=jax.ShapeDtypeStruct((Bp, H), jnp.float32),
        grid=(D_in // bk,),
        in_specs=[
            pl.BlockSpec((Bp, bk), lambda k: (0, k)),   # x tile (f32)
            pl.BlockSpec((H, bk), lambda k: (0, k)),    # w1 tile (bf16), lane-dense D
            pl.BlockSpec((1, H), lambda k: (0, 0)),     # b1 (resident)
            pl.BlockSpec((H, H), lambda k: (0, 0)),     # w2 (resident)
            pl.BlockSpec((1, H), lambda k: (0, 0)),     # b2
            pl.BlockSpec((H, H), lambda k: (0, 0)),     # w3 (resident)
            pl.BlockSpec((1, H), lambda k: (0, 0)),     # b3
        ],
        out_specs=pl.BlockSpec((Bp, H), lambda k: (0, 0)),
        scratch_shapes=[pltpu.VMEM((Bp, H), jnp.float32)],
        compiler_params=cparams1,
    )(x, params["w1"], params["b1"], params["w2"], params["b2"],
      params["w3"], params["b3"])

    # ---- Phase 2 (fused): logits + online logsumexp + normalize -----------
    # Pass 0 (p==0) streams w4/b4 tiles; pass 1 (p==1) pins them to the last
    # block (no extra weight traffic) and only then writes the output blocks.
    out = pl.pallas_call(
        _logits_kernel,
        out_shape=jax.ShapeDtypeStruct((Bp, D_out), jnp.float32),
        grid=(2, nj),
        in_specs=[
            pl.BlockSpec((Bp, H), lambda p, j: (0, 0)),                       # h (resident)
            pl.BlockSpec((H, bn), lambda p, j: (0, j * (1 - p) + last * p)),  # w4 tile (bf16)
            pl.BlockSpec((1, bn), lambda p, j: (0, j * (1 - p) + last * p)),  # b4 tile (f32)
        ],
        out_specs=pl.BlockSpec((Bp, bn), lambda p, j: (0, j * p)),
        scratch_shapes=[pltpu.VMEM((nj, Bp, bn), jnp.float32),  # raw logits (VMEM-resident)
                        pltpu.VMEM((Bp, 1), jnp.float32),       # running max
                        pltpu.VMEM((Bp, 1), jnp.float32),       # running sum
                        pltpu.VMEM((Bp, 1), jnp.float32)],      # logsumexp
        compiler_params=cparams2,
    )(h, params["w4"], params["b4"])

    return out[:B]


def init_params(key, d_in, hidden, d_out):
    """Deterministic init mimicking nn.Linear's U(-1/sqrt(fan_in), 1/sqrt(fan_in)).
    w1 keeps PyTorch's (out, in) = (H, D) layout; w2/w3/w4 are stored transposed
    (in, out) so the kernel does h @ w.  All big-D axes are last (lane) axes.
    The two huge weights are stored in bfloat16 (halves HBM weight traffic)."""
    def uniform(k, shape, fan_in):
        bound = 1.0 / jnp.sqrt(jnp.float32(fan_in))
        return jax.random.uniform(k, shape, jnp.float32, -bound, bound)

    ks = jax.random.split(key, 8)
    return {
        "w1": uniform(ks[0], (hidden, d_in), d_in).astype(jnp.bfloat16),    # (H, D)
        "b1": uniform(ks[1], (1, hidden), d_in),
        "w2": uniform(ks[2], (hidden, hidden), hidden),
        "b2": uniform(ks[3], (1, hidden), hidden),
        "w3": uniform(ks[4], (hidden, hidden), hidden),
        "b3": uniform(ks[5], (1, hidden), hidden),
        "w4": uniform(ks[6], (hidden, d_out), hidden).astype(jnp.bfloat16),  # (H, D)
        "b4": uniform(ks[7], (1, d_out), hidden),
    }


def reference_forward(x, p):
    """Pure-JAX reference on the same stored (bf16) weights, f32 HIGHEST math."""
    hp = lax.Precision.HIGHEST
    w1 = p["w1"].astype(jnp.float32)
    w4 = p["w4"].astype(jnp.float32)
    h = jnp.maximum(jnp.dot(x, w1.T, precision=hp) + p["b1"], 0.0)
    h = jnp.maximum(jnp.dot(h, p["w2"], precision=hp) + p["b2"], 0.0)
    h = jnp.maximum(jnp.dot(h, p["w3"], precision=hp) + p["b3"], 0.0)
    y = jnp.dot(h, w4, precision=hp) + p["b4"]
    return jax.nn.log_softmax(y, axis=1)


if __name__ == "__main__":
    B = 2          # batch (padded to 8 inside the wrapper)
    D = 8192       # stands in for the module's 1,310,720 features
    H = 64         # hidden width (matches the module)

    key = jax.random.PRNGKey(0)
    kx, kp = jax.random.split(key)
    x = jax.random.normal(kx, (B, D), dtype=jnp.float32)
    params = init_params(kp, D, H, D)

    out = network_forward(x, params)
    out = jax.block_until_ready(out)

    ref = reference_forward(x, params)
    assert out.shape == (B, D)
    max_err = float(jnp.max(jnp.abs(out - ref)))
    assert max_err < 1e-3, f"mismatch vs JAX reference, max_err={max_err}"

    print("KERNEL_OK")
</pallas_src>

<mosaic_0001>
module attributes {stable_mosaic.version = 11 : i64} {
  func.func @_hidden_kernel(%arg0: i32, %arg1: memref<8x8192xf32, #tpu.memory_space<vmem>>, %arg2: memref<64x8192xbf16, #tpu.memory_space<vmem>>, %arg3: memref<1x64xf32, #tpu.memory_space<vmem>>, %arg4: memref<64x64xf32, #tpu.memory_space<vmem>>, %arg5: memref<1x64xf32, #tpu.memory_space<vmem>>, %arg6: memref<64x64xf32, #tpu.memory_space<vmem>>, %arg7: memref<1x64xf32, #tpu.memory_space<vmem>>, %arg8: memref<8x64xf32, #tpu.memory_space<vmem>>, %arg9: memref<8x64xf32, #tpu.memory_space<vmem>>) attributes {dimension_semantics = [#tpu.dimension_semantics<arbitrary>], iteration_bounds = array<i64: 1>, scalar_prefetch = 0 : i64, scratch_operands = 1 : i64, tpu.core_type = #tpu.core_type<tc>, window_params = [{transform_indices = @transform_0, window_bounds = array<i64: 8, 8192>}, {transform_indices = @transform_1, window_bounds = array<i64: 64, 8192>}, {pipeline_mode = #tpu.pipeline_mode<synchronous>, transform_indices = @transform_2, window_bounds = array<i64: 1, 64>}, {pipeline_mode = #tpu.pipeline_mode<synchronous>, transform_indices = @transform_3, window_bounds = array<i64: 64, 64>}, {pipeline_mode = #tpu.pipeline_mode<synchronous>, transform_indices = @transform_4, window_bounds = array<i64: 1, 64>}, {pipeline_mode = #tpu.pipeline_mode<synchronous>, transform_indices = @transform_5, window_bounds = array<i64: 64, 64>}, {pipeline_mode = #tpu.pipeline_mode<synchronous>, transform_indices = @transform_6, window_bounds = array<i64: 1, 64>}, {pipeline_mode = #tpu.pipeline_mode<synchronous>, transform_indices = @transform_7, window_bounds = array<i64: 8, 64>}]} {
    %c0_i32 = arith.constant 0 : i32
    %0 = arith.cmpi eq, %arg0, %c0_i32 : i32
    %1 = arith.extui %0 : i1 to i32
    %c0_i32_0 = arith.constant 0 : i32
    %2 = arith.cmpi ne, %1, %c0_i32_0 : i32
    scf.if %2 {
      %cst_10 = arith.constant 0.000000e+00 : f32
      %13 = vector.broadcast %cst_10 : f32 to vector<8x64xf32>
      %c0_11 = arith.constant 0 : index
      %c0_12 = arith.constant 0 : index
      %14 = vector.load %arg9[%c0_11, %c0_12] : memref<8x64xf32, #tpu.memory_space<vmem>>, vector<8x64xf32>
      tpu.vector_store %arg9[%c0_11, %c0_12], %13 {strides = array<i32>} : memref<8x64xf32, #tpu.memory_space<vmem>>, vector<8x64xf32>,
    } else {
    }
    %c0 = arith.constant 0 : index
    %c0_1 = arith.constant 0 : index
    %3 = vector.load %arg9[%c0, %c0_1] : memref<8x64xf32, #tpu.memory_space<vmem>>, vector<8x64xf32>
    %c0_2 = arith.constant 0 : index
    %c0_3 = arith.constant 0 : index
    %4 = vector.load %arg1[%c0_2, %c0_3] : memref<8x8192xf32, #tpu.memory_space<vmem>>, vector<8x8192xf32>
    %5 = arith.truncf %4 : vector<8x8192xf32> to vector<8x8192xbf16>
    %c0_4 = arith.constant 0 : index
    %c0_5 = arith.constant 0 : index
    %6 = vector.load %arg2[%c0_4, %c0_5] : memref<64x8192xbf16, #tpu.memory_space<vmem>>, vector<64x8192xbf16>
    %cst = arith.constant dense<0.000000e+00> : vector<8x64xf32>
    %7 = tpu.matmul %5, %6, %cst {dimension_numbers = #tpu.dot_dimension_numbers<[1], [1], [0], [0], [0, 0, 1, 0], [], []>} : vector<8x8192xbf16>, vector<64x8192xbf16>, vector<8x64xf32> -> vector<8x64xf32>
    %8 = arith.addf %3, %7 : vector<8x64xf32>
    %c0_6 = arith.constant 0 : index
    %c0_7 = arith.constant 0 : index
    %9 = vector.load %arg9[%c0_6, %c0_7] : memref<8x64xf32, #tpu.memory_space<vmem>>, vector<8x64xf32>
    tpu.vector_store %arg9[%c0_6, %c0_7], %8 {strides = array<i32>} : memref<8x64xf32, #tpu.memory_space<vmem>>, vector<8x64xf32>,
    %c0_i32_8 = arith.constant 0 : i32
    %10 = arith.cmpi eq, %arg0, %c0_i32_8 : i32
    %11 = arith.extui %10 : i1 to i32
    %c0_i32_9 = arith.constant 0 : i32
    %12 = arith.cmpi ne, %11, %c0_i32_9 : i32
    scf.if %12 {
      %c0_10 = arith.constant 0 : index
      %c0_11 = arith.constant 0 : index
      %13 = vector.load %arg9[%c0_10, %c0_11] : memref<8x64xf32, #tpu.memory_space<vmem>>, vector<8x64xf32>
      %c0_12 = arith.constant 0 : index
      %c0_13 = arith.constant 0 : index
      %14 = vector.load %arg3[%c0_12, %c0_13] : memref<1x64xf32, #tpu.memory_space<vmem>>, vector<1x64xf32>
      %15 = vector.broadcast %14 : vector<1x64xf32> to vector<8x64xf32>
      %16 = arith.addf %13, %15 : vector<8x64xf32>
      %cst_14 = arith.constant 0.000000e+00 : f32
      %17 = vector.broadcast %cst_14 : f32 to vector<8x64xf32>
      %18 = arith.maximumf %16, %17 : vector<8x64xf32>
      %c0_15 = arith.constant 0 : index
      %c0_16 = arith.constant 0 : index
      %19 = vector.load %arg4[%c0_15, %c0_16] : memref<64x64xf32, #tpu.memory_space<vmem>>, vector<64x64xf32>
      %cst_17 = arith.constant dense<0.000000e+00> : vector<8x64xf32>
      %20 = tpu.matmul %18, %19, %cst_17 {dimension_numbers = #tpu.dot_dimension_numbers<[1], [0], [0], [1], [0, 0, 1, 1], [], []>} : vector<8x64xf32>, vector<64x64xf32>, vector<8x64xf32> -> vector<8x64xf32>
      %c0_18 = arith.constant 0 : index
      %c0_19 = arith.constant 0 : index
      %21 = vector.load %arg5[%c0_18, %c0_19] : memref<1x64xf32, #tpu.memory_space<vmem>>, vector<1x64xf32>
      %22 = vector.broadcast %21 : vector<1x64xf32> to vector<8x64xf32>
      %23 = arith.addf %20, %22 : vector<8x64xf32>
      %cst_20 = arith.constant 0.000000e+00 : f32
      %24 = vector.broadcast %cst_20 : f32 to vector<8x64xf32>
      %25 = arith.maximumf %23, %24 : vector<8x64xf32>
      %c0_21 = arith.constant 0 : index
      %c0_22 = arith.constant 0 : index
      %26 = vector.load %arg6[%c0_21, %c0_22] : memref<64x64xf32, #tpu.memory_space<vmem>>, vector<64x64xf32>
      %cst_23 = arith.constant dense<0.000000e+00> : vector<8x64xf32>
      %27 = tpu.matmul %25, %26, %cst_23 {dimension_numbers = #tpu.dot_dimension_numbers<[1], [0], [0], [1], [0, 0, 1, 1], [], []>} : vector<8x64xf32>, vector<64x64xf32>, vector<8x64xf32> -> vector<8x64xf32>
      %c0_24 = arith.constant 0 : index
      %c0_25 = arith.constant 0 : index
      %28 = vector.load %arg7[%c0_24, %c0_25] : memref<1x64xf32, #tpu.memory_space<vmem>>, vector<1x64xf32>
      %29 = vector.broadcast %28 : vector<1x64xf32> to vector<8x64xf32>
      %30 = arith.addf %27, %29 : vector<8x64xf32>
      %cst_26 = arith.constant 0.000000e+00 : f32
      %31 = vector.broadcast %cst_26 : f32 to vector<8x64xf32>
      %32 = arith.maximumf %30, %31 : vector<8x64xf32>
      %c0_27 = arith.constant 0 : index
      %c0_28 = arith.constant 0 : index
      %33 = vector.load %arg8[%c0_27, %c0_28] : memref<8x64xf32, #tpu.memory_space<vmem>>, vector<8x64xf32>
      tpu.vector_store %arg8[%c0_27, %c0_28], %32 {strides = array<i32>} : memref<8x64xf32, #tpu.memory_space<vmem>>, vector<8x64xf32>,
    } else {
    }
    return
  }
  func.func @transform_0(%arg0: i32) -> (i32, i32) {
    %c0_i32 = arith.constant 0 : i32
    %c0_i32_0 = arith.constant 0 : i32
    return %c0_i32, %arg0 : i32, i32
  }
  func.func @transform_1(%arg0: i32) -> (i32, i32) {
    %c0_i32 = arith.constant 0 : i32
    %c0_i32_0 = arith.constant 0 : i32
    return %c0_i32, %arg0 : i32, i32
  }
  func.func @transform_2(%arg0: i32) -> (i32, i32) {
    %c0_i32 = arith.constant 0 : i32
    %c0_i32_0 = arith.constant 0 : i32
    %c0_i32_1 = arith.constant 0 : i32
    return %c0_i32, %c0_i32_0 : i32, i32
  }
  func.func @transform_3(%arg0: i32) -> (i32, i32) {
    %c0_i32 = arith.constant 0 : i32
    %c0_i32_0 = arith.constant 0 : i32
    %c0_i32_1 = arith.constant 0 : i32
    return %c0_i32, %c0_i32_0 : i32, i32
  }
  func.func @transform_4(%arg0: i32) -> (i32, i32) {
    %c0_i32 = arith.constant 0 : i32
    %c0_i32_0 = arith.constant 0 : i32
    %c0_i32_1 = arith.constant 0 : i32
    return %c0_i32, %c0_i32_0 : i32, i32
  }
  func.func @transform_5(%arg0: i32) -> (i32, i32) {
    %c0_i32 = arith.constant 0 : i32
    %c0_i32_0 = arith.constant 0 : i32
    %c0_i32_1 = arith.constant 0 : i32
    return %c0_i32, %c0_i32_0 : i32, i32
  }
  func.func @transform_6(%arg0: i32) -> (i32, i32) {
    %c0_i32 = arith.constant 0 : i32
    %c0_i32_0 = arith.constant 0 : i32
    %c0_i32_1 = arith.constant 0 : i32
    return %c0_i32, %c0_i32_0 : i32, i32
  }
  func.func @transform_7(%arg0: i32) -> (i32, i32) {
    %c0_i32 = arith.constant 0 : i32
    %c0_i32_0 = arith.constant 0 : i32
    %c0_i32_1 = arith.constant 0 : i32
    return %c0_i32, %c0_i32_0 : i32, i32
  }
}

</mosaic_0001>

<llo_original>
// kernel: tpu_custom_call.1
$region0: #{tpu_custom_call.1}
  #allocation0 [shape = 'u32[]', space=smem, size = 0x4, offset = 0x4, fixed_abs, tag = 'smem constant byte address 0x4 - core index']
  #allocation1 [shape = 'u32[144,128]{1,0:T(1,128)}', space=vmem, size = 0x12000, scoped, tag = 'internal scratch']
  #allocation2 [shape = 'f32[8,64]{1,0:T(8,128)}', space=vmem, size = 0x1000, scoped, tag = 'scratch operand']
  %s0 = inlined_call_operand.hbm [shape: f32[8,8192], index: 0, kind: input, shape index: {}]
  %s1 = inlined_call_operand.hbm [shape: bf16[64,8192], index: 1, kind: input, shape index: {}]
  %s2 = inlined_call_operand.vmem [shape: f32[1,64], index: 2, kind: input, shape index: {}]
  %s3 = inlined_call_operand.hbm [shape: f32[64,64], index: 3, kind: input, shape index: {}]
  %s4 = inlined_call_operand.vmem [shape: f32[1,64], index: 4, kind: input, shape index: {}]
  %s5 = inlined_call_operand.hbm [shape: f32[64,64], index: 5, kind: input, shape index: {}]
  %s6 = inlined_call_operand.vmem [shape: f32[1,64], index: 6, kind: input, shape index: {}]
  %s7 = inlined_call_operand.hbm [shape: f32[8,64], index: 7, kind: output, shape index: {}]
  %s8 = sld [smem:[#allocation0]]
  $region62: #{tpu_custom_call.1} parent=0
    _
  %s10 = ssub.s32 1, %s8
  %s11 = scalar_select 0, %s10, %s8
  $region1: #{tpu_custom_call.1} parent=0
    #allocation3 [shape = 'u8[262144]{0}', space=vmem, size = 0x40000, scoped, tag = 'input window, operand 0, single buffered']
    #allocation4 [shape = 's32[1]{0}', space=sflag, size = 0x4, scoped, tag = 'scoped memory for tpu_custom_call.1']
    #allocation5 [shape = 's32[1]{0}', space=sflag, size = 0x4, scoped, tag = 'scoped memory for tpu_custom_call.1']
    #allocation6 [shape = 'u8[1048576]{0}', space=vmem, size = 0x100000, scoped, tag = 'input window, operand 1, single buffered']
    #allocation7 [shape = 's32[1]{0}', space=sflag, size = 0x4, scoped, tag = 'scoped memory for tpu_custom_call.1']
    #allocation8 [shape = 'u8[32768]{0}', space=vmem, size = 0x8000, scoped, tag = 'input window, operand 3, single buffered']
    #allocation9 [shape = 'u8[32768]{0}', space=vmem, size = 0x8000, scoped, tag = 'input window, operand 5, single buffered']
    #allocation10 [shape = 's32[1]{0}', space=sflag, size = 0x4, scoped, tag = 'scoped memory for tpu_custom_call.1']
    #allocation11 [shape = 'u8[4096]{0}', space=vmem, size = 0x1000, scoped, tag = 'output window, operand 0, single buffered']
    %12 = vsyncpa [#allocation4], 0
    %13 = vsyncpa [#allocation7], 0
    %14 = vsyncpa [#allocation10], 0
    %15 = vsyncpa [#allocation5], 0
    // Predicated region
    $region2: #{tpu_custom_call.1} parent=1 // pred_check
      _
    $region3: #{tpu_custom_call.1} parent=1 // pred_check_branch
      %17 = sbr.rel (0) target = $region5
    $region4: #{tpu_custom_call.1} parent=1 // pred_region
      %s19 = ssub.s32 8192, 8192
      %20 = vsyncadd [#allocation4], %s19
      %s22 = sshll.u32 [#allocation3], 4
      %s23 = int_to_ptr.vmem [resolvable:$true] %s22
      %25 = dma.hbm_to_vmem [thread:$0]  %s0, 8192, %s23, [#allocation4]
    $region5: #{tpu_custom_call.1} parent=1 // pred_fallthru
      _
    // Predicated region
    $region6: #{tpu_custom_call.1} parent=1 // pred_check
      _
    $region7: #{tpu_custom_call.1} parent=1 // pred_check_branch
      %27 = sbr.rel (0) target = $region9
    $region8: #{tpu_custom_call.1} parent=1 // pred_region
      %s29 = ssub.s32 32768, 32768
      %30 = vsyncadd [#allocation7], %s29
      %s31 = sshll.u32 [#allocation6], 4
      %s32 = int_to_ptr.vmem [resolvable:$true] %s31
      %37 = dma.hbm_to_vmem [thread:$0]  %s1, 32768, %s32, [#allocation7], 4096, 4096, 256
    $region9: #{tpu_custom_call.1} parent=1 // pred_fallthru
      _
    // Predicated region
    $region10: #{tpu_custom_call.1} parent=1 // pred_check
      _
    $region11: #{tpu_custom_call.1} parent=1 // pred_check_branch
      %39 = sbr.rel (0) target = $region13
    $region12: #{tpu_custom_call.1} parent=1 // pred_region
      _
    $region13: #{tpu_custom_call.1} parent=1 // pred_fallthru
      _
    // Predicated region
    $region14: #{tpu_custom_call.1} parent=1 // pred_check
      _
    $region15: #{tpu_custom_call.1} parent=1 // pred_check_branch
      %41 = sbr.rel (0) target = $region17
    $region16: #{tpu_custom_call.1} parent=1 // pred_region
      %s43 = ssub.s32 1024, 1024
      %44 = vsyncadd [#allocation7], %s43
      %s45 = sshll.u32 [#allocation8], 4
      %s46 = int_to_ptr.vmem [resolvable:$true] %s45
      %51 = dma.hbm_to_vmem [thread:$0]  %s3, 1024, %s46, [#allocation7], 128, 128, 8
    $region17: #{tpu_custom_call.1} parent=1 // pred_fallthru
      _
    // Predicated region
    $region18: #{tpu_custom_call.1} parent=1 // pred_check
      _
    $region19: #{tpu_custom_call.1} parent=1 // pred_check_branch
      %53 = sbr.rel (0) target = $region21
    $region20: #{tpu_custom_call.1} parent=1 // pred_region
      _
    $region21: #{tpu_custom_call.1} parent=1 // pred_fallthru
      _
    // Predicated region
    $region22: #{tpu_custom_call.1} parent=1 // pred_check
      _
    $region23: #{tpu_custom_call.1} parent=1 // pred_check_branch
      %55 = sbr.rel (0) target = $region25
    $region24: #{tpu_custom_call.1} parent=1 // pred_region
      %s57 = ssub.s32 1024, 1024
      %58 = vsyncadd [#allocation10], %s57
      %s59 = sshll.u32 [#allocation9], 4
      %s60 = int_to_ptr.vmem [resolvable:$true] %s59
      %65 = dma.hbm_to_vmem [thread:$0]  %s5, 1024, %s60, [#allocation10], 128, 128, 8
    $region25: #{tpu_custom_call.1} parent=1 // pred_fallthru
      _
    // Predicated region
    $region26: #{tpu_custom_call.1} parent=1 // pred_check
      _
    $region27: #{tpu_custom_call.1} parent=1 // pred_check_branch
      %67 = sbr.rel (0) target = $region29
    $region28: #{tpu_custom_call.1} parent=1 // pred_region
      _
    $region29: #{tpu_custom_call.1} parent=1 // pred_fallthru
      _
    // Predicated region
    $region30: #{tpu_custom_call.1} parent=1 // pred_check
      _
    $region31: #{tpu_custom_call.1} parent=1 // pred_check_branch
      %69 = sbr.rel (0) target = $region33
    $region32: #{tpu_custom_call.1} parent=1 // pred_region
      %70 = dma.done [#allocation4], 8192
    $region33: #{tpu_custom_call.1} parent=1 // pred_fallthru
      _
    // Predicated region
    $region34: #{tpu_custom_call.1} parent=1 // pred_check
      _
    $region35: #{tpu_custom_call.1} parent=1 // pred_check_branch
      %72 = sbr.rel (0) target = $region37
    $region36: #{tpu_custom_call.1} parent=1 // pred_region
      %73 = dma.done [#allocation7], 32768
    $region37: #{tpu_custom_call.1} parent=1 // pred_fallthru
      _
    // Predicated region
    $region38: #{tpu_custom_call.1} parent=1 // pred_check
      _
    $region39: #{tpu_custom_call.1} parent=1 // pred_check_branch
      %75 = sbr.rel (0) target = $region41
    $region40: #{tpu_custom_call.1} parent=1 // pred_region
      %76 = dma.done [#allocation7], 1024
    $region41: #{tpu_custom_call.1} parent=1 // pred_fallthru
      _
    // Predicated region
    $region42: #{tpu_custom_call.1} parent=1 // pred_check
      _
    $region43: #{tpu_custom_call.1} parent=1 // pred_check_branch
      %78 = sbr.rel (0) target = $region45
    $region44: #{tpu_custom_call.1} parent=1 // pred_region
      %79 = dma.done [#allocation10], 1024
    $region45: #{tpu_custom_call.1} parent=1 // pred_fallthru
      _
    %p81 = scmp.eq.s32.totalorder 0, 0
    // Predicated region
    $region46: #{tpu_custom_call.1} parent=1 // pred_check
      %p82 = pneg %p81
    $region47: #{tpu_custom_call.1} parent=1 // pred_check_branch
      %84 = sbr.rel (%p82) target = $region49
    $region48: #{tpu_custom_call.1} parent=1 // pred_region
      %vm85 = vcmask 523264
      %86 = vst.msk [vmem:[#allocation2] sm:$0xff] %vm85, 0.0
    $region49: #{tpu_custom_call.1} parent=1 // pred_fallthru
      _
    %v87 = vld [vmem:[#allocation2] sm:$0xff]
    %v88 = vld [vmem:[#allocation3] sm:$0xff]
    %v89 = vld [vmem:[#allocation3 + $0x8] sm:$0xff]
    %v90 = vld [vmem:[#allocation3 + $0x10] sm:$0xff]
    %v91 = vld [vmem:[#allocation3 + $0x18] sm:$0xff]
    %v92 = vld [vmem:[#allocation3 + $0x20] sm:$0xff]
    %v93 = vld [vmem:[#allocation3 + $0x28] sm:$0xff]
    %v94 = vld [vmem:[#allocation3 + $0x30] sm:$0xff]
    %v95 = vld [vmem:[#allocation3 + $0x38] sm:$0xff]
    %v96 = vld [vmem:[#allocation3 + $0x40] sm:$0xff]
    %v97 = vld [vmem:[#allocation3 + $0x48] sm:$0xff]
    %v98 = vld [vmem:[#allocation3 + $0x50] sm:$0xff]
    %v99 = vld [vmem:[#allocation3 + $0x58] sm:$0xff]
    %v100 = vld [vmem:[#allocation3 + $0x60] sm:$0xff]
    %v101 = vld [vmem:[#allocation3 + $0x68] sm:$0xff]
    %v102 = vld [vmem:[#allocation3 + $0x70] sm:$0xff]
    %v103 = vld [vmem:[#allocation3 + $0x78] sm:$0xff]
    %v104 = vld [vmem:[#allocation3 + $0x80] sm:$0xff]
    %v105 = vld [vmem:[#allocation3 + $0x88] sm:$0xff]
    %v106 = vld [vmem:[#allocation3 + $0x90] sm:$0xff]
    %v107 = vld [vmem:[#allocation3 + $0x98] sm:$0xff]
    %v108 = vld [vmem:[#allocation3 + $0xa0] sm:$0xff]
    %v109 = vld [vmem:[#allocation3 + $0xa8] sm:$0xff]
    %v110 = vld [vmem:[#allocation3 + $0xb0] sm:$0xff]
    %v111 = vld [vmem:[#allocation3 + $0xb8] sm:$0xff]
    %v112 = vld [vmem:[#allocation3 + $0xc0] sm:$0xff]
    %v113 = vld [vmem:[#allocation3 + $0xc8] sm:$0xff]
    %v114 = vld [vmem:[#allocation3 + $0xd0] sm:$0xff]
    %v115 = vld [vmem:[#allocation3 + $0xd8] sm:$0xff]
    %v116 = vld [vmem:[#allocation3 + $0xe0] sm:$0xff]
    %v117 = vld [vmem:[#allocation3 + $0xe8] sm:$0xff]
    %v118 = vld [vmem:[#allocation3 + $0xf0] sm:$0xff]
    %v119 = vld [vmem:[#allocation3 + $0xf8] sm:$0xff]
    %v120 = vld [vmem:[#allocation3 + $0x100] sm:$0xff]
    %v121 = vld [vmem:[#allocation3 + $0x108] sm:$0xff]
    %v122 = vld [vmem:[#allocation3 + $0x110] sm:$0xff]
    %v123 = vld [vmem:[#allocation3 + $0x118] sm:$0xff]
    %v124 = vld [vmem:[#allocation3 + $0x120] sm:$0xff]
    %v125 = vld [vmem:[#allocation3 + $0x128] sm:$0xff]
    %v126 = vld [vmem:[#allocation3 + $0x130] sm:$0xff]
    %v127 = vld [vmem:[#allocation3 + $0x138] sm:$0xff]
    %v128 = vld [vmem:[#allocation3 + $0x140] sm:$0xff]
    %v129 = vld [vmem:[#allocation3 + $0x148] sm:$0xff]
    %v130 = vld [vmem:[#allocation3 + $0x150] sm:$0xff]
    %v131 = vld [vmem:[#allocation3 + $0x158] sm:$0xff]
    %v132 = vld [vmem:[#allocation3 + $0x160] sm:$0xff]
    %v133 = vld [vmem:[#allocation3 + $0x168] sm:$0xff]
    %v134 = vld [vmem:[#allocation3 + $0x170] sm:$0xff]
    %v135 = vld [vmem:[#allocation3 + $0x178] sm:$0xff]
    %v136 = vld [vmem:[#allocation3 + $0x180] sm:$0xff]
    %v137 = vld [vmem:[#allocation3 + $0x188] sm:$0xff]
    %v138 = vld [vmem:[#allocation3 + $0x190] sm:$0xff]
    %v139 = vld [vmem:[#allocation3 + $0x198] sm:$0xff]
    %v140 = vld [vmem:[#allocation3 + $0x1a0] sm:$0xff]
    %v141 = vld [vmem:[#allocation3 + $0x1a8] sm:$0xff]
    %v142 = vld [vmem:[#allocation3 + $0x1b0] sm:$0xff]
    %v143 = vld [vmem:[#allocation3 + $0x1b8] sm:$0xff]
    %v144 = vld [vmem:[#allocation3 + $0x1c0] sm:$0xff]
    %v145 = vld [vmem:[#allocation3 + $0x1c8] sm:$0xff]
    %v146 = vld [vmem:[#allocation3 + $0x1d0] sm:$0xff]
    %v147 = vld [vmem:[#allocation3 + $0x1d8] sm:$0xff]
    %v148 = vld [vmem:[#allocation3 + $0x1e0] sm:$0xff]
    %v149 = vld [vmem:[#allocation3 + $0x1e8] sm:$0xff]
    %v150 = vld [vmem:[#allocation3 + $0x1f0] sm:$0xff]
    %v151 = vld [vmem:[#allocation3 + $0x1f8] sm:$0xff]
    %v152 = vpack.c.bf16 %v88, %v88
    %v153 = vpack.c.bf16 %v89, %v89
    %v154 = vpack.c.bf16 %v90, %v90
    %v155 = vpack.c.bf16 %v91, %v91
    %v156 = vpack.c.bf16 %v92, %v92
    %v157 = vpack.c.bf16 %v93, %v93
    %v158 = vpack.c.bf16 %v94, %v94
    %v159 = vpack.c.bf16 %v95, %v95
    %v160 = vpack.c.bf16 %v96, %v96
    %v161 = vpack.c.bf16 %v97, %v97
    %v162 = vpack.c.bf16 %v98, %v98
    %v163 = vpack.c.bf16 %v99, %v99
    %v164 = vpack.c.bf16 %v100, %v100
    %v165 = vpack.c.bf16 %v101, %v101
    %v166 = vpack.c.bf16 %v102, %v102
    %v167 = vpack.c.bf16 %v103, %v103
    %v168 = vpack.c.bf16 %v104, %v104
    %v169 = vpack.c.bf16 %v105, %v105
    %v170 = vpack.c.bf16 %v106, %v106
    %v171 = vpack.c.bf16 %v107, %v107
    %v172 = vpack.c.bf16 %v108, %v108
    %v173 = vpack.c.bf16 %v109, %v109
    %v174 = vpack.c.bf16 %v110, %v110
    %v175 = vpack.c.bf16 %v111, %v111
    %v176 = vpack.c.bf16 %v112, %v112
    %v177 = vpack.c.bf16 %v113, %v113
    %v178 = vpack.c.bf16 %v114, %v114
    %v179 = vpack.c.bf16 %v115, %v115
    %v180 = vpack.c.bf16 %v116, %v116
    %v181 = vpack.c.bf16 %v117, %v117
    %v182 = vpack.c.bf16 %v118, %v118
    %v183 = vpack.c.bf16 %v119, %v119
    %v184 = vpack.c.bf16 %v120, %v120
    %v185 = vpack.c.bf16 %v121, %v121
    %v186 = vpack.c.bf16 %v122, %v122
    %v187 = vpack.c.bf16 %v123, %v123
    %v188 = vpack.c.bf16 %v124, %v124
    %v189 = vpack.c.bf16 %v125, %v125
    %v190 = vpack.c.bf16 %v126, %v126
    %v191 = vpack.c.bf16 %v127, %v127
    %v192 = vpack.c.bf16 %v128, %v128
    %v193 = vpack.c.bf16 %v129, %v129
    %v194 = vpack.c.bf16 %v130, %v130
    %v195 = vpack.c.bf16 %v131, %v131
    %v196 = vpack.c.bf16 %v132, %v132
    %v197 = vpack.c.bf16 %v133, %v133
    %v198 = vpack.c.bf16 %v134, %v134
    %v199 = vpack.c.bf16 %v135, %v135
    %v200 = vpack.c.bf16 %v136, %v136
    %v201 = vpack.c.bf16 %v137, %v137
    %v202 = vpack.c.bf16 %v138, %v138
    %v203 = vpack.c.bf16 %v139, %v139
    %v204 = vpack.c.bf16 %v140, %v140
    %v205 = vpack.c.bf16 %v141, %v141
    %v206 = vpack.c.bf16 %v142, %v142
    %v207 = vpack.c.bf16 %v143, %v143
    %v208 = vpack.c.bf16 %v144, %v144
    %v209 = vpack.c.bf16 %v145, %v145
    %v210 = vpack.c.bf16 %v146, %v146
    %v211 = vpack.c.bf16 %v147, %v147
    %v212 = vpack.c.bf16 %v148, %v148
    %v213 = vpack.c.bf16 %v149, %v149
    %v214 = vpack.c.bf16 %v150, %v150
    %v215 = vpack.c.bf16 %v151, %v151
    %v216 = vld [vmem:[#allocation6] sm:$0xff]
    %v217 = vld [vmem:[#allocation6 + $0x8] sm:$0xff]
    %v218 = vld [vmem:[#allocation6 + $0x10] sm:$0xff]
    %v219 = vld [vmem:[#allocation6 + $0x18] sm:$0xff]
    %v220 = vld [vmem:[#allocation6 + $0x20] sm:$0xff]
    %v221 = vld [vmem:[#allocation6 + $0x28] sm:$0xff]
    %v222 = vld [vmem:[#allocation6 + $0x30] sm:$0xff]
    %v223 = vld [vmem:[#allocation6 + $0x38] sm:$0xff]
    %v224 = vld [vmem:[#allocation6 + $0x40] sm:$0xff]
    %v225 = vld [vmem:[#allocation6 + $0x48] sm:$0xff]
    %v226 = vld [vmem:[#allocation6 + $0x50] sm:$0xff]
    %v227 = vld [vmem:[#allocation6 + $0x58] sm:$0xff]
    %v228 = vld [vmem:[#allocation6 + $0x60] sm:$0xff]
    %v229 = vld [vmem:[#allocation6 + $0x68] sm:$0xff]
    %v230 = vld [vmem:[#allocation6 + $0x70] sm:$0xff]
    %v231 = vld [vmem:[#allocation6 + $0x78] sm:$0xff]
    %v232 = vld [vmem:[#allocation6 + $0x80] sm:$0xff]
    %v233 = vld [vmem:[#allocation6 + $0x88] sm:$0xff]
    %v234 = vld [vmem:[#allocation6 + $0x90] sm:$0xff]
    %v235 = vld [vmem:[#allocation6 + $0x98] sm:$0xff]
    %v236 = vld [vmem:[#allocation6 + $0xa0] sm:$0xff]
    %v237 = vld [vmem:[#allocation6 + $0xa8] sm:$0xff]
    %v238 = vld [vmem:[#allocation6 + $0xb0] sm:$0xff]
    %v239 = vld [vmem:[#allocation6 + $0xb8] sm:$0xff]
    %v240 = vld [vmem:[#allocation6 + $0xc0] sm:$0xff]
    %v241 = vld [vmem:[#allocation6 + $0xc8] sm:$0xff]
    %v242 = vld [vmem:[#allocation6 + $0xd0] sm:$0xff]
    %v243 = vld [vmem:[#allocation6 + $0xd8] sm:$0xff]
    %v244 = vld [vmem:[#allocation6 + $0xe0] sm:$0xff]
    %v245 = vld [vmem:[#allocation6 + $0xe8] sm:$0xff]
    %v246 = vld [vmem:[#allocation6 + $0xf0] sm:$0xff]
    %v247 = vld [vmem:[#allocation6 + $0xf8] sm:$0xff]
    %v248 = vld [vmem:[#allocation6 + $0x100] sm:$0xff]
    %v249 = vld [vmem:[#allocation6 + $0x108] sm:$0xff]
    %v250 = vld [vmem:[#allocation6 + $0x110] sm:$0xff]
    %v251 = vld [vmem:[#allocation6 + $0x118] sm:$0xff]
    %v252 = vld [vmem:[#allocation6 + $0x120] sm:$0xff]
    %v253 = vld [vmem:[#allocation6 + $0x128] sm:$0xff]
    %v254 = vld [vmem:[#allocation6 + $0x130] sm:$0xff]
    %v255 = vld [vmem:[#allocation6 + $0x138] sm:$0xff]
    %v256 = vld [vmem:[#allocation6 + $0x140] sm:$0xff]
    %v257 = vld [vmem:[#allocation6 + $0x148] sm:$0xff]
    %v258 = vld [vmem:[#allocation6 + $0x150] sm:$0xff]
    %v259 = vld [vmem:[#allocation6 + $0x158] sm:$0xff]
    %v260 = vld [vmem:[#allocation6 + $0x160] sm:$0xff]
    %v261 = vld [vmem:[#allocation6 + $0x168] sm:$0xff]
    %v262 = vld [vmem:[#allocation6 + $0x170] sm:$0xff]
    %v263 = vld [vmem:[#allocation6 + $0x178] sm:$0xff]
    %v264 = vld [vmem:[#allocation6 + $0x180] sm:$0xff]
    %v265 = vld [vmem:[#allocation6 + $0x188] sm:$0xff]
    %v266 = vld [vmem:[#allocation6 + $0x190] sm:$0xff]
    %v267 = vld [vmem:[#allocation6 + $0x198] sm:$0xff]
    %v268 = vld [vmem:[#allocation6 + $0x1a0] sm:$0xff]
    %v269 = vld [vmem:[#allocation6 + $0x1a8] sm:$0xff]
    %v270 = vld [vmem:[#allocation6 + $0x1b0] sm:$0xff]
    %v271 = vld [vmem:[#allocation6 + $0x1b8] sm:$0xff]
    %v272 = vld [vmem:[#allocation6 + $0x1c0] sm:$0xff]
    %v273 = vld [vmem:[#allocation6 + $0x1c8] sm:$0xff]
    %v274 = vld [vmem:[#allocation6 + $0x1d0] sm:$0xff]
    %v275 = vld [vmem:[#allocation6 + $0x1d8] sm:$0xff]
    %v276 = vld [vmem:[#allocation6 + $0x1e0] sm:$0xff]
    %v277 = vld [vmem:[#allocation6 + $0x1e8] sm:$0xff]
    %v278 = vld [vmem:[#allocation6 + $0x1f0] sm:$0xff]
    %v279 = vld [vmem:[#allocation6 + $0x1f8] sm:$0xff]
    %v280 = vld [vmem:[#allocation6 + $0x200] sm:$0xff]
    %v281 = vld [vmem:[#allocation6 + $0x208] sm:$0xff]
    %v282 = vld [vmem:[#allocation6 + $0x210] sm:$0xff]
    %v283 = vld [vmem:[#allocation6 + $0x218] sm:$0xff]
    %v284 = vld [vmem:[#allocation6 + $0x220] sm:$0xff]
    %v285 = vld [vmem:[#allocation6 + $0x228] sm:$0xff]
    %v286 = vld [vmem:[#allocation6 + $0x230] sm:$0xff]
    %v287 = vld [vmem:[#allocation6 + $0x238] sm:$0xff]
    %v288 = vld [vmem:[#allocation6 + $0x240] sm:$0xff]
    %v289 = vld [vmem:[#allocation6 + $0x248] sm:$0xff]
    %v290 = vld [vmem:[#allocation6 + $0x250] sm:$0xff]
    %v291 = vld [vmem:[#allocation6 + $0x258] sm:$0xff]
    %v292 = vld [vmem:[#allocation6 + $0x260] sm:$0xff]
    %v293 = vld [vmem:[#allocation6 + $0x268] sm:$0xff]
    %v294 = vld [vmem:[#allocation6 + $0x270] sm:$0xff]
    %v295 = vld [vmem:[#allocation6 + $0x278] sm:$0xff]
    %v296 = vld [vmem:[#allocation6 + $0x280] sm:$0xff]
    %v297 = vld [vmem:[#allocation6 + $0x288] sm:$0xff]
    %v298 = vld [vmem:[#allocation6 + $0x290] sm:$0xff]
    %v299 = vld [vmem:[#allocation6 + $0x298] sm:$0xff]
    %v300 = vld [vmem:[#allocation6 + $0x2a0] sm:$0xff]
    %v301 = vld [vmem:[#allocation6 + $0x2a8] sm:$0xff]
    %v302 = vld [vmem:[#allocation6 + $0x2b0] sm:$0xff]
    %v303 = vld [vmem:[#allocation6 + $0x2b8] sm:$0xff]
    %v304 = vld [vmem:[#allocation6 + $0x2c0] sm:$0xff]
    %v305 = vld [vmem:[#allocation6 + $0x2c8] sm:$0xff]
    %v306 = vld [vmem:[#allocation6 + $0x2d0] sm:$0xff]
    %v307 = vld [vmem:[#allocation6 + $0x2d8] sm:$0xff]
    %v308 = vld [vmem:[#allocation6 + $0x2e0] sm:$0xff]
    %v309 = vld [vmem:[#allocation6 + $0x2e8] sm:$0xff]
    %v310 = vld [vmem:[#allocation6 + $0x2f0] sm:$0xff]
    %v311 = vld [vmem:[#allocation6 + $0x2f8] sm:$0xff]
    %v312 = vld [vmem:[#allocation6 + $0x300] sm:$0xff]
    %v313 = vld [vmem:[#allocation6 + $0x308] sm:$0xff]
    %v314 = vld [vmem:[#allocation6 + $0x310] sm:$0xff]
    %v315 = vld [vmem:[#allocation6 + $0x318] sm:$0xff]
    %v316 = vld [vmem:[#allocation6 + $0x320] sm:$0xff]
    %v317 = vld [vmem:[#allocation6 + $0x328] sm:$0xff]
    %v318 = vld [vmem:[#allocation6 + $0x330] sm:$0xff]
    %v319 = vld [vmem:[#allocation6 + $0x338] sm:$0xff]
    %v320 = vld [vmem:[#allocation6 + $0x340] sm:$0xff]
    %v321 = vld [vmem:[#allocation6 + $0x348] sm:$0xff]
    %v322 = vld [vmem:[#allocation6 + $0x350] sm:$0xff]
    %v323 = vld [vmem:[#allocation6 + $0x358] sm:$0xff]
    %v324 = vld [vmem:[#allocation6 + $0x360] sm:$0xff]
    %v325 = vld [vmem:[#allocation6 + $0x368] sm:$0xff]
    %v326 = vld [vmem:[#allocation6 + $0x370] sm:$0xff]
    %v327 = vld [vmem:[#allocation6 + $0x378] sm:$0xff]
    %v328 = vld [vmem:[#allocation6 + $0x380] sm:$0xff]
    %v329 = vld [vmem:[#allocation6 + $0x388] sm:$0xff]
    %v330 = vld [vmem:[#allocation6 + $0x390] sm:$0xff]
    %v331 = vld [vmem:[#allocation6 + $0x398] sm:$0xff]
    %v332 = vld [vmem:[#allocation6 + $0x3a0] sm:$0xff]
    %v333 = vld [vmem:[#allocation6 + $0x3a8] sm:$0xff]
    %v334 = vld [vmem:[#allocation6 + $0x3b0] sm:$0xff]
    %v335 = vld [vmem:[#allocation6 + $0x3b8] sm:$0xff]
    %v336 = vld [vmem:[#allocation6 + $0x3c0] sm:$0xff]
    %v337 = vld [vmem:[#allocation6 + $0x3c8] sm:$0xff]
    %v338 = vld [vmem:[#allocation6 + $0x3d0] sm:$0xff]
    %v339 = vld [vmem:[#allocation6 + $0x3d8] sm:$0xff]
    %v340 = vld [vmem:[#allocation6 + $0x3e0] sm:$0xff]
    %v341 = vld [vmem:[#allocation6 + $0x3e8] sm:$0xff]
    %v342 = vld [vmem:[#allocation6 + $0x3f0] sm:$0xff]
    %v343 = vld [vmem:[#allocation6 + $0x3f8] sm:$0xff]
    %v344 = vld [vmem:[#allocation6 + $0x400] sm:$0xff]
    %v345 = vld [vmem:[#allocation6 + $0x408] sm:$0xff]
    %v346 = vld [vmem:[#allocation6 + $0x410] sm:$0xff]
    %v347 = vld [vmem:[#allocation6 + $0x418] sm:$0xff]
    %v348 = vld [vmem:[#allocation6 + $0x420] sm:$0xff]
    %v349 = vld [vmem:[#allocation6 + $0x428] sm:$0xff]
    %v350 = vld [vmem:[#allocation6 + $0x430] sm:$0xff]
    %v351 = vld [vmem:[#allocation6 + $0x438] sm:$0xff]
    %v352 = vld [vmem:[#allocation6 + $0x440] sm:$0xff]
    %v353 = vld [vmem:[#allocation6 + $0x448] sm:$0xff]
    %v354 = vld [vmem:[#allocation6 + $0x450] sm:$0xff]
    %v355 = vld [vmem:[#allocation6 + $0x458] sm:$0xff]
    %v356 = vld [vmem:[#allocation6 + $0x460] sm:$0xff]
    %v357 = vld [vmem:[#allocation6 + $0x468] sm:$0xff]
    %v358 = vld [vmem:[#allocation6 + $0x470] sm:$0xff]
    %v359 = vld [vmem:[#allocation6 + $0x478] sm:$0xff]
    %v360 = vld [vmem:[#allocation6 + $0x480] sm:$0xff]
    %v361 = vld [vmem:[#allocation6 + $0x488] sm:$0xff]
    %v362 = vld [vmem:[#allocation6 + $0x490] sm:$0xff]
    %v363 = vld [vmem:[#allocation6 + $0x498] sm:$0xff]
    %v364 = vld [vmem:[#allocation6 + $0x4a0] sm:$0xff]
    %v365 = vld [vmem:[#allocation6 + $0x4a8] sm:$0xff]
    %v366 = vld [vmem:[#allocation6 + $0x4b0] sm:$0xff]
    %v367 = vld [vmem:[#allocation6 + $0x4b8] sm:$0xff]
    %v368 = vld [vmem:[#allocation6 + $0x4c0] sm:$0xff]
    %v369 = vld [vmem:[#allocation6 + $0x4c8] sm:$0xff]
    %v370 = vld [vmem:[#allocation6 + $0x4d0] sm:$0xff]
    %v371 = vld [vmem:[#allocation6 + $0x4d8] sm:$0xff]
    %v372 = vld [vmem:[#allocation6 + $0x4e0] sm:$0xff]
    %v373 = vld [vmem:[#allocation6 + $0x4e8] sm:$0xff]
    %v374 = vld [vmem:[#allocation6 + $0x4f0] sm:$0xff]
    %v375 = vld [vmem:[#allocation6 + $0x4f8] sm:$0xff]
    %v376 = vld [vmem:[#allocation6 + $0x500] sm:$0xff]
    %v377 = vld [vmem:[#allocation6 + $0x508] sm:$0xff]
    %v378 = vld [vmem:[#allocation6 + $0x510] sm:$0xff]
    %v379 = vld [vmem:[#allocation6 + $0x518] sm:$0xff]
    %v380 = vld [vmem:[#allocation6 + $0x520] sm:$0xff]
    %v381 = vld [vmem:[#allocation6 + $0x528] sm:$0xff]
    %v382 = vld [vmem:[#allocation6 + $0x530] sm:$0xff]
    %v383 = vld [vmem:[#allocation6 + $0x538] sm:$0xff]
    %v384 = vld [vmem:[#allocation6 + $0x540] sm:$0xff]
    %v385 = vld [vmem:[#allocation6 + $0x548] sm:$0xff]
    %v386 = vld [vmem:[#allocation6 + $0x550] sm:$0xff]
    %v387 = vld [vmem:[#allocation6 + $0x558] sm:$0xff]
    %v388 = vld [vmem:[#allocation6 + $0x560] sm:$0xff]
    %v389 = vld [vmem:[#allocation6 + $0x568] sm:$0xff]
    %v390 = vld [vmem:[#allocation6 + $0x570] sm:$0xff]
    %v391 = vld [vmem:[#allocation6 + $0x578] sm:$0xff]
    %v392 = vld [vmem:[#allocation6 + $0x580] sm:$0xff]
    %v393 = vld [vmem:[#allocation6 + $0x588] sm:$0xff]
    %v394 = vld [vmem:[#allocation6 + $0x590] sm:$0xff]
    %v395 = vld [vmem:[#allocation6 + $0x598] sm:$0xff]
    %v396 = vld [vmem:[#allocation6 + $0x5a0] sm:$0xff]
    %v397 = vld [vmem:[#allocation6 + $0x5a8] sm:$0xff]
    %v398 = vld [vmem:[#allocation6 + $0x5b0] sm:$0xff]
    %v399 = vld [vmem:[#allocation6 + $0x5b8] sm:$0xff]
    %v400 = vld [vmem:[#allocation6 + $0x5c0] sm:$0xff]
    %v401 = vld [vmem:[#allocation6 + $0x5c8] sm:$0xff]
    %v402 = vld [vmem:[#allocation6 + $0x5d0] sm:$0xff]
    %v403 = vld [vmem:[#allocation6 + $0x5d8] sm:$0xff]
    %v404 = vld [vmem:[#allocation6 + $0x5e0] sm:$0xff]
    %v405 = vld [vmem:[#allocation6 + $0x5e8] sm:$0xff]
    %v406 = vld [vmem:[#allocation6 + $0x5f0] sm:$0xff]
    %v407 = vld [vmem:[#allocation6 + $0x5f8] sm:$0xff]
    %v408 = vld [vmem:[#allocation6 + $0x600] sm:$0xff]
    %v409 = vld [vmem:[#allocation6 + $0x608] sm:$0xff]
    %v410 = vld [vmem:[#allocation6 + $0x610] sm:$0xff]
    %v411 = vld [vmem:[#allocation6 + $0x618] sm:$0xff]
    %v412 = vld [vmem:[#allocation6 + $0x620] sm:$0xff]
    %v413 = vld [vmem:[#allocation6 + $0x628] sm:$0xff]
    %v414 = vld [vmem:[#allocation6 + $0x630] sm:$0xff]
    %v415 = vld [vmem:[#allocation6 + $0x638] sm:$0xff]
    %v416 = vld [vmem:[#allocation6 + $0x640] sm:$0xff]
    %v417 = vld [vmem:[#allocation6 + $0x648] sm:$0xff]
    %v418 = vld [vmem:[#allocation6 + $0x650] sm:$0xff]
    %v419 = vld [vmem:[#allocation6 + $0x658] sm:$0xff]
    %v420 = vld [vmem:[#allocation6 + $0x660] sm:$0xff]
    %v421 = vld [vmem:[#allocation6 + $0x668] sm:$0xff]
    %v422 = vld [vmem:[#allocation6 + $0x670] sm:$0xff]
    %v423 = vld [vmem:[#allocation6 + $0x678] sm:$0xff]
    %v424 = vld [vmem:[#allocation6 + $0x680] sm:$0xff]
    %v425 = vld [vmem:[#allocation6 + $0x688] sm:$0xff]
    %v426 = vld [vmem:[#allocation6 + $0x690] sm:$0xff]
    %v427 = vld [vmem:[#allocation6 + $0x698] sm:$0xff]
    %v428 = vld [vmem:[#allocation6 + $0x6a0] sm:$0xff]
    %v429 = vld [vmem:[#allocation6 + $0x6a8] sm:$0xff]
    %v430 = vld [vmem:[#allocation6 + $0x6b0] sm:$0xff]
    %v431 = vld [vmem:[#allocation6 + $0x6b8] sm:$0xff]
    %v432 = vld [vmem:[#allocation6 + $0x6c0] sm:$0xff]
    %v433 = vld [vmem:[#allocation6 + $0x6c8] sm:$0xff]
    %v434 = vld [vmem:[#allocation6 + $0x6d0] sm:$0xff]
    %v435 = vld [vmem:[#allocation6 + $0x6d8] sm:$0xff]
    %v436 = vld [vmem:[#allocation6 + $0x6e0] sm:$0xff]
    %v437 = vld [vmem:[#allocation6 + $0x6e8] sm:$0xff]
    %v438 = vld [vmem:[#allocation6 + $0x6f0] sm:$0xff]
    %v439 = vld [vmem:[#allocation6 + $0x6f8] sm:$0xff]
    %v440 = vld [vmem:[#allocation6 + $0x700] sm:$0xff]
    %v441 = vld [vmem:[#allocation6 + $0x708] sm:$0xff]
    %v442 = vld [vmem:[#allocation6 + $0x710] sm:$0xff]
    %v443 = vld [vmem:[#allocation6 + $0x718] sm:$0xff]
    %v444 = vld [vmem:[#allocation6 + $0x720] sm:$0xff]
    %v445 = vld [vmem:[#allocation6 + $0x728] sm:$0xff]
    %v446 = vld [vmem:[#allocation6 + $0x730] sm:$0xff]
    %v447 = vld [vmem:[#allocation6 + $0x738] sm:$0xff]
    %v448 = vld [vmem:[#allocation6 + $0x740] sm:$0xff]
    %v449 = vld [vmem:[#allocation6 + $0x748] sm:$0xff]
    %v450 = vld [vmem:[#allocation6 + $0x750] sm:$0xff]
    %v451 = vld [vmem:[#allocation6 + $0x758] sm:$0xff]
    %v452 = vld [vmem:[#allocation6 + $0x760] sm:$0xff]
    %v453 = vld [vmem:[#allocation6 + $0x768] sm:$0xff]
    %v454 = vld [vmem:[#allocation6 + $0x770] sm:$0xff]
    %v455 = vld [vmem:[#allocation6 + $0x778] sm:$0xff]
    %v456 = vld [vmem:[#allocation6 + $0x780] sm:$0xff]
    %v457 = vld [vmem:[#allocation6 + $0x788] sm:$0xff]
    %v458 = vld [vmem:[#allocation6 + $0x790] sm:$0xff]
    %v459 = vld [vmem:[#allocation6 + $0x798] sm:$0xff]
    %v460 = vld [vmem:[#allocation6 + $0x7a0] sm:$0xff]
    %v461 = vld [vmem:[#allocation6 + $0x7a8] sm:$0xff]
    %v462 = vld [vmem:[#allocation6 + $0x7b0] sm:$0xff]
    %v463 = vld [vmem:[#allocation6 + $0x7b8] sm:$0xff]
    %v464 = vld [vmem:[#allocation6 + $0x7c0] sm:$0xff]
    %v465 = vld [vmem:[#allocation6 + $0x7c8] sm:$0xff]
    %v466 = vld [vmem:[#allocation6 + $0x7d0] sm:$0xff]
    %v467 = vld [vmem:[#allocation6 + $0x7d8] sm:$0xff]
    %v468 = vld [vmem:[#allocation6 + $0x7e0] sm:$0xff]
    %v469 = vld [vmem:[#allocation6 + $0x7e8] sm:$0xff]
    %v470 = vld [vmem:[#allocation6 + $0x7f0] sm:$0xff]
    %v471 = vld [vmem:[#allocation6 + $0x7f8] sm:$0xff]
    %v728 = vunpack.c.l.b16 %v216
    %v729 = vunpack.c.h.b16 %v216
    %v730 = vunpack.c.l.b16 %v217
    %v731 = vunpack.c.h.b16 %v217
    %v732 = vunpack.c.l.b16 %v218
    %v733 = vunpack.c.h.b16 %v218
    %v734 = vunpack.c.l.b16 %v219
    %v735 = vunpack.c.h.b16 %v219
    %v736 = vunpack.c.l.b16 %v220
    %v737 = vunpack.c.h.b16 %v220
    %v738 = vunpack.c.l.b16 %v221
    %v739 = vunpack.c.h.b16 %v221
    %v740 = vunpack.c.l.b16 %v222
    %v741 = vunpack.c.h.b16 %v222
    %v742 = vunpack.c.l.b16 %v223
    %v743 = vunpack.c.h.b16 %v223
    %v744 = vunpack.c.l.b16 %v224
    %v745 = vunpack.c.h.b16 %v224
    %v746 = vunpack.c.l.b16 %v225
    %v747 = vunpack.c.h.b16 %v225
    %v748 = vunpack.c.l.b16 %v226
    %v749 = vunpack.c.h.b16 %v226
    %v750 = vunpack.c.l.b16 %v227
    %v751 = vunpack.c.h.b16 %v227
    %v752 = vunpack.c.l.b16 %v228
    %v753 = vunpack.c.h.b16 %v228
    %v754 = vunpack.c.l.b16 %v229
    %v755 = vunpack.c.h.b16 %v229
    %v756 = vunpack.c.l.b16 %v230
    %v757 = vunpack.c.h.b16 %v230
    %v758 = vunpack.c.l.b16 %v231
    %v759 = vunpack.c.h.b16 %v231
    %v760 = vunpack.c.l.b16 %v232
    %v761 = vunpack.c.h.b16 %v232
    %v762 = vunpack.c.l.b16 %v233
    %v763 = vunpack.c.h.b16 %v233
    %v764 = vunpack.c.l.b16 %v234
    %v765 = vunpack.c.h.b16 %v234
    %v766 = vunpack.c.l.b16 %v235
    %v767 = vunpack.c.h.b16 %v235
    %v768 = vunpack.c.l.b16 %v236
    %v769 = vunpack.c.h.b16 %v236
    %v770 = vunpack.c.l.b16 %v237
    %v771 = vunpack.c.h.b16 %v237
    %v772 = vunpack.c.l.b16 %v238
    %v773 = vunpack.c.h.b16 %v238
    %v774 = vunpack.c.l.b16 %v239
    %v775 = vunpack.c.h.b16 %v239
    %v776 = vunpack.c.l.b16 %v240
    %v777 = vunpack.c.h.b16 %v240
    %v778 = vunpack.c.l.b16 %v241
    %v779 = vunpack.c.h.b16 %v241
    %v780 = vunpack.c.l.b16 %v242
    %v781 = vunpack.c.h.b16 %v242
    %v782 = vunpack.c.l.b16 %v243
    %v783 = vunpack.c.h.b16 %v243
    %v784 = vunpack.c.l.b16 %v244
    %v785 = vunpack.c.h.b16 %v244
    %v786 = vunpack.c.l.b16 %v245
    %v787 = vunpack.c.h.b16 %v245
    %v788 = vunpack.c.l.b16 %v246
    %v789 = vunpack.c.h.b16 %v246
    %v790 = vunpack.c.l.b16 %v247
    %v791 = vunpack.c.h.b16 %v247
    %v792 = vunpack.c.l.b16 %v248
    %v793 = vunpack.c.h.b16 %v248
    %v794 = vunpack.c.l.b16 %v249
    %v795 = vunpack.c.h.b16 %v249
    %v796 = vunpack.c.l.b16 %v250
    %v797 = vunpack.c.h.b16 %v250
    %v798 = vunpack.c.l.b16 %v251
    %v799 = vunpack.c.h.b16 %v251
    %v800 = vunpack.c.l.b16 %v252
    %v801 = vunpack.c.h.b16 %v252
    %v802 = vunpack.c.l.b16 %v253
    %v803 = vunpack.c.h.b16 %v253
    %v804 = vunpack.c.l.b16 %v254
    %v805 = vunpack.c.h.b16 %v254
    %v806 = vunpack.c.l.b16 %v255
    %v807 = vunpack.c.h.b16 %v255
    %v808 = vunpack.c.l.b16 %v256
    %v809 = vunpack.c.h.b16 %v256
    %v810 = vunpack.c.l.b16 %v257
    %v811 = vunpack.c.h.b16 %v257
    %v812 = vunpack.c.l.b16 %v258
    %v813 = vunpack.c.h.b16 %v258
    %v814 = vunpack.c.l.b16 %v259
    %v815 = vunpack.c.h.b16 %v259
    %v816 = vunpack.c.l.b16 %v260
    %v817 = vunpack.c.h.b16 %v260
    %v818 = vunpack.c.l.b16 %v261
    %v819 = vunpack.c.h.b16 %v261
    %v820 = vunpack.c.l.b16 %v262
    %v821 = vunpack.c.h.b16 %v262
    %v822 = vunpack.c.l.b16 %v263
    %v823 = vunpack.c.h.b16 %v263
    %v824 = vunpack.c.l.b16 %v264
    %v825 = vunpack.c.h.b16 %v264
    %v826 = vunpack.c.l.b16 %v265
    %v827 = vunpack.c.h.b16 %v265
    %v828 = vunpack.c.l.b16 %v266
    %v829 = vunpack.c.h.b16 %v266
    %v830 = vunpack.c.l.b16 %v267
    %v831 = vunpack.c.h.b16 %v267
    %v832 = vunpack.c.l.b16 %v268
    %v833 = vunpack.c.h.b16 %v268
    %v834 = vunpack.c.l.b16 %v269
    %v835 = vunpack.c.h.b16 %v269
    %v836 = vunpack.c.l.b16 %v270
    %v837 = vunpack.c.h.b16 %v270
    %v838 = vunpack.c.l.b16 %v271
    %v839 = vunpack.c.h.b16 %v271
    %v840 = vunpack.c.l.b16 %v272
    %v841 = vunpack.c.h.b16 %v272
    %v842 = vunpack.c.l.b16 %v273
    %v843 = vunpack.c.h.b16 %v273
    %v844 = vunpack.c.l.b16 %v274
    %v845 = vunpack.c.h.b16 %v274
    %v846 = vunpack.c.l.b16 %v275
    %v847 = vunpack.c.h.b16 %v275
    %v848 = vunpack.c.l.b16 %v276
    %v849 = vunpack.c.h.b16 %v276
    %v850 = vunpack.c.l.b16 %v277
    %v851 = vunpack.c.h.b16 %v277
    %v852 = vunpack.c.l.b16 %v278
    %v853 = vunpack.c.h.b16 %v278
    %v854 = vunpack.c.l.b16 %v279
    %v855 = vunpack.c.h.b16 %v279
    %v856 = vunpack.c.l.b16 %v280
    %v857 = vunpack.c.h.b16 %v280
    %v858 = vunpack.c.l.b16 %v281
    %v859 = vunpack.c.h.b16 %v281
    %v860 = vunpack.c.l.b16 %v282
    %v861 = vunpack.c.h.b16 %v282
    %v862 = vunpack.c.l.b16 %v283
    %v863 = vunpack.c.h.b16 %v283
    %v864 = vunpack.c.l.b16 %v284
    %v865 = vunpack.c.h.b16 %v284
    %v866 = vunpack.c.l.b16 %v285
    %v867 = vunpack.c.h.b16 %v285
    %v868 = vunpack.c.l.b16 %v286
    %v869 = vunpack.c.h.b16 %v286
    %v870 = vunpack.c.l.b16 %v287
    %v871 = vunpack.c.h.b16 %v287
    %v872 = vunpack.c.l.b16 %v288
    %v873 = vunpack.c.h.b16 %v288
    %v874 = vunpack.c.l.b16 %v289
    %v875 = vunpack.c.h.b16 %v289
    %v876 = vunpack.c.l.b16 %v290
    %v877 = vunpack.c.h.b16 %v290
    %v878 = vunpack.c.l.b16 %v291
    %v879 = vunpack.c.h.b16 %v291
    %v880 = vunpack.c.l.b16 %v292
    %v881 = vunpack.c.h.b16 %v292
    %v882 = vunpack.c.l.b16 %v293
    %v883 = vunpack.c.h.b16 %v293
    %v884 = vunpack.c.l.b16 %v294
    %v885 = vunpack.c.h.b16 %v294
    %v886 = vunpack.c.l.b16 %v295
    %v887 = vunpack.c.h.b16 %v295
    %v888 = vunpack.c.l.b16 %v296
    %v889 = vunpack.c.h.b16 %v296
    %v890 = vunpack.c.l.b16 %v297
    %v891 = vunpack.c.h.b16 %v297
    %v892 = vunpack.c.l.b16 %v298
    %v893 = vunpack.c.h.b16 %v298
    %v894 = vunpack.c.l.b16 %v299
    %v895 = vunpack.c.h.b16 %v299
    %v896 = vunpack.c.l.b16 %v300
    %v897 = vunpack.c.h.b16 %v300
    %v898 = vunpack.c.l.b16 %v301
    %v899 = vunpack.c.h.b16 %v301
    %v900 = vunpack.c.l.b16 %v302
    %v901 = vunpack.c.h.b16 %v302
    %v902 = vunpack.c.l.b16 %v303
    %v903 = vunpack.c.h.b16 %v303
    %v904 = vunpack.c.l.b16 %v304
    %v905 = vunpack.c.h.b16 %v304
    %v906 = vunpack.c.l.b16 %v305
    %v907 = vunpack.c.h.b16 %v305
    %v908 = vunpack.c.l.b16 %v306
    %v909 = vunpack.c.h.b16 %v306
    %v910 = vunpack.c.l.b16 %v307
    %v911 = vunpack.c.h.b16 %v307
    %v912 = vunpack.c.l.b16 %v308
    %v913 = vunpack.c.h.b16 %v308
    %v914 = vunpack.c.l.b16 %v309
    %v915 = vunpack.c.h.b16 %v309
    %v916 = vunpack.c.l.b16 %v310
    %v917 = vunpack.c.h.b16 %v310
    %v918 = vunpack.c.l.b16 %v311
    %v919 = vunpack.c.h.b16 %v311
    %v920 = vunpack.c.l.b16 %v312
    %v921 = vunpack.c.h.b16 %v312
    %v922 = vunpack.c.l.b16 %v313
    %v923 = vunpack.c.h.b16 %v313
    %v924 = vunpack.c.l.b16 %v314
    %v925 = vunpack.c.h.b16 %v314
    %v926 = vunpack.c.l.b16 %v315
    %v927 = vunpack.c.h.b16 %v315
    %v928 = vunpack.c.l.b16 %v316
    %v929 = vunpack.c.h.b16 %v316
    %v930 = vunpack.c.l.b16 %v317
    %v931 = vunpack.c.h.b16 %v317
    %v932 = vunpack.c.l.b16 %v318
    %v933 = vunpack.c.h.b16 %v318
    %v934 = vunpack.c.l.b16 %v319
    %v935 = vunpack.c.h.b16 %v319
    %v936 = vunpack.c.l.b16 %v320
    %v937 = vunpack.c.h.b16 %v320
    %v938 = vunpack.c.l.b16 %v321
    %v939 = vunpack.c.h.b16 %v321
    %v940 = vunpack.c.l.b16 %v322
    %v941 = vunpack.c.h.b16 %v322
    %v942 = vunpack.c.l.b16 %v323
    %v943 = vunpack.c.h.b16 %v323
    %v944 = vunpack.c.l.b16 %v324
    %v945 = vunpack.c.h.b16 %v324
    %v946 = vunpack.c.l.b16 %v325
    %v947 = vunpack.c.h.b16 %v325
    %v948 = vunpack.c.l.b16 %v326
    %v949 = vunpack.c.h.b16 %v326
    %v950 = vunpack.c.l.b16 %v327
    %v951 = vunpack.c.h.b16 %v327
    %v952 = vunpack.c.l.b16 %v328
    %v953 = vunpack.c.h.b16 %v328
    %v954 = vunpack.c.l.b16 %v329
    %v955 = vunpack.c.h.b16 %v329
    %v956 = vunpack.c.l.b16 %v330
    %v957 = vunpack.c.h.b16 %v330
    %v958 = vunpack.c.l.b16 %v331
    %v959 = vunpack.c.h.b16 %v331
    %v960 = vunpack.c.l.b16 %v332
    %v961 = vunpack.c.h.b16 %v332
    %v962 = vunpack.c.l.b16 %v333
    %v963 = vunpack.c.h.b16 %v333
    %v964 = vunpack.c.l.b16 %v334
    %v965 = vunpack.c.h.b16 %v334
    %v966 = vunpack.c.l.b16 %v335
    %v967 = vunpack.c.h.b16 %v335
    %v968 = vunpack.c.l.b16 %v336
    %v969 = vunpack.c.h.b16 %v336
    %v970 = vunpack.c.l.b16 %v337
    %v971 = vunpack.c.h.b16 %v337
    %v972 = vunpack.c.l.b16 %v338
    %v973 = vunpack.c.h.b16 %v338
    %v974 = vunpack.c.l.b16 %v339
    %v975 = vunpack.c.h.b16 %v339
    %v976 = vunpack.c.l.b16 %v340
    %v977 = vunpack.c.h.b16 %v340
    %v978 = vunpack.c.l.b16 %v341
    %v979 = vunpack.c.h.b16 %v341
    %v980 = vunpack.c.l.b16 %v342
    %v981 = vunpack.c.h.b16 %v342
    %v982 = vunpack.c.l.b16 %v343
    %v983 = vunpack.c.h.b16 %v343
    %v984 = vunpack.c.l.b16 %v344
    %v985 = vunpack.c.h.b16 %v344
    %v986 = vunpack.c.l.b16 %v345
    %v987 = vunpack.c.h.b16 %v345
    %v988 = vunpack.c.l.b16 %v346
    %v989 = vunpack.c.h.b16 %v346
    %v990 = vunpack.c.l.b16 %v347
    %v991 = vunpack.c.h.b16 %v347
    %v992 = vunpack.c.l.b16 %v348
    %v993 = vunpack.c.h.b16 %v348
    %v994 = vunpack.c.l.b16 %v349
    %v995 = vunpack.c.h.b16 %v349
    %v996 = vunpack.c.l.b16 %v350
    %v997 = vunpack.c.h.b16 %v350
    %v998 = vunpack.c.l.b16 %v351
    %v999 = vunpack.c.h.b16 %v351
    %v1000 = vunpack.c.l.b16 %v352
    %v1001 = vunpack.c.h.b16 %v352
    %v1002 = vunpack.c.l.b16 %v353
    %v1003 = vunpack.c.h.b16 %v353
    %v1004 = vunpack.c.l.b16 %v354
    %v1005 = vunpack.c.h.b16 %v354
    %v1006 = vunpack.c.l.b16 %v355
    %v1007 = vunpack.c.h.b16 %v355
    %v1008 = vunpack.c.l.b16 %v356
    %v1009 = vunpack.c.h.b16 %v356
    %v1010 = vunpack.c.l.b16 %v357
    %v1011 = vunpack.c.h.b16 %v357
    %v1012 = vunpack.c.l.b16 %v358
    %v1013 = vunpack.c.h.b16 %v358
    %v1014 = vunpack.c.l.b16 %v359
    %v1015 = vunpack.c.h.b16 %v359
    %v1016 = vunpack.c.l.b16 %v360
    %v1017 = vunpack.c.h.b16 %v360
    %v1018 = vunpack.c.l.b16 %v361
    %v1019 = vunpack.c.h.b16 %v361
    %v1020 = vunpack.c.l.b16 %v362
    %v1021 = vunpack.c.h.b16 %v362
    %v1022 = vunpack.c.l.b16 %v363
    %v1023 = vunpack.c.h.b16 %v363
    %v1024 = vunpack.c.l.b16 %v364
    %v1025 = vunpack.c.h.b16 %v364
    %v1026 = vunpack.c.l.b16 %v365
    %v1027 = vunpack.c.h.b16 %v365
    %v1028 = vunpack.c.l.b16 %v366
    %v1029 = vunpack.c.h.b16 %v366
    %v1030 = vunpack.c.l.b16 %v367
    %v1031 = vunpack.c.h.b16 %v367
    %v1032 = vunpack.c.l.b16 %v368
    %v1033 = vunpack.c.h.b16 %v368
    %v1034 = vunpack.c.l.b16 %v369
    %v1035 = vunpack.c.h.b16 %v369
    %v1036 = vunpack.c.l.b16 %v370
    %v1037 = vunpack.c.h.b16 %v370
    %v1038 = vunpack.c.l.b16 %v371
    %v1039 = vunpack.c.h.b16 %v371
    %v1040 = vunpack.c.l.b16 %v372
    %v1041 = vunpack.c.h.b16 %v372
    %v1042 = vunpack.c.l.b16 %v373
    %v1043 = vunpack.c.h.b16 %v373
    %v1044 = vunpack.c.l.b16 %v374
    %v1045 = vunpack.c.h.b16 %v374
    %v1046 = vunpack.c.l.b16 %v375
    %v1047 = vunpack.c.h.b16 %v375
    %v1048 = vunpack.c.l.b16 %v376
    %v1049 = vunpack.c.h.b16 %v376
    %v1050 = vunpack.c.l.b16 %v377
    %v1051 = vunpack.c.h.b16 %v377
    %v1052 = vunpack.c.l.b16 %v378
    %v1053 = vunpack.c.h.b16 %v378
    %v1054 = vunpack.c.l.b16 %v379
    %v1055 = vunpack.c.h.b16 %v379
    %v1056 = vunpack.c.l.b16 %v380
    %v1057 = vunpack.c.h.b16 %v380
    %v1058 = vunpack.c.l.b16 %v381
    %v1059 = vunpack.c.h.b16 %v381
    %v1060 = vunpack.c.l.b16 %v382
    %v1061 = vunpack.c.h.b16 %v382
    %v1062 = vunpack.c.l.b16 %v383
    %v1063 = vunpack.c.h.b16 %v383
    %v1064 = vunpack.c.l.b16 %v384
    %v1065 = vunpack.c.h.b16 %v384
    %v1066 = vunpack.c.l.b16 %v385
    %v1067 = vunpack.c.h.b16 %v385
    %v1068 = vunpack.c.l.b16 %v386
    %v1069 = vunpack.c.h.b16 %v386
    %v1070 = vunpack.c.l.b16 %v387
    %v1071 = vunpack.c.h.b16 %v387
    %v1072 = vunpack.c.l.b16 %v388
    %v1073 = vunpack.c.h.b16 %v388
    %v1074 = vunpack.c.l.b16 %v389
    %v1075 = vunpack.c.h.b16 %v389
    %v1076 = vunpack.c.l.b16 %v390
    %v1077 = vunpack.c.h.b16 %v390
    %v1078 = vunpack.c.l.b16 %v391
    %v1079 = vunpack.c.h.b16 %v391
    %v1080 = vunpack.c.l.b16 %v392
    %v1081 = vunpack.c.h.b16 %v392
    %v1082 = vunpack.c.l.b16 %v393
    %v1083 = vunpack.c.h.b16 %v393
    %v1084 = vunpack.c.l.b16 %v394
    %v1085 = vunpack.c.h.b16 %v394
    %v1086 = vunpack.c.l.b16 %v395
    %v1087 = vunpack.c.h.b16 %v395
    %v1088 = vunpack.c.l.b16 %v396
    %v1089 = vunpack.c.h.b16 %v396
    %v1090 = vunpack.c.l.b16 %v397
    %v1091 = vunpack.c.h.b16 %v397
    %v1092 = vunpack.c.l.b16 %v398
    %v1093 = vunpack.c.h.b16 %v398
    %v1094 = vunpack.c.l.b16 %v399
    %v1095 = vunpack.c.h.b16 %v399
    %v1096 = vunpack.c.l.b16 %v400
    %v1097 = vunpack.c.h.b16 %v400
    %v1098 = vunpack.c.l.b16 %v401
    %v1099 = vunpack.c.h.b16 %v401
    %v1100 = vunpack.c.l.b16 %v402
    %v1101 = vunpack.c.h.b16 %v402
    %v1102 = vunpack.c.l.b16 %v403
    %v1103 = vunpack.c.h.b16 %v403
    %v1104 = vunpack.c.l.b16 %v404
    %v1105 = vunpack.c.h.b16 %v404
    %v1106 = vunpack.c.l.b16 %v405
    %v1107 = vunpack.c.h.b16 %v405
    %v1108 = vunpack.c.l.b16 %v406
    %v1109 = vunpack.c.h.b16 %v406
    %v1110 = vunpack.c.l.b16 %v407
    %v1111 = vunpack.c.h.b16 %v407
    %v1112 = vunpack.c.l.b16 %v408
    %v1113 = vunpack.c.h.b16 %v408
    %v1114 = vunpack.c.l.b16 %v409
    %v1115 = vunpack.c.h.b16 %v409
    %v1116 = vunpack.c.l.b16 %v410
    %v1117 = vunpack.c.h.b16 %v410
    %v1118 = vunpack.c.l.b16 %v411
    %v1119 = vunpack.c.h.b16 %v411
    %v1120 = vunpack.c.l.b16 %v412
    %v1121 = vunpack.c.h.b16 %v412
    %v1122 = vunpack.c.l.b16 %v413
    %v1123 = vunpack.c.h.b16 %v413
    %v1124 = vunpack.c.l.b16 %v414
    %v1125 = vunpack.c.h.b16 %v414
    %v1126 = vunpack.c.l.b16 %v415
    %v1127 = vunpack.c.h.b16 %v415
    %v1128 = vunpack.c.l.b16 %v416
    %v1129 = vunpack.c.h.b16 %v416
    %v1130 = vunpack.c.l.b16 %v417
    %v1131 = vunpack.c.h.b16 %v417
    %v1132 = vunpack.c.l.b16 %v418
    %v1133 = vunpack.c.h.b16 %v418
    %v1134 = vunpack.c.l.b16 %v419
    %v1135 = vunpack.c.h.b16 %v419
    %v1136 = vunpack.c.l.b16 %v420
    %v1137 = vunpack.c.h.b16 %v420
    %v1138 = vunpack.c.l.b16 %v421
    %v1139 = vunpack.c.h.b16 %v421
    %v1140 = vunpack.c.l.b16 %v422
    %v1141 = vunpack.c.h.b16 %v422
    %v1142 = vunpack.c.l.b16 %v423
    %v1143 = vunpack.c.h.b16 %v423
    %v1144 = vunpack.c.l.b16 %v424
    %v1145 = vunpack.c.h.b16 %v424
    %v1146 = vunpack.c.l.b16 %v425
    %v1147 = vunpack.c.h.b16 %v425
    %v1148 = vunpack.c.l.b16 %v426
    %v1149 = vunpack.c.h.b16 %v426
    %v1150 = vunpack.c.l.b16 %v427
    %v1151 = vunpack.c.h.b16 %v427
    %v1152 = vunpack.c.l.b16 %v428
    %v1153 = vunpack.c.h.b16 %v428
    %v1154 = vunpack.c.l.b16 %v429
    %v1155 = vunpack.c.h.b16 %v429
    %v1156 = vunpack.c.l.b16 %v430
    %v1157 = vunpack.c.h.b16 %v430
    %v1158 = vunpack.c.l.b16 %v431
    %v1159 = vunpack.c.h.b16 %v431
    %v1160 = vunpack.c.l.b16 %v432
    %v1161 = vunpack.c.h.b16 %v432
    %v1162 = vunpack.c.l.b16 %v433
    %v1163 = vunpack.c.h.b16 %v433
    %v1164 = vunpack.c.l.b16 %v434
    %v1165 = vunpack.c.h.b16 %v434
    %v1166 = vunpack.c.l.b16 %v435
    %v1167 = vunpack.c.h.b16 %v435
    %v1168 = vunpack.c.l.b16 %v436
    %v1169 = vunpack.c.h.b16 %v436
    %v1170 = vunpack.c.l.b16 %v437
    %v1171 = vunpack.c.h.b16 %v437
    %v1172 = vunpack.c.l.b16 %v438
    %v1173 = vunpack.c.h.b16 %v438
    %v1174 = vunpack.c.l.b16 %v439
    %v1175 = vunpack.c.h.b16 %v439
    %v1176 = vunpack.c.l.b16 %v440
    %v1177 = vunpack.c.h.b16 %v440
    %v1178 = vunpack.c.l.b16 %v441
    %v1179 = vunpack.c.h.b16 %v441
    %v1180 = vunpack.c.l.b16 %v442
    %v1181 = vunpack.c.h.b16 %v442
    %v1182 = vunpack.c.l.b16 %v443
    %v1183 = vunpack.c.h.b16 %v443
    %v1184 = vunpack.c.l.b16 %v444
    %v1185 = vunpack.c.h.b16 %v444
    %v1186 = vunpack.c.l.b16 %v445
    %v1187 = vunpack.c.h.b16 %v445
    %v1188 = vunpack.c.l.b16 %v446
    %v1189 = vunpack.c.h.b16 %v446
    %v1190 = vunpack.c.l.b16 %v447
    %v1191 = vunpack.c.h.b16 %v447
    %v1192 = vunpack.c.l.b16 %v448
    %v1193 = vunpack.c.h.b16 %v448
    %v1194 = vunpack.c.l.b16 %v449
    %v1195 = vunpack.c.h.b16 %v449
    %v1196 = vunpack.c.l.b16 %v450
    %v1197 = vunpack.c.h.b16 %v450
    %v1198 = vunpack.c.l.b16 %v451
    %v1199 = vunpack.c.h.b16 %v451
    %v1200 = vunpack.c.l.b16 %v452
    %v1201 = vunpack.c.h.b16 %v452
    %v1202 = vunpack.c.l.b16 %v453
    %v1203 = vunpack.c.h.b16 %v453
    %v1204 = vunpack.c.l.b16 %v454
    %v1205 = vunpack.c.h.b16 %v454
    %v1206 = vunpack.c.l.b16 %v455
    %v1207 = vunpack.c.h.b16 %v455
    %v1208 = vunpack.c.l.b16 %v456
    %v1209 = vunpack.c.h.b16 %v456
    %v1210 = vunpack.c.l.b16 %v457
    %v1211 = vunpack.c.h.b16 %v457
    %v1212 = vunpack.c.l.b16 %v458
    %v1213 = vunpack.c.h.b16 %v458
    %v1214 = vunpack.c.l.b16 %v459
    %v1215 = vunpack.c.h.b16 %v459
    %v1216 = vunpack.c.l.b16 %v460
    %v1217 = vunpack.c.h.b16 %v460
    %v1218 = vunpack.c.l.b16 %v461
    %v1219 = vunpack.c.h.b16 %v461
    %v1220 = vunpack.c.l.b16 %v462
    %v1221 = vunpack.c.h.b16 %v462
    %v1222 = vunpack.c.l.b16 %v463
    %v1223 = vunpack.c.h.b16 %v463
    %v1224 = vunpack.c.l.b16 %v464
    %v1225 = vunpack.c.h.b16 %v464
    %v1226 = vunpack.c.l.b16 %v465
    %v1227 = vunpack.c.h.b16 %v465
    %v1228 = vunpack.c.l.b16 %v466
    %v1229 = vunpack.c.h.b16 %v466
    %v1230 = vunpack.c.l.b16 %v467
    %v1231 = vunpack.c.h.b16 %v467
    %v1232 = vunpack.c.l.b16 %v468
    %v1233 = vunpack.c.h.b16 %v468
    %v1234 = vunpack.c.l.b16 %v469
    %v1235 = vunpack.c.h.b16 %v469
    %v1236 = vunpack.c.l.b16 %v470
    %v1237 = vunpack.c.h.b16 %v470
    %v1238 = vunpack.c.l.b16 %v471
    %v1239 = vunpack.c.h.b16 %v471
    %v1240 = vpack.c.b16 %v792, %v728
    %v1241 = vpack.c.b16 %v793, %v729
    %v1242 = vpack.c.b16 %v794, %v730
    %v1243 = vpack.c.b16 %v795, %v731
    %v1244 = vpack.c.b16 %v796, %v732
    %v1245 = vpack.c.b16 %v797, %v733
    %v1246 = vpack.c.b16 %v798, %v734
    %v1247 = vpack.c.b16 %v799, %v735
    %v1248 = vpack.c.b16 %v800, %v736
    %v1249 = vpack.c.b16 %v801, %v737
    %v1250 = vpack.c.b16 %v802, %v738
    %v1251 = vpack.c.b16 %v803, %v739
    %v1252 = vpack.c.b16 %v804, %v740
    %v1253 = vpack.c.b16 %v805, %v741
    %v1254 = vpack.c.b16 %v806, %v742
    %v1255 = vpack.c.b16 %v807, %v743
    %v1256 = vpack.c.b16 %v808, %v744
    %v1257 = vpack.c.b16 %v809, %v745
    %v1258 = vpack.c.b16 %v810, %v746
    %v1259 = vpack.c.b16 %v811, %v747
    %v1260 = vpack.c.b16 %v812, %v748
    %v1261 = vpack.c.b16 %v813, %v749
    %v1262 = vpack.c.b16 %v814, %v750
    %v1263 = vpack.c.b16 %v815, %v751
    %v1264 = vpack.c.b16 %v816, %v752
    %v1265 = vpack.c.b16 %v817, %v753
    %v1266 = vpack.c.b16 %v818, %v754
    %v1267 = vpack.c.b16 %v819, %v755
    %v1268 = vpack.c.b16 %v820, %v756
    %v1269 = vpack.c.b16 %v821, %v757
    %v1270 = vpack.c.b16 %v822, %v758
    %v1271 = vpack.c.b16 %v823, %v759
    %v1272 = vpack.c.b16 %v824, %v760
    %v1273 = vpack.c.b16 %v825, %v761
    %v1274 = vpack.c.b16 %v826, %v762
    %v1275 = vpack.c.b16 %v827, %v763
    %v1276 = vpack.c.b16 %v828, %v764
    %v1277 = vpack.c.b16 %v829, %v765
    %v1278 = vpack.c.b16 %v830, %v766
    %v1279 = vpack.c.b16 %v831, %v767
    %v1280 = vpack.c.b16 %v832, %v768
    %v1281 = vpack.c.b16 %v833, %v769
    %v1282 = vpack.c.b16 %v834, %v770
    %v1283 = vpack.c.b16 %v835, %v771
    %v1284 = vpack.c.b16 %v836, %v772
    %v1285 = vpack.c.b16 %v837, %v773
    %v1286 = vpack.c.b16 %v838, %v774
    %v1287 = vpack.c.b16 %v839, %v775
    %v1288 = vpack.c.b16 %v840, %v776
    %v1289 = vpack.c.b16 %v841, %v777
    %v1290 = vpack.c.b16 %v842, %v778
    %v1291 = vpack.c.b16 %v843, %v779
    %v1292 = vpack.c.b16 %v844, %v780
    %v1293 = vpack.c.b16 %v845, %v781
    %v1294 = vpack.c.b16 %v846, %v782
    %v1295 = vpack.c.b16 %v847, %v783
    %v1296 = vpack.c.b16 %v848, %v784
    %v1297 = vpack.c.b16 %v849, %v785
    %v1298 = vpack.c.b16 %v850, %v786
    %v1299 = vpack.c.b16 %v851, %v787
    %v1300 = vpack.c.b16 %v852, %v788
    %v1301 = vpack.c.b16 %v853, %v789
    %v1302 = vpack.c.b16 %v854, %v790
    %v1303 = vpack.c.b16 %v855, %v791
    %v1304 = vpack.c.b16 %v920, %v856
    %v1305 = vpack.c.b16 %v921, %v857
    %v1306 = vpack.c.b16 %v922, %v858
    %v1307 = vpack.c.b16 %v923, %v859
    %v1308 = vpack.c.b16 %v924, %v860
    %v1309 = vpack.c.b16 %v925, %v861
    %v1310 = vpack.c.b16 %v926, %v862
    %v1311 = vpack.c.b16 %v927, %v863
    %v1312 = vpack.c.b16 %v928, %v864
    %v1313 = vpack.c.b16 %v929, %v865
    %v1314 = vpack.c.b16 %v930, %v866
    %v1315 = vpack.c.b16 %v931, %v867
    %v1316 = vpack.c.b16 %v932, %v868
    %v1317 = vpack.c.b16 %v933, %v869
    %v1318 = vpack.c.b16 %v934, %v870
    %v1319 = vpack.c.b16 %v935, %v871
    %v1320 = vpack.c.b16 %v936, %v872
    %v1321 = vpack.c.b16 %v937, %v873
    %v1322 = vpack.c.b16 %v938, %v874
    %v1323 = vpack.c.b16 %v939, %v875
    %v1324 = vpack.c.b16 %v940, %v876
    %v1325 = vpack.c.b16 %v941, %v877
    %v1326 = vpack.c.b16 %v942, %v878
    %v1327 = vpack.c.b16 %v943, %v879
    %v1328 = vpack.c.b16 %v944, %v880
    %v1329 = vpack.c.b16 %v945, %v881
    %v1330 = vpack.c.b16 %v946, %v882
    %v1331 = vpack.c.b16 %v947, %v883
    %v1332 = vpack.c.b16 %v948, %v884
    %v1333 = vpack.c.b16 %v949, %v885
    %v1334 = vpack.c.b16 %v950, %v886
    %v1335 = vpack.c.b16 %v951, %v887
    %v1336 = vpack.c.b16 %v952, %v888
    %v1337 = vpack.c.b16 %v953, %v889
    %v1338 = vpack.c.b16 %v954, %v890
    %v1339 = vpack.c.b16 %v955, %v891
    %v1340 = vpack.c.b16 %v956, %v892
    %v1341 = vpack.c.b16 %v957, %v893
    %v1342 = vpack.c.b16 %v958, %v894
    %v1343 = vpack.c.b16 %v959, %v895
    %v1344 = vpack.c.b16 %v960, %v896
    %v1345 = vpack.c.b16 %v961, %v897
    %v1346 = vpack.c.b16 %v962, %v898
    %v1347 = vpack.c.b16 %v963, %v899
    %v1348 = vpack.c.b16 %v964, %v900
    %v1349 = vpack.c.b16 %v965, %v901
    %v1350 = vpack.c.b16 %v966, %v902
    %v1351 = vpack.c.b16 %v967, %v903
    %v1352 = vpack.c.b16 %v968, %v904
    %v1353 = vpack.c.b16 %v969, %v905
    %v1354 = vpack.c.b16 %v970, %v906
    %v1355 = vpack.c.b16 %v971, %v907
    %v1356 = vpack.c.b16 %v972, %v908
    %v1357 = vpack.c.b16 %v973, %v909
    %v1358 = vpack.c.b16 %v974, %v910
    %v1359 = vpack.c.b16 %v975, %v911
    %v1360 = vpack.c.b16 %v976, %v912
    %v1361 = vpack.c.b16 %v977, %v913
    %v1362 = vpack.c.b16 %v978, %v914
    %v1363 = vpack.c.b16 %v979, %v915
    %v1364 = vpack.c.b16 %v980, %v916
    %v1365 = vpack.c.b16 %v981, %v917
    %v1366 = vpack.c.b16 %v982, %v918
    %v1367 = vpack.c.b16 %v983, %v919
    %v1368 = vpack.c.b16 %v1048, %v984
    %v1369 = vpack.c.b16 %v1049, %v985
    %v1370 = vpack.c.b16 %v1050, %v986
    %v1371 = vpack.c.b16 %v1051, %v987
    %v1372 = vpack.c.b16 %v1052, %v988
    %v1373 = vpack.c.b16 %v1053, %v989
    %v1374 = vpack.c.b16 %v1054, %v990
    %v1375 = vpack.c.b16 %v1055, %v991
    %v1376 = vpack.c.b16 %v1056, %v992
    %v1377 = vpack.c.b16 %v1057, %v993
    %v1378 = vpack.c.b16 %v1058, %v994
    %v1379 = vpack.c.b16 %v1059, %v995
    %v1380 = vpack.c.b16 %v1060, %v996
    %v1381 = vpack.c.b16 %v1061, %v997
    %v1382 = vpack.c.b16 %v1062, %v998
    %v1383 = vpack.c.b16 %v1063, %v999
    %v1384 = vpack.c.b16 %v1064, %v1000
    %v1385 = vpack.c.b16 %v1065, %v1001
    %v1386 = vpack.c.b16 %v1066, %v1002
    %v1387 = vpack.c.b16 %v1067, %v1003
    %v1388 = vpack.c.b16 %v1068, %v1004
    %v1389 = vpack.c.b16 %v1069, %v1005
    %v1390 = vpack.c.b16 %v1070, %v1006
    %v1391 = vpack.c.b16 %v1071, %v1007
    %v1392 = vpack.c.b16 %v1072, %v1008
    %v1393 = vpack.c.b16 %v1073, %v1009
    %v1394 = vpack.c.b16 %v1074, %v1010
    %v1395 = vpack.c.b16 %v1075, %v1011
    %v1396 = vpack.c.b16 %v1076, %v1012
    %v1397 = vpack.c.b16 %v1077, %v1013
    %v1398 = vpack.c.b16 %v1078, %v1014
    %v1399 = vpack.c.b16 %v1079, %v1015
    %v1400 = vpack.c.b16 %v1080, %v1016
    %v1401 = vpack.c.b16 %v1081, %v1017
    %v1402 = vpack.c.b16 %v1082, %v1018
    %v1403 = vpack.c.b16 %v1083, %v1019
    %v1404 = vpack.c.b16 %v1084, %v1020
    %v1405 = vpack.c.b16 %v1085, %v1021
    %v1406 = vpack.c.b16 %v1086, %v1022
    %v1407 = vpack.c.b16 %v1087, %v1023
    %v1408 = vpack.c.b16 %v1088, %v1024
    %v1409 = vpack.c.b16 %v1089, %v1025
    %v1410 = vpack.c.b16 %v1090, %v1026
    %v1411 = vpack.c.b16 %v1091, %v1027
    %v1412 = vpack.c.b16 %v1092, %v1028
    %v1413 = vpack.c.b16 %v1093, %v1029
    %v1414 = vpack.c.b16 %v1094, %v1030
    %v1415 = vpack.c.b16 %v1095, %v1031
    %v1416 = vpack.c.b16 %v1096, %v1032
    %v1417 = vpack.c.b16 %v1097, %v1033
    %v1418 = vpack.c.b16 %v1098, %v1034
    %v1419 = vpack.c.b16 %v1099, %v1035
    %v1420 = vpack.c.b16 %v1100, %v1036
    %v1421 = vpack.c.b16 %v1101, %v1037
    %v1422 = vpack.c.b16 %v1102, %v1038
    %v1423 = vpack.c.b16 %v1103, %v1039
    %v1424 = vpack.c.b16 %v1104, %v1040
    %v1425 = vpack.c.b16 %v1105, %v1041
    %v1426 = vpack.c.b16 %v1106, %v1042
    %v1427 = vpack.c.b16 %v1107, %v1043
    %v1428 = vpack.c.b16 %v1108, %v1044
    %v1429 = vpack.c.b16 %v1109, %v1045
    %v1430 = vpack.c.b16 %v1110, %v1046
    %v1431 = vpack.c.b16 %v1111, %v1047
    %v1432 = vpack.c.b16 %v1176, %v1112
    %v1433 = vpack.c.b16 %v1177, %v1113
    %v1434 = vpack.c.b16 %v1178, %v1114
    %v1435 = vpack.c.b16 %v1179, %v1115
    %v1436 = vpack.c.b16 %v1180, %v1116
    %v1437 = vpack.c.b16 %v1181, %v1117
    %v1438 = vpack.c.b16 %v1182, %v1118
    %v1439 = vpack.c.b16 %v1183, %v1119
    %v1440 = vpack.c.b16 %v1184, %v1120
    %v1441 = vpack.c.b16 %v1185, %v1121
    %v1442 = vpack.c.b16 %v1186, %v1122
    %v1443 = vpack.c.b16 %v1187, %v1123
    %v1444 = vpack.c.b16 %v1188, %v1124
    %v1445 = vpack.c.b16 %v1189, %v1125
    %v1446 = vpack.c.b16 %v1190, %v1126
    %v1447 = vpack.c.b16 %v1191, %v1127
    %v1448 = vpack.c.b16 %v1192, %v1128
    %v1449 = vpack.c.b16 %v1193, %v1129
    %v1450 = vpack.c.b16 %v1194, %v1130
    %v1451 = vpack.c.b16 %v1195, %v1131
    %v1452 = vpack.c.b16 %v1196, %v1132
    %v1453 = vpack.c.b16 %v1197, %v1133
    %v1454 = vpack.c.b16 %v1198, %v1134
    %v1455 = vpack.c.b16 %v1199, %v1135
    %v1456 = vpack.c.b16 %v1200, %v1136
    %v1457 = vpack.c.b16 %v1201, %v1137
    %v1458 = vpack.c.b16 %v1202, %v1138
    %v1459 = vpack.c.b16 %v1203, %v1139
    %v1460 = vpack.c.b16 %v1204, %v1140
    %v1461 = vpack.c.b16 %v1205, %v1141
    %v1462 = vpack.c.b16 %v1206, %v1142
    %v1463 = vpack.c.b16 %v1207, %v1143
    %v1464 = vpack.c.b16 %v1208, %v1144
    %v1465 = vpack.c.b16 %v1209, %v1145
    %v1466 = vpack.c.b16 %v1210, %v1146
    %v1467 = vpack.c.b16 %v1211, %v1147
    %v1468 = vpack.c.b16 %v1212, %v1148
    %v1469 = vpack.c.b16 %v1213, %v1149
    %v1470 = vpack.c.b16 %v1214, %v1150
    %v1471 = vpack.c.b16 %v1215, %v1151
    %v1472 = vpack.c.b16 %v1216, %v1152
    %v1473 = vpack.c.b16 %v1217, %v1153
    %v1474 = vpack.c.b16 %v1218, %v1154
    %v1475 = vpack.c.b16 %v1219, %v1155
    %v1476 = vpack.c.b16 %v1220, %v1156
    %v1477 = vpack.c.b16 %v1221, %v1157
    %v1478 = vpack.c.b16 %v1222, %v1158
    %v1479 = vpack.c.b16 %v1223, %v1159
    %v1480 = vpack.c.b16 %v1224, %v1160
    %v1481 = vpack.c.b16 %v1225, %v1161
    %v1482 = vpack.c.b16 %v1226, %v1162
    %v1483 = vpack.c.b16 %v1227, %v1163
    %v1484 = vpack.c.b16 %v1228, %v1164
    %v1485 = vpack.c.b16 %v1229, %v1165
    %v1486 = vpack.c.b16 %v1230, %v1166
    %v1487 = vpack.c.b16 %v1231, %v1167
    %v1488 = vpack.c.b16 %v1232, %v1168
    %v1489 = vpack.c.b16 %v1233, %v1169
    %v1490 = vpack.c.b16 %v1234, %v1170
    %v1491 = vpack.c.b16 %v1235, %v1171
    %v1492 = vpack.c.b16 %v1236, %v1172
    %v1493 = vpack.c.b16 %v1237, %v1173
    %v1494 = vpack.c.b16 %v1238, %v1174
    %v1495 = vpack.c.b16 %v1239, %v1175
    %1752 = vmatprep.subr.bf16.mxu0 0
    %1753 = vmatpush1.bf16.xpose.msra.mxu0 0
    %1754 = vmatprep.subr.bf16.mxu0 0
    %1755 = vmatpush1.bf16.xpose.msra.mxu0 0
    %1756 = vmatprep.subr.bf16.mxu0 0
    %1757 = vmatpush1.bf16.xpose.msra.mxu0 0
    %1758 = vmatprep.subr.bf16.mxu0 0
    %1759 = vmatpush1.bf16.xpose.msra.mxu0 0
    %1760 = vmatprep.subr.bf16.mxu0 %v1433
    %1761 = vmatpush1.bf16.xpose.msra.mxu0 %v1432
    %1762 = vmatprep.subr.bf16.mxu0 %v1369
    %1763 = vmatpush1.bf16.xpose.msra.mxu0 %v1368
    %1764 = vmatprep.subr.bf16.mxu0 %v1305
    %1765 = vmatpush1.bf16.xpose.msra.mxu0 %v1304
    %1766 = vmatprep.subr.bf16.mxu0 %v1241
    %1767 = vmatpush1.bf16.xpose.msra.mxu0 %v1240
    %1768 = vmatprep.subr.bf16.mxu0 0
    %1769 = vmatpush2.bf16.xpose.msra.mxu0 0
    %1770 = vmatprep.subr.bf16.mxu0 0
    %1771 = vmatpush2.bf16.xpose.msra.mxu0 0
    %1772 = vmatprep.subr.bf16.mxu0 0
    %1773 = vmatpush2.bf16.xpose.msra.mxu0 0
    %1774 = vmatprep.subr.bf16.mxu0 0
    %1775 = vmatpush2.bf16.xpose.msra.mxu0 0
    %1776 = vmatprep.subr.bf16.mxu0 0
    %1777 = vmatpush2.bf16.xpose.msra.mxu0 0
    %1778 = vmatprep.subr.bf16.mxu0 0
    %1779 = vmatpush2.bf16.xpose.msra.mxu0 0
    %1780 = vmatprep.subr.bf16.mxu0 0
    %1781 = vmatpush2.bf16.xpose.msra.mxu0 0
    %1782 = vmatprep.subr.bf16.mxu0 0
    %1783 = vmatpush2.bf16.xpose.msra.mxu0 0
    %1784 = vmatprep.mubr.bf16.mxu0 %v153
    %1785 = vmatmul.mubr.bf16.gmra.mxu0 %v152
    %v1786 = vpop.f32.mrf.mxu0
    %v1787 = vadd.f32 0.0, %v1786
    %v1788 = vpop.f32.mrf.mxu0
    %v1789 = vpop.f32.mrf.mxu0
    %v1790 = vpop.f32.mrf.mxu0
    %1791 = vdwg.mxu0
    %1792 = vmatprep.subr.bf16.mxu0 0
    %1793 = vmatpush1.bf16.xpose.msra.mxu0 0
    %1794 = vmatprep.subr.bf16.mxu0 0
    %1795 = vmatpush1.bf16.xpose.msra.mxu0 0
    %1796 = vmatprep.subr.bf16.mxu0 0
    %1797 = vmatpush1.bf16.xpose.msra.mxu0 0
    %1798 = vmatprep.subr.bf16.mxu0 0
    %1799 = vmatpush1.bf16.xpose.msra.mxu0 0
    %1800 = vmatprep.subr.bf16.mxu0 %v1435
    %1801 = vmatpush1.bf16.xpose.msra.mxu0 %v1434
    %1802 = vmatprep.subr.bf16.mxu0 %v1371
    %1803 = vmatpush1.bf16.xpose.msra.mxu0 %v1370
    %1804 = vmatprep.subr.bf16.mxu0 %v1307
    %1805 = vmatpush1.bf16.xpose.msra.mxu0 %v1306
    %1806 = vmatprep.subr.bf16.mxu0 %v1243
    %1807 = vmatpush1.bf16.xpose.msra.mxu0 %v1242
    %1808 = vmatprep.subr.bf16.mxu0 0
    %1809 = vmatpush2.bf16.xpose.msra.mxu0 0
    %1810 = vmatprep.subr.bf16.mxu0 0
    %1811 = vmatpush2.bf16.xpose.msra.mxu0 0
    %1812 = vmatprep.subr.bf16.mxu0 0
    %1813 = vmatpush2.bf16.xpose.msra.mxu0 0
    %1814 = vmatprep.subr.bf16.mxu0 0
    %1815 = vmatpush2.bf16.xpose.msra.mxu0 0
    %1816 = vmatprep.subr.bf16.mxu0 0
    %1817 = vmatpush2.bf16.xpose.msra.mxu0 0
    %1818 = vmatprep.subr.bf16.mxu0 0
    %1819 = vmatpush2.bf16.xpose.msra.mxu0 0
    %1820 = vmatprep.subr.bf16.mxu0 0
    %1821 = vmatpush2.bf16.xpose.msra.mxu0 0
    %1822 = vmatprep.subr.bf16.mxu0 0
    %1823 = vmatpush2.bf16.xpose.msra.mxu0 0
    %1824 = vmatprep.mubr.bf16.mxu0 %v155
    %1825 = vmatmul.mubr.bf16.gmra.mxu0 %v154
    %v1826 = vpop.f32.mrf.mxu0
    %v1827 = vadd.f32 %v1787, %v1826
    %v1828 = vpop.f32.mrf.mxu0
    %v1829 = vpop.f32.mrf.mxu0
    %v1830 = vpop.f32.mrf.mxu0
    %1831 = vdwg.mxu0
    %1832 = vmatprep.subr.bf16.mxu0 0
    %1833 = vmatpush1.bf16.xpose.msra.mxu0 0
    %1834 = vmatprep.subr.bf16.mxu0 0
    %1835 = vmatpush1.bf16.xpose.msra.mxu0 0
    %1836 = vmatprep.subr.bf16.mxu0 0
    %1837 = vmatpush1.bf16.xpose.msra.mxu0 0
    %1838 = vmatprep.subr.bf16.mxu0 0
    %1839 = vmatpush1.bf16.xpose.msra.mxu0 0
    %1840 = vmatprep.subr.bf16.mxu0 %v1437
    %1841 = vmatpush1.bf16.xpose.msra.mxu0 %v1436
    %1842 = vmatprep.subr.bf16.mxu0 %v1373
    %1843 = vmatpush1.bf16.xpose.msra.mxu0 %v1372
    %1844 = vmatprep.subr.bf16.mxu0 %v1309
    %1845 = vmatpush1.bf16.xpose.msra.mxu0 %v1308
    %1846 = vmatprep.subr.bf16.mxu0 %v1245
    %1847 = vmatpush1.bf16.xpose.msra.mxu0 %v1244
    %1848 = vmatprep.subr.bf16.mxu0 0
    %1849 = vmatpush2.bf16.xpose.msra.mxu0 0
    %1850 = vmatprep.subr.bf16.mxu0 0
    %1851 = vmatpush2.bf16.xpose.msra.mxu0 0
    %1852 = vmatprep.subr.bf16.mxu0 0
    %1853 = vmatpush2.bf16.xpose.msra.mxu0 0
    %1854 = vmatprep.subr.bf16.mxu0 0
    %1855 = vmatpush2.bf16.xpose.msra.mxu0 0
    %1856 = vmatprep.subr.bf16.mxu0 0
    %1857 = vmatpush2.bf16.xpose.msra.mxu0 0
    %1858 = vmatprep.subr.bf16.mxu0 0
    %1859 = vmatpush2.bf16.xpose.msra.mxu0 0
    %1860 = vmatprep.subr.bf16.mxu0 0
    %1861 = vmatpush2.bf16.xpose.msra.mxu0 0
    %1862 = vmatprep.subr.bf16.mxu0 0
    %1863 = vmatpush2.bf16.xpose.msra.mxu0 0
    %1864 = vmatprep.mubr.bf16.mxu0 %v157
    %1865 = vmatmul.mubr.bf16.gmra.mxu0 %v156
    %v1866 = vpop.f32.mrf.mxu0
    %v1867 = vadd.f32 %v1827, %v1866
    %v1868 = vpop.f32.mrf.mxu0
    %v1869 = vpop.f32.mrf.mxu0
    %v1870 = vpop.f32.mrf.mxu0
    %1871 = vdwg.mxu0
    %1872 = vmatprep.subr.bf16.mxu0 0
    %1873 = vmatpush1.bf16.xpose.msra.mxu0 0
    %1874 = vmatprep.subr.bf16.mxu0 0
    %1875 = vmatpush1.bf16.xpose.msra.mxu0 0
    %1876 = vmatprep.subr.bf16.mxu0 0
    %1877 = vmatpush1.bf16.xpose.msra.mxu0 0
    %1878 = vmatprep.subr.bf16.mxu0 0
    %1879 = vmatpush1.bf16.xpose.msra.mxu0 0
    %1880 = vmatprep.subr.bf16.mxu0 %v1439
    %1881 = vmatpush1.bf16.xpose.msra.mxu0 %v1438
    %1882 = vmatprep.subr.bf16.mxu0 %v1375
    %1883 = vmatpush1.bf16.xpose.msra.mxu0 %v1374
    %1884 = vmatprep.subr.bf16.mxu0 %v1311
    %1885 = vmatpush1.bf16.xpose.msra.mxu0 %v1310
    %1886 = vmatprep.subr.bf16.mxu0 %v1247
    %1887 = vmatpush1.bf16.xpose.msra.mxu0 %v1246
    %1888 = vmatprep.subr.bf16.mxu0 0
    %1889 = vmatpush2.bf16.xpose.msra.mxu0 0
    %1890 = vmatprep.subr.bf16.mxu0 0
    %1891 = vmatpush2.bf16.xpose.msra.mxu0 0
    %1892 = vmatprep.subr.bf16.mxu0 0
    %1893 = vmatpush2.bf16.xpose.msra.mxu0 0
    %1894 = vmatprep.subr.bf16.mxu0 0
    %1895 = vmatpush2.bf16.xpose.msra.mxu0 0
    %1896 = vmatprep.subr.bf16.mxu0 0
    %1897 = vmatpush2.bf16.xpose.msra.mxu0 0
    %1898 = vmatprep.subr.bf16.mxu0 0
    %1899 = vmatpush2.bf16.xpose.msra.mxu0 0
    %1900 = vmatprep.subr.bf16.mxu0 0
    %1901 = vmatpush2.bf16.xpose.msra.mxu0 0
    %1902 = vmatprep.subr.bf16.mxu0 0
    %1903 = vmatpush2.bf16.xpose.msra.mxu0 0
    %1904 = vmatprep.mubr.bf16.mxu0 %v159
    %1905 = vmatmul.mubr.bf16.gmra.mxu0 %v158
    %v1906 = vpop.f32.mrf.mxu0
    %v1907 = vadd.f32 %v1867, %v1906
    %v1908 = vpop.f32.mrf.mxu0
    %v1909 = vpop.f32.mrf.mxu0
    %v1910 = vpop.f32.mrf.mxu0
    %1911 = vdwg.mxu0
    %1912 = vmatprep.subr.bf16.mxu0 0
    %1913 = vmatpush1.bf16.xpose.msra.mxu0 0
    %1914 = vmatprep.subr.bf16.mxu0 0
    %1915 = vmatpush1.bf16.xpose.msra.mxu0 0
    %1916 = vmatprep.subr.bf16.mxu0 0
    %1917 = vmatpush1.bf16.xpose.msra.mxu0 0
    %1918 = vmatprep.subr.bf16.mxu0 0
    %1919 = vmatpush1.bf16.xpose.msra.mxu0 0
    %1920 = vmatprep.subr.bf16.mxu0 %v1441
    %1921 = vmatpush1.bf16.xpose.msra.mxu0 %v1440
    %1922 = vmatprep.subr.bf16.mxu0 %v1377
    %1923 = vmatpush1.bf16.xpose.msra.mxu0 %v1376
    %1924 = vmatprep.subr.bf16.mxu0 %v1313
    %1925 = vmatpush1.bf16.xpose.msra.mxu0 %v1312
    %1926 = vmatprep.subr.bf16.mxu0 %v1249
    %1927 = vmatpush1.bf16.xpose.msra.mxu0 %v1248
    %1928 = vmatprep.subr.bf16.mxu0 0
    %1929 = vmatpush2.bf16.xpose.msra.mxu0 0
    %1930 = vmatprep.subr.bf16.mxu0 0
    %1931 = vmatpush2.bf16.xpose.msra.mxu0 0
    %1932 = vmatprep.subr.bf16.mxu0 0
    %1933 = vmatpush2.bf16.xpose.msra.mxu0 0
    %1934 = vmatprep.subr.bf16.mxu0 0
    %1935 = vmatpush2.bf16.xpose.msra.mxu0 0
    %1936 = vmatprep.subr.bf16.mxu0 0
    %1937 = vmatpush2.bf16.xpose.msra.mxu0 0
    %1938 = vmatprep.subr.bf16.mxu0 0
    %1939 = vmatpush2.bf16.xpose.msra.mxu0 0
    %1940 = vmatprep.subr.bf16.mxu0 0
    %1941 = vmatpush2.bf16.xpose.msra.mxu0 0
    %1942 = vmatprep.subr.bf16.mxu0 0
    %1943 = vmatpush2.bf16.xpose.msra.mxu0 0
    %1944 = vmatprep.mubr.bf16.mxu0 %v161
    %1945 = vmatmul.mubr.bf16.gmra.mxu0 %v160
    %v1946 = vpop.f32.mrf.mxu0
    %v1947 = vadd.f32 %v1907, %v1946
    %v1948 = vpop.f32.mrf.mxu0
    %v1949 = vpop.f32.mrf.mxu0
    %v1950 = vpop.f32.mrf.mxu0
    %1951 = vdwg.mxu0
    %1952 = vmatprep.subr.bf16.mxu0 0
    %1953 = vmatpush1.bf16.xpose.msra.mxu0 0
    %1954 = vmatprep.subr.bf16.mxu0 0
    %1955 = vmatpush1.bf16.xpose.msra.mxu0 0
    %1956 = vmatprep.subr.bf16.mxu0 0
    %1957 = vmatpush1.bf16.xpose.msra.mxu0 0
    %1958 = vmatprep.subr.bf16.mxu0 0
    %1959 = vmatpush1.bf16.xpose.msra.mxu0 0
    %1960 = vmatprep.subr.bf16.mxu0 %v1443
    %1961 = vmatpush1.bf16.xpose.msra.mxu0 %v1442
    %1962 = vmatprep.subr.bf16.mxu0 %v1379
    %1963 = vmatpush1.bf16.xpose.msra.mxu0 %v1378
    %1964 = vmatprep.subr.bf16.mxu0 %v1315
    %1965 = vmatpush1.bf16.xpose.msra.mxu0 %v1314
    %1966 = vmatprep.subr.bf16.mxu0 %v1251
    %1967 = vmatpush1.bf16.xpose.msra.mxu0 %v1250
    %1968 = vmatprep.subr.bf16.mxu0 0
    %1969 = vmatpush2.bf16.xpose.msra.mxu0 0
    %1970 = vmatprep.subr.bf16.mxu0 0
    %1971 = vmatpush2.bf16.xpose.msra.mxu0 0
    %1972 = vmatprep.subr.bf16.mxu0 0
    %1973 = vmatpush2.bf16.xpose.msra.mxu0 0
    %1974 = vmatprep.subr.bf16.mxu0 0
    %1975 = vmatpush2.bf16.xpose.msra.mxu0 0
    %1976 = vmatprep.subr.bf16.mxu0 0
    %1977 = vmatpush2.bf16.xpose.msra.mxu0 0
    %1978 = vmatprep.subr.bf16.mxu0 0
    %1979 = vmatpush2.bf16.xpose.msra.mxu0 0
    %1980 = vmatprep.subr.bf16.mxu0 0
    %1981 = vmatpush2.bf16.xpose.msra.mxu0 0
    %1982 = vmatprep.subr.bf16.mxu0 0
    %1983 = vmatpush2.bf16.xpose.msra.mxu0 0
    %1984 = vmatprep.mubr.bf16.mxu0 %v163
    %1985 = vmatmul.mubr.bf16.gmra.mxu0 %v162
    %v1986 = vpop.f32.mrf.mxu0
    %v1987 = vadd.f32 %v1947, %v1986
    %v1988 = vpop.f32.mrf.mxu0
    %v1989 = vpop.f32.mrf.mxu0
    %v1990 = vpop.f32.mrf.mxu0
    %1991 = vdwg.mxu0
    %1992 = vmatprep.subr.bf16.mxu0 0
    %1993 = vmatpush1.bf16.xpose.msra.mxu0 0
    %1994 = vmatprep.subr.bf16.mxu0 0
    %1995 = vmatpush1.bf16.xpose.msra.mxu0 0
    %1996 = vmatprep.subr.bf16.mxu0 0
    %1997 = vmatpush1.bf16.xpose.msra.mxu0 0
    %1998 = vmatprep.subr.bf16.mxu0 0
    %1999 = vmatpush1.bf16.xpose.msra.mxu0 0
    %2000 = vmatprep.subr.bf16.mxu0 %v1445
    %2001 = vmatpush1.bf16.xpose.msra.mxu0 %v1444
    %2002 = vmatprep.subr.bf16.mxu0 %v1381
    %2003 = vmatpush1.bf16.xpose.msra.mxu0 %v1380
    %2004 = vmatprep.subr.bf16.mxu0 %v1317
    %2005 = vmatpush1.bf16.xpose.msra.mxu0 %v1316
    %2006 = vmatprep.subr.bf16.mxu0 %v1253
    %2007 = vmatpush1.bf16.xpose.msra.mxu0 %v1252
    %2008 = vmatprep.subr.bf16.mxu0 0
    %2009 = vmatpush2.bf16.xpose.msra.mxu0 0
    %2010 = vmatprep.subr.bf16.mxu0 0
    %2011 = vmatpush2.bf16.xpose.msra.mxu0 0
    %2012 = vmatprep.subr.bf16.mxu0 0
    %2013 = vmatpush2.bf16.xpose.msra.mxu0 0
    %2014 = vmatprep.subr.bf16.mxu0 0
    %2015 = vmatpush2.bf16.xpose.msra.mxu0 0
    %2016 = vmatprep.subr.bf16.mxu0 0
    %2017 = vmatpush2.bf16.xpose.msra.mxu0 0
    %2018 = vmatprep.subr.bf16.mxu0 0
    %2019 = vmatpush2.bf16.xpose.msra.mxu0 0
    %2020 = vmatprep.subr.bf16.mxu0 0
    %2021 = vmatpush2.bf16.xpose.msra.mxu0 0
    %2022 = vmatprep.subr.bf16.mxu0 0
    %2023 = vmatpush2.bf16.xpose.msra.mxu0 0
    %2024 = vmatprep.mubr.bf16.mxu0 %v165
    %2025 = vmatmul.mubr.bf16.gmra.mxu0 %v164
    %v2026 = vpop.f32.mrf.mxu0
    %v2027 = vadd.f32 %v1987, %v2026
    %v2028 = vpop.f32.mrf.mxu0
    %v2029 = vpop.f32.mrf.mxu0
    %v2030 = vpop.f32.mrf.mxu0
    %2031 = vdwg.mxu0
    %2032 = vmatprep.subr.bf16.mxu0 0
    %2033 = vmatpush1.bf16.xpose.msra.mxu0 0
    %2034 = vmatprep.subr.bf16.mxu0 0
    %2035 = vmatpush1.bf16.xpose.msra.mxu0 0
    %2036 = vmatprep.subr.bf16.mxu0 0
    %2037 = vmatpush1.bf16.xpose.msra.mxu0 0
    %2038 = vmatprep.subr.bf16.mxu0 0
    %2039 = vmatpush1.bf16.xpose.msra.mxu0 0
    %2040 = vmatprep.subr.bf16.mxu0 %v1447
    %2041 = vmatpush1.bf16.xpose.msra.mxu0 %v1446
    %2042 = vmatprep.subr.bf16.mxu0 %v1383
    %2043 = vmatpush1.bf16.xpose.msra.mxu0 %v1382
    %2044 = vmatprep.subr.bf16.mxu0 %v1319
    %2045 = vmatpush1.bf16.xpose.msra.mxu0 %v1318
    %2046 = vmatprep.subr.bf16.mxu0 %v1255
    %2047 = vmatpush1.bf16.xpose.msra.mxu0 %v1254
    %2048 = vmatprep.subr.bf16.mxu0 0
    %2049 = vmatpush2.bf16.xpose.msra.mxu0 0
    %2050 = vmatprep.subr.bf16.mxu0 0
    %2051 = vmatpush2.bf16.xpose.msra.mxu0 0
    %2052 = vmatprep.subr.bf16.mxu0 0
    %2053 = vmatpush2.bf16.xpose.msra.mxu0 0
    %2054 = vmatprep.subr.bf16.mxu0 0
    %2055 = vmatpush2.bf16.xpose.msra.mxu0 0
    %2056 = vmatprep.subr.bf16.mxu0 0
    %2057 = vmatpush2.bf16.xpose.msra.mxu0 0
    %2058 = vmatprep.subr.bf16.mxu0 0
    %2059 = vmatpush2.bf16.xpose.msra.mxu0 0
    %2060 = vmatprep.subr.bf16.mxu0 0
    %2061 = vmatpush2.bf16.xpose.msra.mxu0 0
    %2062 = vmatprep.subr.bf16.mxu0 0
    %2063 = vmatpush2.bf16.xpose.msra.mxu0 0
    %2064 = vmatprep.mubr.bf16.mxu0 %v167
    %2065 = vmatmul.mubr.bf16.gmra.mxu0 %v166
    %v2066 = vpop.f32.mrf.mxu0
    %v2067 = vadd.f32 %v2027, %v2066
    %v2068 = vpop.f32.mrf.mxu0
    %v2069 = vpop.f32.mrf.mxu0
    %v2070 = vpop.f32.mrf.mxu0
    %2071 = vdwg.mxu0
    %2072 = vmatprep.subr.bf16.mxu0 0
    %2073 = vmatpush1.bf16.xpose.msra.mxu0 0
    %2074 = vmatprep.subr.bf16.mxu0 0
    %2075 = vmatpush1.bf16.xpose.msra.mxu0 0
    %2076 = vmatprep.subr.bf16.mxu0 0
    %2077 = vmatpush1.bf16.xpose.msra.mxu0 0
    %2078 = vmatprep.subr.bf16.mxu0 0
    %2079 = vmatpush1.bf16.xpose.msra.mxu0 0
    %2080 = vmatprep.subr.bf16.mxu0 %v1449
    %2081 = vmatpush1.bf16.xpose.msra.mxu0 %v1448
    %2082 = vmatprep.subr.bf16.mxu0 %v1385
    %2083 = vmatpush1.bf16.xpose.msra.mxu0 %v1384
    %2084 = vmatprep.subr.bf16.mxu0 %v1321
    %2085 = vmatpush1.bf16.xpose.msra.mxu0 %v1320
    %2086 = vmatprep.subr.bf16.mxu0 %v1257
    %2087 = vmatpush1.bf16.xpose.msra.mxu0 %v1256
    %2088 = vmatprep.subr.bf16.mxu0 0
    %2089 = vmatpush2.bf16.xpose.msra.mxu0 0
    %2090 = vmatprep.subr.bf16.mxu0 0
    %2091 = vmatpush2.bf16.xpose.msra.mxu0 0
    %2092 = vmatprep.subr.bf16.mxu0 0
    %2093 = vmatpush2.bf16.xpose.msra.mxu0 0
    %2094 = vmatprep.subr.bf16.mxu0 0
    %2095 = vmatpush2.bf16.xpose.msra.mxu0 0
    %2096 = vmatprep.subr.bf16.mxu0 0
    %2097 = vmatpush2.bf16.xpose.msra.mxu0 0
    %2098 = vmatprep.subr.bf16.mxu0 0
    %2099 = vmatpush2.bf16.xpose.msra.mxu0 0
    %2100 = vmatprep.subr.bf16.mxu0 0
    %2101 = vmatpush2.bf16.xpose.msra.mxu0 0
    %2102 = vmatprep.subr.bf16.mxu0 0
    %2103 = vmatpush2.bf16.xpose.msra.mxu0 0
    %2104 = vmatprep.mubr.bf16.mxu0 %v169
    %2105 = vmatmul.mubr.bf16.gmra.mxu0 %v168
    %v2106 = vpop.f32.mrf.mxu0
    %v2107 = vadd.f32 %v2067, %v2106
    %v2108 = vpop.f32.mrf.mxu0
    %v2109 = vpop.f32.mrf.mxu0
    %v2110 = vpop.f32.mrf.mxu0
    %2111 = vdwg.mxu0
    %2112 = vmatprep.subr.bf16.mxu0 0
    %2113 = vmatpush1.bf16.xpose.msra.mxu0 0
    %2114 = vmatprep.subr.bf16.mxu0 0
    %2115 = vmatpush1.bf16.xpose.msra.mxu0 0
    %2116 = vmatprep.subr.bf16.mxu0 0
    %2117 = vmatpush1.bf16.xpose.msra.mxu0 0
    %2118 = vmatprep.subr.bf16.mxu0 0
    %2119 = vmatpush1.bf16.xpose.msra.mxu0 0
    %2120 = vmatprep.subr.bf16.mxu0 %v1451
    %2121 = vmatpush1.bf16.xpose.msra.mxu0 %v1450
    %2122 = vmatprep.subr.bf16.mxu0 %v1387
    %2123 = vmatpush1.bf16.xpose.msra.mxu0 %v1386
    %2124 = vmatprep.subr.bf16.mxu0 %v1323
    %2125 = vmatpush1.bf16.xpose.msra.mxu0 %v1322
    %2126 = vmatprep.subr.bf16.mxu0 %v1259
    %2127 = vmatpush1.bf16.xpose.msra.mxu0 %v1258
    %2128 = vmatprep.subr.bf16.mxu0 0
    %2129 = vmatpush2.bf16.xpose.msra.mxu0 0
    %2130 = vmatprep.subr.bf16.mxu0 0
    %2131 = vmatpush2.bf16.xpose.msra.mxu0 0
    %2132 = vmatprep.subr.bf16.mxu0 0
    %2133 = vmatpush2.bf16.xpose.msra.mxu0 0
    %2134 = vmatprep.subr.bf16.mxu0 0
    %2135 = vmatpush2.bf16.xpose.msra.mxu0 0
    %2136 = vmatprep.subr.bf16.mxu0 0
    %2137 = vmatpush2.bf16.xpose.msra.mxu0 0
    %2138 = vmatprep.subr.bf16.mxu0 0
    %2139 = vmatpush2.bf16.xpose.msra.mxu0 0
    %2140 = vmatprep.subr.bf16.mxu0 0
    %2141 = vmatpush2.bf16.xpose.msra.mxu0 0
    %2142 = vmatprep.subr.bf16.mxu0 0
    %2143 = vmatpush2.bf16.xpose.msra.mxu0 0
    %2144 = vmatprep.mubr.bf16.mxu0 %v171
    %2145 = vmatmul.mubr.bf16.gmra.mxu0 %v170
    %v2146 = vpop.f32.mrf.mxu0
    %v2147 = vadd.f32 %v2107, %v2146
    %v2148 = vpop.f32.mrf.mxu0
    %v2149 = vpop.f32.mrf.mxu0
    %v2150 = vpop.f32.mrf.mxu0
    %2151 = vdwg.mxu0
    %2152 = vmatprep.subr.bf16.mxu0 0
    %2153 = vmatpush1.bf16.xpose.msra.mxu0 0
    %2154 = vmatprep.subr.bf16.mxu0 0
    %2155 = vmatpush1.bf16.xpose.msra.mxu0 0
    %2156 = vmatprep.subr.bf16.mxu0 0
    %2157 = vmatpush1.bf16.xpose.msra.mxu0 0
    %2158 = vmatprep.subr.bf16.mxu0 0
    %2159 = vmatpush1.bf16.xpose.msra.mxu0 0
    %2160 = vmatprep.subr.bf16.mxu0 %v1453
    %2161 = vmatpush1.bf16.xpose.msra.mxu0 %v1452
    %2162 = vmatprep.subr.bf16.mxu0 %v1389
    %2163 = vmatpush1.bf16.xpose.msra.mxu0 %v1388
    %2164 = vmatprep.subr.bf16.mxu0 %v1325
    %2165 = vmatpush1.bf16.xpose.msra.mxu0 %v1324
    %2166 = vmatprep.subr.bf16.mxu0 %v1261
    %2167 = vmatpush1.bf16.xpose.msra.mxu0 %v1260
    %2168 = vmatprep.subr.bf16.mxu0 0
    %2169 = vmatpush2.bf16.xpose.msra.mxu0 0
    %2170 = vmatprep.subr.bf16.mxu0 0
    %2171 = vmatpush2.bf16.xpose.msra.mxu0 0
    %2172 = vmatprep.subr.bf16.mxu0 0
    %2173 = vmatpush2.bf16.xpose.msra.mxu0 0
    %2174 = vmatprep.subr.bf16.mxu0 0
    %2175 = vmatpush2.bf16.xpose.msra.mxu0 0
    %2176 = vmatprep.subr.bf16.mxu0 0
    %2177 = vmatpush2.bf16.xpose.msra.mxu0 0
    %2178 = vmatprep.subr.bf16.mxu0 0
    %2179 = vmatpush2.bf16.xpose.msra.mxu0 0
    %2180 = vmatprep.subr.bf16.mxu0 0
    %2181 = vmatpush2.bf16.xpose.msra.mxu0 0
    %2182 = vmatprep.subr.bf16.mxu0 0
    %2183 = vmatpush2.bf16.xpose.msra.mxu0 0
    %2184 = vmatprep.mubr.bf16.mxu0 %v173
    %2185 = vmatmul.mubr.bf16.gmra.mxu0 %v172
    %v2186 = vpop.f32.mrf.mxu0
    %v2187 = vadd.f32 %v2147, %v2186
    %v2188 = vpop.f32.mrf.mxu0
    %v2189 = vpop.f32.mrf.mxu0
    %v2190 = vpop.f32.mrf.mxu0
    %2191 = vdwg.mxu0
    %2192 = vmatprep.subr.bf16.mxu0 0
    %2193 = vmatpush1.bf16.xpose.msra.mxu0 0
    %2194 = vmatprep.subr.bf16.mxu0 0
    %2195 = vmatpush1.bf16.xpose.msra.mxu0 0
    %2196 = vmatprep.subr.bf16.mxu0 0
    %2197 = vmatpush1.bf16.xpose.msra.mxu0 0
    %2198 = vmatprep.subr.bf16.mxu0 0
    %2199 = vmatpush1.bf16.xpose.msra.mxu0 0
    %2200 = vmatprep.subr.bf16.mxu0 %v1455
    %2201 = vmatpush1.bf16.xpose.msra.mxu0 %v1454
    %2202 = vmatprep.subr.bf16.mxu0 %v1391
    %2203 = vmatpush1.bf16.xpose.msra.mxu0 %v1390
    %2204 = vmatprep.subr.bf16.mxu0 %v1327
    %2205 = vmatpush1.bf16.xpose.msra.mxu0 %v1326
    %2206 = vmatprep.subr.bf16.mxu0 %v1263
    %2207 = vmatpush1.bf16.xpose.msra.mxu0 %v1262
    %2208 = vmatprep.subr.bf16.mxu0 0
    %2209 = vmatpush2.bf16.xpose.msra.mxu0 0
    %2210 = vmatprep.subr.bf16.mxu0 0
    %2211 = vmatpush2.bf16.xpose.msra.mxu0 0
    %2212 = vmatprep.subr.bf16.mxu0 0
    %2213 = vmatpush2.bf16.xpose.msra.mxu0 0
    %2214 = vmatprep.subr.bf16.mxu0 0
    %2215 = vmatpush2.bf16.xpose.msra.mxu0 0
    %2216 = vmatprep.subr.bf16.mxu0 0
    %2217 = vmatpush2.bf16.xpose.msra.mxu0 0
    %2218 = vmatprep.subr.bf16.mxu0 0
    %2219 = vmatpush2.bf16.xpose.msra.mxu0 0
    %2220 = vmatprep.subr.bf16.mxu0 0
    %2221 = vmatpush2.bf16.xpose.msra.mxu0 0
    %2222 = vmatprep.subr.bf16.mxu0 0
    %2223 = vmatpush2.bf16.xpose.msra.mxu0 0
    %2224 = vmatprep.mubr.bf16.mxu0 %v175
    %2225 = vmatmul.mubr.bf16.gmra.mxu0 %v174
    %v2226 = vpop.f32.mrf.mxu0
    %v2227 = vadd.f32 %v2187, %v2226
    %v2228 = vpop.f32.mrf.mxu0
    %v2229 = vpop.f32.mrf.mxu0
    %v2230 = vpop.f32.mrf.mxu0
    %2231 = vdwg.mxu0
    %2232 = vmatprep.subr.bf16.mxu0 0
    %2233 = vmatpush1.bf16.xpose.msra.mxu0 0
    %2234 = vmatprep.subr.bf16.mxu0 0
    %2235 = vmatpush1.bf16.xpose.msra.mxu0 0
    %2236 = vmatprep.subr.bf16.mxu0 0
    %2237 = vmatpush1.bf16.xpose.msra.mxu0 0
    %2238 = vmatprep.subr.bf16.mxu0 0
    %2239 = vmatpush1.bf16.xpose.msra.mxu0 0
    %2240 = vmatprep.subr.bf16.mxu0 %v1457
    %2241 = vmatpush1.bf16.xpose.msra.mxu0 %v1456
    %2242 = vmatprep.subr.bf16.mxu0 %v1393
    %2243 = vmatpush1.bf16.xpose.msra.mxu0 %v1392
    %2244 = vmatprep.subr.bf16.mxu0 %v1329
    %2245 = vmatpush1.bf16.xpose.msra.mxu0 %v1328
    %2246 = vmatprep.subr.bf16.mxu0 %v1265
    %2247 = vmatpush1.bf16.xpose.msra.mxu0 %v1264
    %2248 = vmatprep.subr.bf16.mxu0 0
    %2249 = vmatpush2.bf16.xpose.msra.mxu0 0
    %2250 = vmatprep.subr.bf16.mxu0 0
    %2251 = vmatpush2.bf16.xpose.msra.mxu0 0
    %2252 = vmatprep.subr.bf16.mxu0 0
    %2253 = vmatpush2.bf16.xpose.msra.mxu0 0
    %2254 = vmatprep.subr.bf16.mxu0 0
    %2255 = vmatpush2.bf16.xpose.msra.mxu0 0
    %2256 = vmatprep.subr.bf16.mxu0 0
    %2257 = vmatpush2.bf16.xpose.msra.mxu0 0
    %2258 = vmatprep.subr.bf16.mxu0 0
    %2259 = vmatpush2.bf16.xpose.msra.mxu0 0
    %2260 = vmatprep.subr.bf16.mxu0 0
    %2261 = vmatpush2.bf16.xpose.msra.mxu0 0
    %2262 = vmatprep.subr.bf16.mxu0 0
    %2263 = vmatpush2.bf16.xpose.msra.mxu0 0
    %2264 = vmatprep.mubr.bf16.mxu0 %v177
    %2265 = vmatmul.mubr.bf16.gmra.mxu0 %v176
    %v2266 = vpop.f32.mrf.mxu0
    %v2267 = vadd.f32 %v2227, %v2266
    %v2268 = vpop.f32.mrf.mxu0
    %v2269 = vpop.f32.mrf.mxu0
    %v2270 = vpop.f32.mrf.mxu0
    %2271 = vdwg.mxu0
    %2272 = vmatprep.subr.bf16.mxu0 0
    %2273 = vmatpush1.bf16.xpose.msra.mxu0 0
    %2274 = vmatprep.subr.bf16.mxu0 0
    %2275 = vmatpush1.bf16.xpose.msra.mxu0 0
    %2276 = vmatprep.subr.bf16.mxu0 0
    %2277 = vmatpush1.bf16.xpose.msra.mxu0 0
    %2278 = vmatprep.subr.bf16.mxu0 0
    %2279 = vmatpush1.bf16.xpose.msra.mxu0 0
    %2280 = vmatprep.subr.bf16.mxu0 %v1459
    %2281 = vmatpush1.bf16.xpose.msra.mxu0 %v1458
    %2282 = vmatprep.subr.bf16.mxu0 %v1395
    %2283 = vmatpush1.bf16.xpose.msra.mxu0 %v1394
    %2284 = vmatprep.subr.bf16.mxu0 %v1331
    %2285 = vmatpush1.bf16.xpose.msra.mxu0 %v1330
    %2286 = vmatprep.subr.bf16.mxu0 %v1267
    %2287 = vmatpush1.bf16.xpose.msra.mxu0 %v1266
    %2288 = vmatprep.subr.bf16.mxu0 0
    %2289 = vmatpush2.bf16.xpose.msra.mxu0 0
    %2290 = vmatprep.subr.bf16.mxu0 0
    %2291 = vmatpush2.bf16.xpose.msra.mxu0 0
    %2292 = vmatprep.subr.bf16.mxu0 0
    %2293 = vmatpush2.bf16.xpose.msra.mxu0 0
    %2294 = vmatprep.subr.bf16.mxu0 0
    %2295 = vmatpush2.bf16.xpose.msra.mxu0 0
    %2296 = vmatprep.subr.bf16.mxu0 0
    %2297 = vmatpush2.bf16.xpose.msra.mxu0 0
    %2298 = vmatprep.subr.bf16.mxu0 0
    %2299 = vmatpush2.bf16.xpose.msra.mxu0 0
    %2300 = vmatprep.subr.bf16.mxu0 0
    %2301 = vmatpush2.bf16.xpose.msra.mxu0 0
    %2302 = vmatprep.subr.bf16.mxu0 0
    %2303 = vmatpush2.bf16.xpose.msra.mxu0 0
    %2304 = vmatprep.mubr.bf16.mxu0 %v179
    %2305 = vmatmul.mubr.bf16.gmra.mxu0 %v178
    %v2306 = vpop.f32.mrf.mxu0
    %v2307 = vadd.f32 %v2267, %v2306
    %v2308 = vpop.f32.mrf.mxu0
    %v2309 = vpop.f32.mrf.mxu0
    %v2310 = vpop.f32.mrf.mxu0
    %2311 = vdwg.mxu0
    %2312 = vmatprep.subr.bf16.mxu0 0
    %2313 = vmatpush1.bf16.xpose.msra.mxu0 0
    %2314 = vmatprep.subr.bf16.mxu0 0
    %2315 = vmatpush1.bf16.xpose.msra.mxu0 0
    %2316 = vmatprep.subr.bf16.mxu0 0
    %2317 = vmatpush1.bf16.xpose.msra.mxu0 0
    %2318 = vmatprep.subr.bf16.mxu0 0
    %2319 = vmatpush1.bf16.xpose.msra.mxu0 0
    %2320 = vmatprep.subr.bf16.mxu0 %v1461
    %2321 = vmatpush1.bf16.xpose.msra.mxu0 %v1460
    %2322 = vmatprep.subr.bf16.mxu0 %v1397
    %2323 = vmatpush1.bf16.xpose.msra.mxu0 %v1396
    %2324 = vmatprep.subr.bf16.mxu0 %v1333
    %2325 = vmatpush1.bf16.xpose.msra.mxu0 %v1332
    %2326 = vmatprep.subr.bf16.mxu0 %v1269
    %2327 = vmatpush1.bf16.xpose.msra.mxu0 %v1268
    %2328 = vmatprep.subr.bf16.mxu0 0
    %2329 = vmatpush2.bf16.xpose.msra.mxu0 0
    %2330 = vmatprep.subr.bf16.mxu0 0
    %2331 = vmatpush2.bf16.xpose.msra.mxu0 0
    %2332 = vmatprep.subr.bf16.mxu0 0
    %2333 = vmatpush2.bf16.xpose.msra.mxu0 0
    %2334 = vmatprep.subr.bf16.mxu0 0
    %2335 = vmatpush2.bf16.xpose.msra.mxu0 0
    %2336 = vmatprep.subr.bf16.mxu0 0
    %2337 = vmatpush2.bf16.xpose.msra.mxu0 0
    %2338 = vmatprep.subr.bf16.mxu0 0
    %2339 = vmatpush2.bf16.xpose.msra.mxu0 0
    %2340 = vmatprep.subr.bf16.mxu0 0
    %2341 = vmatpush2.bf16.xpose.msra.mxu0 0
    %2342 = vmatprep.subr.bf16.mxu0 0
    %2343 = vmatpush2.bf16.xpose.msra.mxu0 0
    %2344 = vmatprep.mubr.bf16.mxu0 %v181
    %2345 = vmatmul.mubr.bf16.gmra.mxu0 %v180
    %v2346 = vpop.f32.mrf.mxu0
    %v2347 = vadd.f32 %v2307, %v2346
    %v2348 = vpop.f32.mrf.mxu0
    %v2349 = vpop.f32.mrf.mxu0
    %v2350 = vpop.f32.mrf.mxu0
    %2351 = vdwg.mxu0
    %2352 = vmatprep.subr.bf16.mxu0 0
    %2353 = vmatpush1.bf16.xpose.msra.mxu0 0
    %2354 = vmatprep.subr.bf16.mxu0 0
    %2355 = vmatpush1.bf16.xpose.msra.mxu0 0
    %2356 = vmatprep.subr.bf16.mxu0 0
    %2357 = vmatpush1.bf16.xpose.msra.mxu0 0
    %2358 = vmatprep.subr.bf16.mxu0 0
    %2359 = vmatpush1.bf16.xpose.msra.mxu0 0
    %2360 = vmatprep.subr.bf16.mxu0 %v1463
    %2361 = vmatpush1.bf16.xpose.msra.mxu0 %v1462
    %2362 = vmatprep.subr.bf16.mxu0 %v1399
    %2363 = vmatpush1.bf16.xpose.msra.mxu0 %v1398
    %2364 = vmatprep.subr.bf16.mxu0 %v1335
    %2365 = vmatpush1.bf16.xpose.msra.mxu0 %v1334
    %2366 = vmatprep.subr.bf16.mxu0 %v1271
    %2367 = vmatpush1.bf16.xpose.msra.mxu0 %v1270
    %2368 = vmatprep.subr.bf16.mxu0 0
    %2369 = vmatpush2.bf16.xpose.msra.mxu0 0
    %2370 = vmatprep.subr.bf16.mxu0 0
    %2371 = vmatpush2.bf16.xpose.msra.mxu0 0
    %2372 = vmatprep.subr.bf16.mxu0 0
    %2373 = vmatpush2.bf16.xpose.msra.mxu0 0
    %2374 = vmatprep.subr.bf16.mxu0 0
    %2375 = vmatpush2.bf16.xpose.msra.mxu0 0
    %2376 = vmatprep.subr.bf16.mxu0 0
    %2377 = vmatpush2.bf16.xpose.msra.mxu0 0
    %2378 = vmatprep.subr.bf16.mxu0 0
    %2379 = vmatpush2.bf16.xpose.msra.mxu0 0
    %2380 = vmatprep.subr.bf16.mxu0 0
    %2381 = vmatpush2.bf16.xpose.msra.mxu0 0
    %2382 = vmatprep.subr.bf16.mxu0 0
    %2383 = vmatpush2.bf16.xpose.msra.mxu0 0
    %2384 = vmatprep.mubr.bf16.mxu0 %v183
    %2385 = vmatmul.mubr.bf16.gmra.mxu0 %v182
    %v2386 = vpop.f32.mrf.mxu0
    %v2387 = vadd.f32 %v2347, %v2386
    %v2388 = vpop.f32.mrf.mxu0
    %v2389 = vpop.f32.mrf.mxu0
    %v2390 = vpop.f32.mrf.mxu0
    %2391 = vdwg.mxu0
    %2392 = vmatprep.subr.bf16.mxu0 0
    %2393 = vmatpush1.bf16.xpose.msra.mxu0 0
    %2394 = vmatprep.subr.bf16.mxu0 0
    %2395 = vmatpush1.bf16.xpose.msra.mxu0 0
    %2396 = vmatprep.subr.bf16.mxu0 0
    %2397 = vmatpush1.bf16.xpose.msra.mxu0 0
    %2398 = vmatprep.subr.bf16.mxu0 0
    %2399 = vmatpush1.bf16.xpose.msra.mxu0 0
    %2400 = vmatprep.subr.bf16.mxu0 %v1465
    %2401 = vmatpush1.bf16.xpose.msra.mxu0 %v1464
    %2402 = vmatprep.subr.bf16.mxu0 %v1401
    %2403 = vmatpush1.bf16.xpose.msra.mxu0 %v1400
    %2404 = vmatprep.subr.bf16.mxu0 %v1337
    %2405 = vmatpush1.bf16.xpose.msra.mxu0 %v1336
    %2406 = vmatprep.subr.bf16.mxu0 %v1273
    %2407 = vmatpush1.bf16.xpose.msra.mxu0 %v1272
    %2408 = vmatprep.subr.bf16.mxu0 0
    %2409 = vmatpush2.bf16.xpose.msra.mxu0 0
    %2410 = vmatprep.subr.bf16.mxu0 0
    %2411 = vmatpush2.bf16.xpose.msra.mxu0 0
    %2412 = vmatprep.subr.bf16.mxu0 0
    %2413 = vmatpush2.bf16.xpose.msra.mxu0 0
    %2414 = vmatprep.subr.bf16.mxu0 0
    %2415 = vmatpush2.bf16.xpose.msra.mxu0 0
    %2416 = vmatprep.subr.bf16.mxu0 0
    %2417 = vmatpush2.bf16.xpose.msra.mxu0 0
    %2418 = vmatprep.subr.bf16.mxu0 0
    %2419 = vmatpush2.bf16.xpose.msra.mxu0 0
    %2420 = vmatprep.subr.bf16.mxu0 0
    %2421 = vmatpush2.bf16.xpose.msra.mxu0 0
    %2422 = vmatprep.subr.bf16.mxu0 0
    %2423 = vmatpush2.bf16.xpose.msra.mxu0 0
    %2424 = vmatprep.mubr.bf16.mxu0 %v185
    %2425 = vmatmul.mubr.bf16.gmra.mxu0 %v184
    %v2426 = vpop.f32.mrf.mxu0
    %v2427 = vadd.f32 %v2387, %v2426
    %v2428 = vpop.f32.mrf.mxu0
    %v2429 = vpop.f32.mrf.mxu0
    %v2430 = vpop.f32.mrf.mxu0
    %2431 = vdwg.mxu0
    %2432 = vmatprep.subr.bf16.mxu0 0
    %2433 = vmatpush1.bf16.xpose.msra.mxu0 0
    %2434 = vmatprep.subr.bf16.mxu0 0
    %2435 = vmatpush1.bf16.xpose.msra.mxu0 0
    %2436 = vmatprep.subr.bf16.mxu0 0
    %2437 = vmatpush1.bf16.xpose.msra.mxu0 0
    %2438 = vmatprep.subr.bf16.mxu0 0
    %2439 = vmatpush1.bf16.xpose.msra.mxu0 0
    %2440 = vmatprep.subr.bf16.mxu0 %v1467
    %2441 = vmatpush1.bf16.xpose.msra.mxu0 %v1466
    %2442 = vmatprep.subr.bf16.mxu0 %v1403
    %2443 = vmatpush1.bf16.xpose.msra.mxu0 %v1402
    %2444 = vmatprep.subr.bf16.mxu0 %v1339
    %2445 = vmatpush1.bf16.xpose.msra.mxu0 %v1338
    %2446 = vmatprep.subr.bf16.mxu0 %v1275
    %2447 = vmatpush1.bf16.xpose.msra.mxu0 %v1274
    %2448 = vmatprep.subr.bf16.mxu0 0
    %2449 = vmatpush2.bf16.xpose.msra.mxu0 0
    %2450 = vmatprep.subr.bf16.mxu0 0
    %2451 = vmatpush2.bf16.xpose.msra.mxu0 0
    %2452 = vmatprep.subr.bf16.mxu0 0
    %2453 = vmatpush2.bf16.xpose.msra.mxu0 0
    %2454 = vmatprep.subr.bf16.mxu0 0
    %2455 = vmatpush2.bf16.xpose.msra.mxu0 0
    %2456 = vmatprep.subr.bf16.mxu0 0
    %2457 = vmatpush2.bf16.xpose.msra.mxu0 0
    %2458 = vmatprep.subr.bf16.mxu0 0
    %2459 = vmatpush2.bf16.xpose.msra.mxu0 0
    %2460 = vmatprep.subr.bf16.mxu0 0
    %2461 = vmatpush2.bf16.xpose.msra.mxu0 0
    %2462 = vmatprep.subr.bf16.mxu0 0
    %2463 = vmatpush2.bf16.xpose.msra.mxu0 0
    %2464 = vmatprep.mubr.bf16.mxu0 %v187
    %2465 = vmatmul.mubr.bf16.gmra.mxu0 %v186
    %v2466 = vpop.f32.mrf.mxu0
    %v2467 = vadd.f32 %v2427, %v2466
    %v2468 = vpop.f32.mrf.mxu0
    %v2469 = vpop.f32.mrf.mxu0
    %v2470 = vpop.f32.mrf.mxu0
    %2471 = vdwg.mxu0
    %2472 = vmatprep.subr.bf16.mxu0 0
    %2473 = vmatpush1.bf16.xpose.msra.mxu0 0
    %2474 = vmatprep.subr.bf16.mxu0 0
    %2475 = vmatpush1.bf16.xpose.msra.mxu0 0
    %2476 = vmatprep.subr.bf16.mxu0 0
    %2477 = vmatpush1.bf16.xpose.msra.mxu0 0
    %2478 = vmatprep.subr.bf16.mxu0 0
    %2479 = vmatpush1.bf16.xpose.msra.mxu0 0
    %2480 = vmatprep.subr.bf16.mxu0 %v1469
    %2481 = vmatpush1.bf16.xpose.msra.mxu0 %v1468
    %2482 = vmatprep.subr.bf16.mxu0 %v1405
    %2483 = vmatpush1.bf16.xpose.msra.mxu0 %v1404
    %2484 = vmatprep.subr.bf16.mxu0 %v1341
    %2485 = vmatpush1.bf16.xpose.msra.mxu0 %v1340
    %2486 = vmatprep.subr.bf16.mxu0 %v1277
    %2487 = vmatpush1.bf16.xpose.msra.mxu0 %v1276
    %2488 = vmatprep.subr.bf16.mxu0 0
    %2489 = vmatpush2.bf16.xpose.msra.mxu0 0
    %2490 = vmatprep.subr.bf16.mxu0 0
    %2491 = vmatpush2.bf16.xpose.msra.mxu0 0
    %2492 = vmatprep.subr.bf16.mxu0 0
    %2493 = vmatpush2.bf16.xpose.msra.mxu0 0
    %2494 = vmatprep.subr.bf16.mxu0 0
    %2495 = vmatpush2.bf16.xpose.msra.mxu0 0
    %2496 = vmatprep.subr.bf16.mxu0 0
    %2497 = vmatpush2.bf16.xpose.msra.mxu0 0
    %2498 = vmatprep.subr.bf16.mxu0 0
    %2499 = vmatpush2.bf16.xpose.msra.mxu0 0
    %2500 = vmatprep.subr.bf16.mxu0 0
    %2501 = vmatpush2.bf16.xpose.msra.mxu0 0
    %2502 = vmatprep.subr.bf16.mxu0 0
    %2503 = vmatpush2.bf16.xpose.msra.mxu0 0
    %2504 = vmatprep.mubr.bf16.mxu0 %v189
    %2505 = vmatmul.mubr.bf16.gmra.mxu0 %v188
    %v2506 = vpop.f32.mrf.mxu0
    %v2507 = vadd.f32 %v2467, %v2506
    %v2508 = vpop.f32.mrf.mxu0
    %v2509 = vpop.f32.mrf.mxu0
    %v2510 = vpop.f32.mrf.mxu0
    %2511 = vdwg.mxu0
    %2512 = vmatprep.subr.bf16.mxu0 0
    %2513 = vmatpush1.bf16.xpose.msra.mxu0 0
    %2514 = vmatprep.subr.bf16.mxu0 0
    %2515 = vmatpush1.bf16.xpose.msra.mxu0 0
    %2516 = vmatprep.subr.bf16.mxu0 0
    %2517 = vmatpush1.bf16.xpose.msra.mxu0 0
    %2518 = vmatprep.subr.bf16.mxu0 0
    %2519 = vmatpush1.bf16.xpose.msra.mxu0 0
    %2520 = vmatprep.subr.bf16.mxu0 %v1471
    %2521 = vmatpush1.bf16.xpose.msra.mxu0 %v1470
    %2522 = vmatprep.subr.bf16.mxu0 %v1407
    %2523 = vmatpush1.bf16.xpose.msra.mxu0 %v1406
    %2524 = vmatprep.subr.bf16.mxu0 %v1343
    %2525 = vmatpush1.bf16.xpose.msra.mxu0 %v1342
    %2526 = vmatprep.subr.bf16.mxu0 %v1279
    %2527 = vmatpush1.bf16.xpose.msra.mxu0 %v1278
    %2528 = vmatprep.subr.bf16.mxu0 0
    %2529 = vmatpush2.bf16.xpose.msra.mxu0 0
    %2530 = vmatprep.subr.bf16.mxu0 0
    %2531 = vmatpush2.bf16.xpose.msra.mxu0 0
    %2532 = vmatprep.subr.bf16.mxu0 0
    %2533 = vmatpush2.bf16.xpose.msra.mxu0 0
    %2534 = vmatprep.subr.bf16.mxu0 0
    %2535 = vmatpush2.bf16.xpose.msra.mxu0 0
    %2536 = vmatprep.subr.bf16.mxu0 0
    %2537 = vmatpush2.bf16.xpose.msra.mxu0 0
    %2538 = vmatprep.subr.bf16.mxu0 0
    %2539 = vmatpush2.bf16.xpose.msra.mxu0 0
    %2540 = vmatprep.subr.bf16.mxu0 0
    %2541 = vmatpush2.bf16.xpose.msra.mxu0 0
    %2542 = vmatprep.subr.bf16.mxu0 0
    %2543 = vmatpush2.bf16.xpose.msra.mxu0 0
    %2544 = vmatprep.mubr.bf16.mxu0 %v191
    %2545 = vmatmul.mubr.bf16.gmra.mxu0 %v190
    %v2546 = vpop.f32.mrf.mxu0
    %v2547 = vadd.f32 %v2507, %v2546
    %v2548 = vpop.f32.mrf.mxu0
    %v2549 = vpop.f32.mrf.mxu0
    %v2550 = vpop.f32.mrf.mxu0
    %2551 = vdwg.mxu0
    %2552 = vmatprep.subr.bf16.mxu0 0
    %2553 = vmatpush1.bf16.xpose.msra.mxu0 0
    %2554 = vmatprep.subr.bf16.mxu0 0
    %2555 = vmatpush1.bf16.xpose.msra.mxu0 0
    %2556 = vmatprep.subr.bf16.mxu0 0
    %2557 = vmatpush1.bf16.xpose.msra.mxu0 0
    %2558 = vmatprep.subr.bf16.mxu0 0
    %2559 = vmatpush1.bf16.xpose.msra.mxu0 0
    %2560 = vmatprep.subr.bf16.mxu0 %v1473
    %2561 = vmatpush1.bf16.xpose.msra.mxu0 %v1472
    %2562 = vmatprep.subr.bf16.mxu0 %v1409
    %2563 = vmatpush1.bf16.xpose.msra.mxu0 %v1408
    %2564 = vmatprep.subr.bf16.mxu0 %v1345
    %2565 = vmatpush1.bf16.xpose.msra.mxu0 %v1344
    %2566 = vmatprep.subr.bf16.mxu0 %v1281
    %2567 = vmatpush1.bf16.xpose.msra.mxu0 %v1280
    %2568 = vmatprep.subr.bf16.mxu0 0
    %2569 = vmatpush2.bf16.xpose.msra.mxu0 0
    %2570 = vmatprep.subr.bf16.mxu0 0
    %2571 = vmatpush2.bf16.xpose.msra.mxu0 0
    %2572 = vmatprep.subr.bf16.mxu0 0
    %2573 = vmatpush2.bf16.xpose.msra.mxu0 0
    %2574 = vmatprep.subr.bf16.mxu0 0
    %2575 = vmatpush2.bf16.xpose.msra.mxu0 0
    %2576 = vmatprep.subr.bf16.mxu0 0
    %2577 = vmatpush2.bf16.xpose.msra.mxu0 0
    %2578 = vmatprep.subr.bf16.mxu0 0
    %2579 = vmatpush2.bf16.xpose.msra.mxu0 0
    %2580 = vmatprep.subr.bf16.mxu0 0
    %2581 = vmatpush2.bf16.xpose.msra.mxu0 0
    %2582 = vmatprep.subr.bf16.mxu0 0
    %2583 = vmatpush2.bf16.xpose.msra.mxu0 0
    %2584 = vmatprep.mubr.bf16.mxu0 %v193
    %2585 = vmatmul.mubr.bf16.gmra.mxu0 %v192
    %v2586 = vpop.f32.mrf.mxu0
    %v2587 = vadd.f32 %v2547, %v2586
    %v2588 = vpop.f32.mrf.mxu0
    %v2589 = vpop.f32.mrf.mxu0
    %v2590 = vpop.f32.mrf.mxu0
    %2591 = vdwg.mxu0
    %2592 = vmatprep.subr.bf16.mxu0 0
    %2593 = vmatpush1.bf16.xpose.msra.mxu0 0
    %2594 = vmatprep.subr.bf16.mxu0 0
    %2595 = vmatpush1.bf16.xpose.msra.mxu0 0
    %2596 = vmatprep.subr.bf16.mxu0 0
    %2597 = vmatpush1.bf16.xpose.msra.mxu0 0
    %2598 = vmatprep.subr.bf16.mxu0 0
    %2599 = vmatpush1.bf16.xpose.msra.mxu0 0
    %2600 = vmatprep.subr.bf16.mxu0 %v1475
    %2601 = vmatpush1.bf16.xpose.msra.mxu0 %v1474
    %2602 = vmatprep.subr.bf16.mxu0 %v1411
    %2603 = vmatpush1.bf16.xpose.msra.mxu0 %v1410
    %2604 = vmatprep.subr.bf16.mxu0 %v1347
    %2605 = vmatpush1.bf16.xpose.msra.mxu0 %v1346
    %2606 = vmatprep.subr.bf16.mxu0 %v1283
    %2607 = vmatpush1.bf16.xpose.msra.mxu0 %v1282
    %2608 = vmatprep.subr.bf16.mxu0 0
    %2609 = vmatpush2.bf16.xpose.msra.mxu0 0
    %2610 = vmatprep.subr.bf16.mxu0 0
    %2611 = vmatpush2.bf16.xpose.msra.mxu0 0
    %2612 = vmatprep.subr.bf16.mxu0 0
    %2613 = vmatpush2.bf16.xpose.msra.mxu0 0
    %2614 = vmatprep.subr.bf16.mxu0 0
    %2615 = vmatpush2.bf16.xpose.msra.mxu0 0
    %2616 = vmatprep.subr.bf16.mxu0 0
    %2617 = vmatpush2.bf16.xpose.msra.mxu0 0
    %2618 = vmatprep.subr.bf16.mxu0 0
    %2619 = vmatpush2.bf16.xpose.msra.mxu0 0
    %2620 = vmatprep.subr.bf16.mxu0 0
    %2621 = vmatpush2.bf16.xpose.msra.mxu0 0
    %2622 = vmatprep.subr.bf16.mxu0 0
    %2623 = vmatpush2.bf16.xpose.msra.mxu0 0
    %2624 = vmatprep.mubr.bf16.mxu0 %v195
    %2625 = vmatmul.mubr.bf16.gmra.mxu0 %v194
    %v2626 = vpop.f32.mrf.mxu0
    %v2627 = vadd.f32 %v2587, %v2626
    %v2628 = vpop.f32.mrf.mxu0
    %v2629 = vpop.f32.mrf.mxu0
    %v2630 = vpop.f32.mrf.mxu0
    %2631 = vdwg.mxu0
    %2632 = vmatprep.subr.bf16.mxu0 0
    %2633 = vmatpush1.bf16.xpose.msra.mxu0 0
    %2634 = vmatprep.subr.bf16.mxu0 0
    %2635 = vmatpush1.bf16.xpose.msra.mxu0 0
    %2636 = vmatprep.subr.bf16.mxu0 0
    %2637 = vmatpush1.bf16.xpose.msra.mxu0 0
    %2638 = vmatprep.subr.bf16.mxu0 0
    %2639 = vmatpush1.bf16.xpose.msra.mxu0 0
    %2640 = vmatprep.subr.bf16.mxu0 %v1477
    %2641 = vmatpush1.bf16.xpose.msra.mxu0 %v1476
    %2642 = vmatprep.subr.bf16.mxu0 %v1413
    %2643 = vmatpush1.bf16.xpose.msra.mxu0 %v1412
    %2644 = vmatprep.subr.bf16.mxu0 %v1349
    %2645 = vmatpush1.bf16.xpose.msra.mxu0 %v1348
    %2646 = vmatprep.subr.bf16.mxu0 %v1285
    %2647 = vmatpush1.bf16.xpose.msra.mxu0 %v1284
    %2648 = vmatprep.subr.bf16.mxu0 0
    %2649 = vmatpush2.bf16.xpose.msra.mxu0 0
    %2650 = vmatprep.subr.bf16.mxu0 0
    %2651 = vmatpush2.bf16.xpose.msra.mxu0 0
    %2652 = vmatprep.subr.bf16.mxu0 0
    %2653 = vmatpush2.bf16.xpose.msra.mxu0 0
    %2654 = vmatprep.subr.bf16.mxu0 0
    %2655 = vmatpush2.bf16.xpose.msra.mxu0 0
    %2656 = vmatprep.subr.bf16.mxu0 0
    %2657 = vmatpush2.bf16.xpose.msra.mxu0 0
    %2658 = vmatprep.subr.bf16.mxu0 0
    %2659 = vmatpush2.bf16.xpose.msra.mxu0 0
    %2660 = vmatprep.subr.bf16.mxu0 0
    %2661 = vmatpush2.bf16.xpose.msra.mxu0 0
    %2662 = vmatprep.subr.bf16.mxu0 0
    %2663 = vmatpush2.bf16.xpose.msra.mxu0 0
    %2664 = vmatprep.mubr.bf16.mxu0 %v197
    %2665 = vmatmul.mubr.bf16.gmra.mxu0 %v196
    %v2666 = vpop.f32.mrf.mxu0
    %v2667 = vadd.f32 %v2627, %v2666
    %v2668 = vpop.f32.mrf.mxu0
    %v2669 = vpop.f32.mrf.mxu0
    %v2670 = vpop.f32.mrf.mxu0
    %2671 = vdwg.mxu0
    %2672 = vmatprep.subr.bf16.mxu0 0
    %2673 = vmatpush1.bf16.xpose.msra.mxu0 0
    %2674 = vmatprep.subr.bf16.mxu0 0
    %2675 = vmatpush1.bf16.xpose.msra.mxu0 0
    %2676 = vmatprep.subr.bf16.mxu0 0
    %2677 = vmatpush1.bf16.xpose.msra.mxu0 0
    %2678 = vmatprep.subr.bf16.mxu0 0
    %2679 = vmatpush1.bf16.xpose.msra.mxu0 0
    %2680 = vmatprep.subr.bf16.mxu0 %v1479
    %2681 = vmatpush1.bf16.xpose.msra.mxu0 %v1478
    %2682 = vmatprep.subr.bf16.mxu0 %v1415
    %2683 = vmatpush1.bf16.xpose.msra.mxu0 %v1414
    %2684 = vmatprep.subr.bf16.mxu0 %v1351
    %2685 = vmatpush1.bf16.xpose.msra.mxu0 %v1350
    %2686 = vmatprep.subr.bf16.mxu0 %v1287
    %2687 = vmatpush1.bf16.xpose.msra.mxu0 %v1286
    %2688 = vmatprep.subr.bf16.mxu0 0
    %2689 = vmatpush2.bf16.xpose.msra.mxu0 0
    %2690 = vmatprep.subr.bf16.mxu0 0
    %2691 = vmatpush2.bf16.xpose.msra.mxu0 0
    %2692 = vmatprep.subr.bf16.mxu0 0
    %2693 = vmatpush2.bf16.xpose.msra.mxu0 0
    %2694 = vmatprep.subr.bf16.mxu0 0
    %2695 = vmatpush2.bf16.xpose.msra.mxu0 0
    %2696 = vmatprep.subr.bf16.mxu0 0
    %2697 = vmatpush2.bf16.xpose.msra.mxu0 0
    %2698 = vmatprep.subr.bf16.mxu0 0
    %2699 = vmatpush2.bf16.xpose.msra.mxu0 0
    %2700 = vmatprep.subr.bf16.mxu0 0
    %2701 = vmatpush2.bf16.xpose.msra.mxu0 0
    %2702 = vmatprep.subr.bf16.mxu0 0
    %2703 = vmatpush2.bf16.xpose.msra.mxu0 0
    %2704 = vmatprep.mubr.bf16.mxu0 %v199
    %2705 = vmatmul.mubr.bf16.gmra.mxu0 %v198
    %v2706 = vpop.f32.mrf.mxu0
    %v2707 = vadd.f32 %v2667, %v2706
    %v2708 = vpop.f32.mrf.mxu0
    %v2709 = vpop.f32.mrf.mxu0
    %v2710 = vpop.f32.mrf.mxu0
    %2711 = vdwg.mxu0
    %2712 = vmatprep.subr.bf16.mxu0 0
    %2713 = vmatpush1.bf16.xpose.msra.mxu0 0
    %2714 = vmatprep.subr.bf16.mxu0 0
    %2715 = vmatpush1.bf16.xpose.msra.mxu0 0
    %2716 = vmatprep.subr.bf16.mxu0 0
    %2717 = vmatpush1.bf16.xpose.msra.mxu0 0
    %2718 = vmatprep.subr.bf16.mxu0 0
    %2719 = vmatpush1.bf16.xpose.msra.mxu0 0
    %2720 = vmatprep.subr.bf16.mxu0 %v1481
    %2721 = vmatpush1.bf16.xpose.msra.mxu0 %v1480
    %2722 = vmatprep.subr.bf16.mxu0 %v1417
    %2723 = vmatpush1.bf16.xpose.msra.mxu0 %v1416
    %2724 = vmatprep.subr.bf16.mxu0 %v1353
    %2725 = vmatpush1.bf16.xpose.msra.mxu0 %v1352
    %2726 = vmatprep.subr.bf16.mxu0 %v1289
    %2727 = vmatpush1.bf16.xpose.msra.mxu0 %v1288
    %2728 = vmatprep.subr.bf16.mxu0 0
    %2729 = vmatpush2.bf16.xpose.msra.mxu0 0
    %2730 = vmatprep.subr.bf16.mxu0 0
    %2731 = vmatpush2.bf16.xpose.msra.mxu0 0
    %2732 = vmatprep.subr.bf16.mxu0 0
    %2733 = vmatpush2.bf16.xpose.msra.mxu0 0
    %2734 = vmatprep.subr.bf16.mxu0 0
    %2735 = vmatpush2.bf16.xpose.msra.mxu0 0
    %2736 = vmatprep.subr.bf16.mxu0 0
    %2737 = vmatpush2.bf16.xpose.msra.mxu0 0
    %2738 = vmatprep.subr.bf16.mxu0 0
    %2739 = vmatpush2.bf16.xpose.msra.mxu0 0
    %2740 = vmatprep.subr.bf16.mxu0 0
    %2741 = vmatpush2.bf16.xpose.msra.mxu0 0
    %2742 = vmatprep.subr.bf16.mxu0 0
    %2743 = vmatpush2.bf16.xpose.msra.mxu0 0
    %2744 = vmatprep.mubr.bf16.mxu0 %v201
    %2745 = vmatmul.mubr.bf16.gmra.mxu0 %v200
    %v2746 = vpop.f32.mrf.mxu0
    %v2747 = vadd.f32 %v2707, %v2746
    %v2748 = vpop.f32.mrf.mxu0
    %v2749 = vpop.f32.mrf.mxu0
    %v2750 = vpop.f32.mrf.mxu0
    %2751 = vdwg.mxu0
    %2752 = vmatprep.subr.bf16.mxu0 0
    %2753 = vmatpush1.bf16.xpose.msra.mxu0 0
    %2754 = vmatprep.subr.bf16.mxu0 0
    %2755 = vmatpush1.bf16.xpose.msra.mxu0 0
    %2756 = vmatprep.subr.bf16.mxu0 0
    %2757 = vmatpush1.bf16.xpose.msra.mxu0 0
    %2758 = vmatprep.subr.bf16.mxu0 0
    %2759 = vmatpush1.bf16.xpose.msra.mxu0 0
    %2760 = vmatprep.subr.bf16.mxu0 %v1483
    %2761 = vmatpush1.bf16.xpose.msra.mxu0 %v1482
    %2762 = vmatprep.subr.bf16.mxu0 %v1419
    %2763 = vmatpush1.bf16.xpose.msra.mxu0 %v1418
    %2764 = vmatprep.subr.bf16.mxu0 %v1355
    %2765 = vmatpush1.bf16.xpose.msra.mxu0 %v1354
    %2766 = vmatprep.subr.bf16.mxu0 %v1291
    %2767 = vmatpush1.bf16.xpose.msra.mxu0 %v1290
    %2768 = vmatprep.subr.bf16.mxu0 0
    %2769 = vmatpush2.bf16.xpose.msra.mxu0 0
    %2770 = vmatprep.subr.bf16.mxu0 0
    %2771 = vmatpush2.bf16.xpose.msra.mxu0 0
    %2772 = vmatprep.subr.bf16.mxu0 0
    %2773 = vmatpush2.bf16.xpose.msra.mxu0 0
    %2774 = vmatprep.subr.bf16.mxu0 0
    %2775 = vmatpush2.bf16.xpose.msra.mxu0 0
    %2776 = vmatprep.subr.bf16.mxu0 0
    %2777 = vmatpush2.bf16.xpose.msra.mxu0 0
    %2778 = vmatprep.subr.bf16.mxu0 0
    %2779 = vmatpush2.bf16.xpose.msra.mxu0 0
    %2780 = vmatprep.subr.bf16.mxu0 0
    %2781 = vmatpush2.bf16.xpose.msra.mxu0 0
    %2782 = vmatprep.subr.bf16.mxu0 0
    %2783 = vmatpush2.bf16.xpose.msra.mxu0 0
    %2784 = vmatprep.mubr.bf16.mxu0 %v203
    %2785 = vmatmul.mubr.bf16.gmra.mxu0 %v202
    %v2786 = vpop.f32.mrf.mxu0
    %v2787 = vadd.f32 %v2747, %v2786
    %v2788 = vpop.f32.mrf.mxu0
    %v2789 = vpop.f32.mrf.mxu0
    %v2790 = vpop.f32.mrf.mxu0
    %2791 = vdwg.mxu0
    %2792 = vmatprep.subr.bf16.mxu0 0
    %2793 = vmatpush1.bf16.xpose.msra.mxu0 0
    %2794 = vmatprep.subr.bf16.mxu0 0
    %2795 = vmatpush1.bf16.xpose.msra.mxu0 0
    %2796 = vmatprep.subr.bf16.mxu0 0
    %2797 = vmatpush1.bf16.xpose.msra.mxu0 0
    %2798 = vmatprep.subr.bf16.mxu0 0
    %2799 = vmatpush1.bf16.xpose.msra.mxu0 0
    %2800 = vmatprep.subr.bf16.mxu0 %v1485
    %2801 = vmatpush1.bf16.xpose.msra.mxu0 %v1484
    %2802 = vmatprep.subr.bf16.mxu0 %v1421
    %2803 = vmatpush1.bf16.xpose.msra.mxu0 %v1420
    %2804 = vmatprep.subr.bf16.mxu0 %v1357
    %2805 = vmatpush1.bf16.xpose.msra.mxu0 %v1356
    %2806 = vmatprep.subr.bf16.mxu0 %v1293
    %2807 = vmatpush1.bf16.xpose.msra.mxu0 %v1292
    %2808 = vmatprep.subr.bf16.mxu0 0
    %2809 = vmatpush2.bf16.xpose.msra.mxu0 0
    %2810 = vmatprep.subr.bf16.mxu0 0
    %2811 = vmatpush2.bf16.xpose.msra.mxu0 0
    %2812 = vmatprep.subr.bf16.mxu0 0
    %2813 = vmatpush2.bf16.xpose.msra.mxu0 0
    %2814 = vmatprep.subr.bf16.mxu0 0
    %2815 = vmatpush2.bf16.xpose.msra.mxu0 0
    %2816 = vmatprep.subr.bf16.mxu0 0
    %2817 = vmatpush2.bf16.xpose.msra.mxu0 0
    %2818 = vmatprep.subr.bf16.mxu0 0
    %2819 = vmatpush2.bf16.xpose.msra.mxu0 0
    %2820 = vmatprep.subr.bf16.mxu0 0
    %2821 = vmatpush2.bf16.xpose.msra.mxu0 0
    %2822 = vmatprep.subr.bf16.mxu0 0
    %2823 = vmatpush2.bf16.xpose.msra.mxu0 0
    %2824 = vmatprep.mubr.bf16.mxu0 %v205
    %2825 = vmatmul.mubr.bf16.gmra.mxu0 %v204
    %v2826 = vpop.f32.mrf.mxu0
    %v2827 = vadd.f32 %v2787, %v2826
    %v2828 = vpop.f32.mrf.mxu0
    %v2829 = vpop.f32.mrf.mxu0
    %v2830 = vpop.f32.mrf.mxu0
    %2831 = vdwg.mxu0
    %2832 = vmatprep.subr.bf16.mxu0 0
    %2833 = vmatpush1.bf16.xpose.msra.mxu0 0
    %2834 = vmatprep.subr.bf16.mxu0 0
    %2835 = vmatpush1.bf16.xpose.msra.mxu0 0
    %2836 = vmatprep.subr.bf16.mxu0 0
    %2837 = vmatpush1.bf16.xpose.msra.mxu0 0
    %2838 = vmatprep.subr.bf16.mxu0 0
    %2839 = vmatpush1.bf16.xpose.msra.mxu0 0
    %2840 = vmatprep.subr.bf16.mxu0 %v1487
    %2841 = vmatpush1.bf16.xpose.msra.mxu0 %v1486
    %2842 = vmatprep.subr.bf16.mxu0 %v1423
    %2843 = vmatpush1.bf16.xpose.msra.mxu0 %v1422
    %2844 = vmatprep.subr.bf16.mxu0 %v1359
    %2845 = vmatpush1.bf16.xpose.msra.mxu0 %v1358
    %2846 = vmatprep.subr.bf16.mxu0 %v1295
    %2847 = vmatpush1.bf16.xpose.msra.mxu0 %v1294
    %2848 = vmatprep.subr.bf16.mxu0 0
    %2849 = vmatpush2.bf16.xpose.msra.mxu0 0
    %2850 = vmatprep.subr.bf16.mxu0 0
    %2851 = vmatpush2.bf16.xpose.msra.mxu0 0
    %2852 = vmatprep.subr.bf16.mxu0 0
    %2853 = vmatpush2.bf16.xpose.msra.mxu0 0
    %2854 = vmatprep.subr.bf16.mxu0 0
    %2855 = vmatpush2.bf16.xpose.msra.mxu0 0
    %2856 = vmatprep.subr.bf16.mxu0 0
    %2857 = vmatpush2.bf16.xpose.msra.mxu0 0
    %2858 = vmatprep.subr.bf16.mxu0 0
    %2859 = vmatpush2.bf16.xpose.msra.mxu0 0
    %2860 = vmatprep.subr.bf16.mxu0 0
    %2861 = vmatpush2.bf16.xpose.msra.mxu0 0
    %2862 = vmatprep.subr.bf16.mxu0 0
    %2863 = vmatpush2.bf16.xpose.msra.mxu0 0
    %2864 = vmatprep.mubr.bf16.mxu0 %v207
    %2865 = vmatmul.mubr.bf16.gmra.mxu0 %v206
    %v2866 = vpop.f32.mrf.mxu0
    %v2867 = vadd.f32 %v2827, %v2866
    %v2868 = vpop.f32.mrf.mxu0
    %v2869 = vpop.f32.mrf.mxu0
    %v2870 = vpop.f32.mrf.mxu0
    %2871 = vdwg.mxu0
    %2872 = vmatprep.subr.bf16.mxu0 0
    %2873 = vmatpush1.bf16.xpose.msra.mxu0 0
    %2874 = vmatprep.subr.bf16.mxu0 0
    %2875 = vmatpush1.bf16.xpose.msra.mxu0 0
    %2876 = vmatprep.subr.bf16.mxu0 0
    %2877 = vmatpush1.bf16.xpose.msra.mxu0 0
    %2878 = vmatprep.subr.bf16.mxu0 0
    %2879 = vmatpush1.bf16.xpose.msra.mxu0 0
    %2880 = vmatprep.subr.bf16.mxu0 %v1489
    %2881 = vmatpush1.bf16.xpose.msra.mxu0 %v1488
    %2882 = vmatprep.subr.bf16.mxu0 %v1425
    %2883 = vmatpush1.bf16.xpose.msra.mxu0 %v1424
    %2884 = vmatprep.subr.bf16.mxu0 %v1361
    %2885 = vmatpush1.bf16.xpose.msra.mxu0 %v1360
    %2886 = vmatprep.subr.bf16.mxu0 %v1297
    %2887 = vmatpush1.bf16.xpose.msra.mxu0 %v1296
    %2888 = vmatprep.subr.bf16.mxu0 0
    %2889 = vmatpush2.bf16.xpose.msra.mxu0 0
    %2890 = vmatprep.subr.bf16.mxu0 0
    %2891 = vmatpush2.bf16.xpose.msra.mxu0 0
    %2892 = vmatprep.subr.bf16.mxu0 0
    %2893 = vmatpush2.bf16.xpose.msra.mxu0 0
    %2894 = vmatprep.subr.bf16.mxu0 0
    %2895 = vmatpush2.bf16.xpose.msra.mxu0 0
    %2896 = vmatprep.subr.bf16.mxu0 0
    %2897 = vmatpush2.bf16.xpose.msra.mxu0 0
    %2898 = vmatprep.subr.bf16.mxu0 0
    %2899 = vmatpush2.bf16.xpose.msra.mxu0 0
    %2900 = vmatprep.subr.bf16.mxu0 0
    %2901 = vmatpush2.bf16.xpose.msra.mxu0 0
    %2902 = vmatprep.subr.bf16.mxu0 0
    %2903 = vmatpush2.bf16.xpose.msra.mxu0 0
    %2904 = vmatprep.mubr.bf16.mxu0 %v209
    %2905 = vmatmul.mubr.bf16.gmra.mxu0 %v208
    %v2906 = vpop.f32.mrf.mxu0
    %v2907 = vadd.f32 %v2867, %v2906
    %v2908 = vpop.f32.mrf.mxu0
    %v2909 = vpop.f32.mrf.mxu0
    %v2910 = vpop.f32.mrf.mxu0
    %2911 = vdwg.mxu0
    %2912 = vmatprep.subr.bf16.mxu0 0
    %2913 = vmatpush1.bf16.xpose.msra.mxu0 0
    %2914 = vmatprep.subr.bf16.mxu0 0
    %2915 = vmatpush1.bf16.xpose.msra.mxu0 0
    %2916 = vmatprep.subr.bf16.mxu0 0
    %2917 = vmatpush1.bf16.xpose.msra.mxu0 0
    %2918 = vmatprep.subr.bf16.mxu0 0
    %2919 = vmatpush1.bf16.xpose.msra.mxu0 0
    %2920 = vmatprep.subr.bf16.mxu0 %v1491
    %2921 = vmatpush1.bf16.xpose.msra.mxu0 %v1490
    %2922 = vmatprep.subr.bf16.mxu0 %v1427
    %2923 = vmatpush1.bf16.xpose.msra.mxu0 %v1426
    %2924 = vmatprep.subr.bf16.mxu0 %v1363
    %2925 = vmatpush1.bf16.xpose.msra.mxu0 %v1362
    %2926 = vmatprep.subr.bf16.mxu0 %v1299
    %2927 = vmatpush1.bf16.xpose.msra.mxu0 %v1298
    %2928 = vmatprep.subr.bf16.mxu0 0
    %2929 = vmatpush2.bf16.xpose.msra.mxu0 0
    %2930 = vmatprep.subr.bf16.mxu0 0
    %2931 = vmatpush2.bf16.xpose.msra.mxu0 0
    %2932 = vmatprep.subr.bf16.mxu0 0
    %2933 = vmatpush2.bf16.xpose.msra.mxu0 0
    %2934 = vmatprep.subr.bf16.mxu0 0
    %2935 = vmatpush2.bf16.xpose.msra.mxu0 0
    %2936 = vmatprep.subr.bf16.mxu0 0
    %2937 = vmatpush2.bf16.xpose.msra.mxu0 0
    %2938 = vmatprep.subr.bf16.mxu0 0
    %2939 = vmatpush2.bf16.xpose.msra.mxu0 0
    %2940 = vmatprep.subr.bf16.mxu0 0
    %2941 = vmatpush2.bf16.xpose.msra.mxu0 0
    %2942 = vmatprep.subr.bf16.mxu0 0
    %2943 = vmatpush2.bf16.xpose.msra.mxu0 0
    %2944 = vmatprep.mubr.bf16.mxu0 %v211
    %2945 = vmatmul.mubr.bf16.gmra.mxu0 %v210
    %v2946 = vpop.f32.mrf.mxu0
    %v2947 = vadd.f32 %v2907, %v2946
    %v2948 = vpop.f32.mrf.mxu0
    %v2949 = vpop.f32.mrf.mxu0
    %v2950 = vpop.f32.mrf.mxu0
    %2951 = vdwg.mxu0
    %2952 = vmatprep.subr.bf16.mxu0 0
    %2953 = vmatpush1.bf16.xpose.msra.mxu0 0
    %2954 = vmatprep.subr.bf16.mxu0 0
    %2955 = vmatpush1.bf16.xpose.msra.mxu0 0
    %2956 = vmatprep.subr.bf16.mxu0 0
    %2957 = vmatpush1.bf16.xpose.msra.mxu0 0
    %2958 = vmatprep.subr.bf16.mxu0 0
    %2959 = vmatpush1.bf16.xpose.msra.mxu0 0
    %2960 = vmatprep.subr.bf16.mxu0 %v1493
    %2961 = vmatpush1.bf16.xpose.msra.mxu0 %v1492
    %2962 = vmatprep.subr.bf16.mxu0 %v1429
    %2963 = vmatpush1.bf16.xpose.msra.mxu0 %v1428
    %2964 = vmatprep.subr.bf16.mxu0 %v1365
    %2965 = vmatpush1.bf16.xpose.msra.mxu0 %v1364
    %2966 = vmatprep.subr.bf16.mxu0 %v1301
    %2967 = vmatpush1.bf16.xpose.msra.mxu0 %v1300
    %2968 = vmatprep.subr.bf16.mxu0 0
    %2969 = vmatpush2.bf16.xpose.msra.mxu0 0
    %2970 = vmatprep.subr.bf16.mxu0 0
    %2971 = vmatpush2.bf16.xpose.msra.mxu0 0
    %2972 = vmatprep.subr.bf16.mxu0 0
    %2973 = vmatpush2.bf16.xpose.msra.mxu0 0
    %2974 = vmatprep.subr.bf16.mxu0 0
    %2975 = vmatpush2.bf16.xpose.msra.mxu0 0
    %2976 = vmatprep.subr.bf16.mxu0 0
    %2977 = vmatpush2.bf16.xpose.msra.mxu0 0
    %2978 = vmatprep.subr.bf16.mxu0 0
    %2979 = vmatpush2.bf16.xpose.msra.mxu0 0
    %2980 = vmatprep.subr.bf16.mxu0 0
    %2981 = vmatpush2.bf16.xpose.msra.mxu0 0
    %2982 = vmatprep.subr.bf16.mxu0 0
    %2983 = vmatpush2.bf16.xpose.msra.mxu0 0
    %2984 = vmatprep.mubr.bf16.mxu0 %v213
    %2985 = vmatmul.mubr.bf16.gmra.mxu0 %v212
    %v2986 = vpop.f32.mrf.mxu0
    %v2987 = vadd.f32 %v2947, %v2986
    %v2988 = vpop.f32.mrf.mxu0
    %v2989 = vpop.f32.mrf.mxu0
    %v2990 = vpop.f32.mrf.mxu0
    %2991 = vdwg.mxu0
    %2992 = vmatprep.subr.bf16.mxu0 0
    %2993 = vmatpush1.bf16.xpose.msra.mxu0 0
    %2994 = vmatprep.subr.bf16.mxu0 0
    %2995 = vmatpush1.bf16.xpose.msra.mxu0 0
    %2996 = vmatprep.subr.bf16.mxu0 0
    %2997 = vmatpush1.bf16.xpose.msra.mxu0 0
    %2998 = vmatprep.subr.bf16.mxu0 0
    %2999 = vmatpush1.bf16.xpose.msra.mxu0 0
    %3000 = vmatprep.subr.bf16.mxu0 %v1495
    %3001 = vmatpush1.bf16.xpose.msra.mxu0 %v1494
    %3002 = vmatprep.subr.bf16.mxu0 %v1431
    %3003 = vmatpush1.bf16.xpose.msra.mxu0 %v1430
    %3004 = vmatprep.subr.bf16.mxu0 %v1367
    %3005 = vmatpush1.bf16.xpose.msra.mxu0 %v1366
    %3006 = vmatprep.subr.bf16.mxu0 %v1303
    %3007 = vmatpush1.bf16.xpose.msra.mxu0 %v1302
    %3008 = vmatprep.subr.bf16.mxu0 0
    %3009 = vmatpush2.bf16.xpose.msra.mxu0 0
    %3010 = vmatprep.subr.bf16.mxu0 0
    %3011 = vmatpush2.bf16.xpose.msra.mxu0 0
    %3012 = vmatprep.subr.bf16.mxu0 0
    %3013 = vmatpush2.bf16.xpose.msra.mxu0 0
    %3014 = vmatprep.subr.bf16.mxu0 0
    %3015 = vmatpush2.bf16.xpose.msra.mxu0 0
    %3016 = vmatprep.subr.bf16.mxu0 0
    %3017 = vmatpush2.bf16.xpose.msra.mxu0 0
    %3018 = vmatprep.subr.bf16.mxu0 0
    %3019 = vmatpush2.bf16.xpose.msra.mxu0 0
    %3020 = vmatprep.subr.bf16.mxu0 0
    %3021 = vmatpush2.bf16.xpose.msra.mxu0 0
    %3022 = vmatprep.subr.bf16.mxu0 0
    %3023 = vmatpush2.bf16.xpose.msra.mxu0 0
    %3024 = vmatprep.mubr.bf16.mxu0 %v215
    %3025 = vmatmul.mubr.bf16.gmra.mxu0 %v214
    %v3026 = vpop.f32.mrf.mxu0
    %v3027 = vadd.f32 %v2987, %v3026
    %v3028 = vpop.f32.mrf.mxu0
    %v3029 = vpop.f32.mrf.mxu0
    %v3030 = vpop.f32.mrf.mxu0
    %3031 = vdwg.mxu0
    %v3032 = vadd.f32 %v87, %v3027
    %vm3033 = vcmask 523264
    %3034 = vst.msk [vmem:[#allocation2] sm:$0xff] %vm3033, %v3032
    // Predicated region
    $region50: #{tpu_custom_call.1} parent=1 // pred_check
      %p3035 = pneg %p81
    $region51: #{tpu_custom_call.1} parent=1 // pred_check_branch
      %3037 = sbr.rel (%p3035) target = $region53
    $region52: #{tpu_custom_call.1} parent=1 // pred_region
      %v3038 = vld [vmem:[#allocation2] sm:$0xff]
      %v3039 = vld [vmem:[%s2] sm:$0x1]
      %v3041 = vlaneseq
      %v3042 = vshrl.u32 %v3041, 7
      %v3043 = vsub.s32 0, %v3042
      %v3044 = vrot.slane %v3039, %v3043
      %v3046 = vadd.f32 %v3038, %v3044
      %v3047 = vmax.f32 %v3046, 0.0
      %v3048 = vld [vmem:[#allocation8] sm:$0xff]
      %v3049 = vld [vmem:[#allocation8 + $0x8] sm:$0xff]
      %v3050 = vld [vmem:[#allocation8 + $0x10] sm:$0xff]
      %v3051 = vld [vmem:[#allocation8 + $0x18] sm:$0xff]
      %v3052 = vld [vmem:[#allocation8 + $0x20] sm:$0xff]
      %v3053 = vld [vmem:[#allocation8 + $0x28] sm:$0xff]
      %v3054 = vld [vmem:[#allocation8 + $0x30] sm:$0xff]
      %v3055 = vld [vmem:[#allocation8 + $0x38] sm:$0xff]
      %v3056 = vld [vmem:[%s4] sm:$0x1]
      %v3058 = vlaneseq
      %v3059 = vshrl.u32 %v3058, 7
      %v3060 = vsub.s32 0, %v3059
      %v3061 = vrot.slane %v3056, %v3060
      %v3064 = vsel %vm3033, %v3047, 0
      %3066 = vmatprep.subr.mxu0 0.0
      %3067 = vmatpush1.msra.mxu0 0.0
      %3068 = vmatprep.subr.mxu0 0.0
      %3069 = vmatpush1.msra.mxu0 0.0
      %3070 = vmatprep.subr.mxu0 0.0
      %3071 = vmatpush1.msra.mxu0 0.0
      %3072 = vmatprep.subr.mxu0 0.0
      %3073 = vmatpush1.msra.mxu0 0.0
      %3074 = vmatprep.subr.mxu0 0.0
      %3075 = vmatpush1.msra.mxu0 0.0
      %3076 = vmatprep.subr.mxu0 0.0
      %3077 = vmatpush1.msra.mxu0 0.0
      %3078 = vmatprep.subr.mxu0 0.0
      %3079 = vmatpush1.msra.mxu0 0.0
      %3080 = vmatprep.subr.mxu0 0.0
      %3081 = vmatpush1.msra.mxu0 0.0
      %3082 = vmatprep.subr.mxu0 0.0
      %3083 = vmatpush1.msra.mxu0 %v3055
      %3084 = vmatprep.subr.mxu0 0.0
      %3085 = vmatpush1.msra.mxu0 %v3054
      %3086 = vmatprep.subr.mxu0 0.0
      %3087 = vmatpush1.msra.mxu0 %v3053
      %3088 = vmatprep.subr.mxu0 0.0
      %3089 = vmatpush1.msra.mxu0 %v3052
      %3090 = vmatprep.subr.mxu0 0.0
      %3091 = vmatpush1.msra.mxu0 %v3051
      %3092 = vmatprep.subr.mxu0 0.0
      %3093 = vmatpush1.msra.mxu0 %v3050
      %3094 = vmatprep.subr.mxu0 0.0
      %3095 = vmatpush1.msra.mxu0 %v3049
      %3096 = vmatprep.subr.mxu0 0.0
      %3097 = vmatpush1.msra.mxu0 %v3048
      %3098 = vmatprep.subr.mxu0 0.0
      %3099 = vmatpush2.msra.mxu0 0.0
      %3100 = vmatprep.subr.mxu0 0.0
      %3101 = vmatpush2.msra.mxu0 0.0
      %3102 = vmatprep.subr.mxu0 0.0
      %3103 = vmatpush2.msra.mxu0 0.0
      %3104 = vmatprep.subr.mxu0 0.0
      %3105 = vmatpush2.msra.mxu0 0.0
      %3106 = vmatprep.subr.mxu0 0.0
      %3107 = vmatpush2.msra.mxu0 0.0
      %3108 = vmatprep.subr.mxu0 0.0
      %3109 = vmatpush2.msra.mxu0 0.0
      %3110 = vmatprep.subr.mxu0 0.0
      %3111 = vmatpush2.msra.mxu0 0.0
      %3112 = vmatprep.subr.mxu0 0.0
      %3113 = vmatpush2.msra.mxu0 0.0
      %3114 = vmatprep.subr.mxu0 0.0
      %3115 = vmatpush2.msra.mxu0 0.0
      %3116 = vmatprep.subr.mxu0 0.0
      %3117 = vmatpush2.msra.mxu0 0.0
      %3118 = vmatprep.subr.mxu0 0.0
      %3119 = vmatpush2.msra.mxu0 0.0
      %3120 = vmatprep.subr.mxu0 0.0
      %3121 = vmatpush2.msra.mxu0 0.0
      %3122 = vmatprep.subr.mxu0 0.0
      %3123 = vmatpush2.msra.mxu0 0.0
      %3124 = vmatprep.subr.mxu0 0.0
      %3125 = vmatpush2.msra.mxu0 0.0
      %3126 = vmatprep.subr.mxu0 0.0
      %3127 = vmatpush2.msra.mxu0 0.0
      %3128 = vmatprep.subr.mxu0 0.0
      %3129 = vmatpush2.msra.mxu0 0.0
      %3130 = vmatprep.mubr.f32.mxu0 0.0
      %3131 = vmatmul.mubr.f32.gmra.mxu0 %v3064
      %v3132 = vpop.f32.mrf.mxu0
      %v3133 = vadd.f32 %v3061, %v3132
      %v3134 = vpop.f32.mrf.mxu0
      %3135 = vdwg.mxu0
      %v3136 = vmax.f32 %v3133, 0.0
      %v3137 = vld [vmem:[#allocation9] sm:$0xff]
      %v3138 = vld [vmem:[#allocation9 + $0x8] sm:$0xff]
      %v3139 = vld [vmem:[#allocation9 + $0x10] sm:$0xff]
      %v3140 = vld [vmem:[#allocation9 + $0x18] sm:$0xff]
      %v3141 = vld [vmem:[#allocation9 + $0x20] sm:$0xff]
      %v3142 = vld [vmem:[#allocation9 + $0x28] sm:$0xff]
      %v3143 = vld [vmem:[#allocation9 + $0x30] sm:$0xff]
      %v3144 = vld [vmem:[#allocation9 + $0x38] sm:$0xff]
      %v3145 = vld [vmem:[%s6] sm:$0x1]
      %v3147 = vlaneseq
      %v3148 = vshrl.u32 %v3147, 7
      %v3149 = vsub.s32 0, %v3148
      %v3150 = vrot.slane %v3145, %v3149
      %v3153 = vsel %vm3033, %v3136, 0
      %3155 = vmatprep.subr.mxu0 0.0
      %3156 = vmatpush1.msra.mxu0 0.0
      %3157 = vmatprep.subr.mxu0 0.0
      %3158 = vmatpush1.msra.mxu0 0.0
      %3159 = vmatprep.subr.mxu0 0.0
      %3160 = vmatpush1.msra.mxu0 0.0
      %3161 = vmatprep.subr.mxu0 0.0
      %3162 = vmatpush1.msra.mxu0 0.0
      %3163 = vmatprep.subr.mxu0 0.0
      %3164 = vmatpush1.msra.mxu0 0.0
      %3165 = vmatprep.subr.mxu0 0.0
      %3166 = vmatpush1.msra.mxu0 0.0
      %3167 = vmatprep.subr.mxu0 0.0
      %3168 = vmatpush1.msra.mxu0 0.0
      %3169 = vmatprep.subr.mxu0 0.0
      %3170 = vmatpush1.msra.mxu0 0.0
      %3171 = vmatprep.subr.mxu0 0.0
      %3172 = vmatpush1.msra.mxu0 %v3144
      %3173 = vmatprep.subr.mxu0 0.0
      %3174 = vmatpush1.msra.mxu0 %v3143
      %3175 = vmatprep.subr.mxu0 0.0
      %3176 = vmatpush1.msra.mxu0 %v3142
      %3177 = vmatprep.subr.mxu0 0.0
      %3178 = vmatpush1.msra.mxu0 %v3141
      %3179 = vmatprep.subr.mxu0 0.0
      %3180 = vmatpush1.msra.mxu0 %v3140
      %3181 = vmatprep.subr.mxu0 0.0
      %3182 = vmatpush1.msra.mxu0 %v3139
      %3183 = vmatprep.subr.mxu0 0.0
      %3184 = vmatpush1.msra.mxu0 %v3138
      %3185 = vmatprep.subr.mxu0 0.0
      %3186 = vmatpush1.msra.mxu0 %v3137
      %3187 = vmatprep.subr.mxu0 0.0
      %3188 = vmatpush2.msra.mxu0 0.0
      %3189 = vmatprep.subr.mxu0 0.0
      %3190 = vmatpush2.msra.mxu0 0.0
      %3191 = vmatprep.subr.mxu0 0.0
      %3192 = vmatpush2.msra.mxu0 0.0
      %3193 = vmatprep.subr.mxu0 0.0
      %3194 = vmatpush2.msra.mxu0 0.0
      %3195 = vmatprep.subr.mxu0 0.0
      %3196 = vmatpush2.msra.mxu0 0.0
      %3197 = vmatprep.subr.mxu0 0.0
      %3198 = vmatpush2.msra.mxu0 0.0
      %3199 = vmatprep.subr.mxu0 0.0
      %3200 = vmatpush2.msra.mxu0 0.0
      %3201 = vmatprep.subr.mxu0 0.0
      %3202 = vmatpush2.msra.mxu0 0.0
      %3203 = vmatprep.subr.mxu0 0.0
      %3204 = vmatpush2.msra.mxu0 0.0
      %3205 = vmatprep.subr.mxu0 0.0
      %3206 = vmatpush2.msra.mxu0 0.0
      %3207 = vmatprep.subr.mxu0 0.0
      %3208 = vmatpush2.msra.mxu0 0.0
      %3209 = vmatprep.subr.mxu0 0.0
      %3210 = vmatpush2.msra.mxu0 0.0
      %3211 = vmatprep.subr.mxu0 0.0
      %3212 = vmatpush2.msra.mxu0 0.0
      %3213 = vmatprep.subr.mxu0 0.0
      %3214 = vmatpush2.msra.mxu0 0.0
      %3215 = vmatprep.subr.mxu0 0.0
      %3216 = vmatpush2.msra.mxu0 0.0
      %3217 = vmatprep.subr.mxu0 0.0
      %3218 = vmatpush2.msra.mxu0 0.0
      %3219 = vmatprep.mubr.f32.mxu0 0.0
      %3220 = vmatmul.mubr.f32.gmra.mxu0 %v3153
      %v3221 = vpop.f32.mrf.mxu0
      %v3222 = vadd.f32 %v3150, %v3221
      %v3223 = vpop.f32.mrf.mxu0
      %3224 = vdwg.mxu0
      %v3225 = vmax.f32 %v3222, 0.0
      %3226 = vst.msk [vmem:[#allocation11] sm:$0xff] %vm3033, %v3225
    $region53: #{tpu_custom_call.1} parent=1 // pred_fallthru
      _
    // Predicated region
    $region54: #{tpu_custom_call.1} parent=1 // pred_check
      _
    $region55: #{tpu_custom_call.1} parent=1 // pred_check_branch
      %3228 = sbr.rel (0) target = $region57
    $region56: #{tpu_custom_call.1} parent=1 // pred_region
      %s3230 = ssub.s32 128, 128
      %3231 = vsyncadd [#allocation5], %s3230
      %s3233 = sshll.u32 [#allocation11], 4
      %s3234 = int_to_ptr.vmem [resolvable:$true] %s3233
      %3236 = dma.vmem_to_hbm [thread:$0]  %s3234, 128, %s7, [#allocation5]
    $region57: #{tpu_custom_call.1} parent=1 // pred_fallthru
      _
    // Predicated region
    $region58: #{tpu_custom_call.1} parent=1 // pred_check
      _
    $region59: #{tpu_custom_call.1} parent=1 // pred_check_branch
      %3238 = sbr.rel (0) target = $region61
    $region60: #{tpu_custom_call.1} parent=1 // pred_region
      %3239 = dma.done [#allocation5], 128
    $region61: #{tpu_custom_call.1} parent=1 // pred_fallthru
      _
    %3240 = vsyncpa [#allocation4], 1
    %3241 = vsyncpa [#allocation7], 1
    %3242 = vsyncpa [#allocation10], 1
    %3243 = vsyncpa [#allocation5], 1

</llo_original>
